<compile_context>
chip_gen: v5e
topology: v5e:2x2
jax: 0.10.0
libtpu: 0.0.40
codegen_flags: <defaults>
</compile_context>

<pallas_src>
import functools
import math

import jax
import jax.numpy as jnp
import numpy as np
from jax import lax
from jax.experimental import pallas as pl
from jax.experimental.pallas import tpu as pltpu


def _layernorm(x, w, b, eps=1e-5):
    mu = jnp.mean(x, axis=-1, keepdims=True)
    var = jnp.mean((x - mu) ** 2, axis=-1, keepdims=True)
    return (x - mu) * lax.rsqrt(var + eps) * w + b


def sakt_kernel(e_ref, m_ref, pos_ref, bias_ref, sel_ref, wstack_ref, slab_ref,
                pred_ref, attn_ref, *, num_heads, approx_recip):
    f32 = jnp.float32
    E = e_ref[...]                     # (R, D) query embeddings (question_shift)
    M = m_ref[...]                     # (R, D) interaction embeddings
    Mh = M + pos_ref[...]              # positional add in-kernel (no Mh HBM stream)
    R, D = E.shape
    dh = D // num_heads
    cd = E.dtype                       # compute dtype (f32 / bf16); accum stays f32

    # consolidated weights: (in, out) layout, softmax scale folded into Wq / bq
    wq = wstack_ref[0]
    wk = wstack_ref[1]
    wv = wstack_ref[2]
    wo = wstack_ref[3]
    w1 = wstack_ref[4]
    w2 = wstack_ref[5]

    slab = slab_ref[...]               # (12, D) f32: biases / LN params / pred head
    bq, bk, bv, bo = slab[0:1], slab[1:2], slab[2:3], slab[3:4]
    ln1_w, ln1_b = slab[4:5], slab[5:6]
    b1, b2 = slab[6:7], slab[7:8]
    ln2_w, ln2_b = slab[8:9], slab[9:10]
    pw = slab[10:11]                   # (1, D) prediction weight row
    pb = slab[11:12, 0:1]              # (1, 1) prediction bias

    # QKV projections; cast once to compute dtype for per-head matmuls
    q = (jnp.dot(E, wq, preferred_element_type=f32) + bq).astype(cd)
    k = (jnp.dot(Mh, wk, preferred_element_type=f32) + bk).astype(cd)
    v = (jnp.dot(Mh, wv, preferred_element_type=f32) + bv).astype(cd)

    bias = bias_ref[...]               # (R, R) block-diag causal additive mask (f32)
    sel = sel_ref[...]                 # (L, R) packing matrix, pre-scaled by 1/H

    S_acc = jnp.zeros((R, D), f32)          # attention output with Wo folded in
    attn_pack = jnp.zeros(sel.shape, f32)   # (L, R) packed head-averaged attention
    for h in range(num_heads):              # static unroll over heads
        sl = slice(h * dh, (h + 1) * dh)
        s = lax.dot_general(q[:, sl], k[:, sl], (((1,), (1,)), ((), ())),
                            preferred_element_type=f32) + bias
        m_row = jnp.max(s, axis=-1, keepdims=True)
        p = jnp.exp(s - m_row)
        denom = jnp.sum(p, axis=-1, keepdims=True)
        p = p * pl.reciprocal(denom, approx=approx_recip)
        # packed head-average accumulation ((L, R) = 2 vregs, not (R, R))
        attn_pack = attn_pack + jnp.dot(sel, p, preferred_element_type=f32)
        # this head's context, with its slice of Wo folded in (no VMEM scratch)
        ctx = jnp.dot(p.astype(cd), v[:, sl], preferred_element_type=f32)
        S_acc = S_acc + jnp.dot(ctx.astype(cd), wo[sl, :],
                                preferred_element_type=f32)

    attn_ref[0] = attn_pack

    # TODO(synk): Dropout layers are treated as identity (eval-mode semantics).
    S = S_acc + bo
    # residual (S + M + E) + LayerNorm
    S = _layernorm(S + M.astype(f32) + E.astype(f32), ln1_w, ln1_b)

    # FFN: Linear -> ReLU -> Linear, residual + LayerNorm
    H = jnp.maximum(
        jnp.dot(S.astype(cd), w1, preferred_element_type=f32) + b1, 0.0)
    F = jnp.dot(H.astype(cd), w2, preferred_element_type=f32) + b2
    F = _layernorm(F + S, ln2_w, ln2_b)

    # prediction head + sigmoid, emitted lane-dense as a (1, R) row
    logits = lax.dot_general(pw, F, (((1,), (1,)), ((), ())),
                             preferred_element_type=f32) + pb
    pred_ref[0] = jax.nn.sigmoid(logits)


def sakt_forward(question, respond, question_shift, params, *, num_q, num_heads,
                 compute_dtype=jnp.bfloat16, rows_per_tile=128):
    B, L = question.shape
    D = params["M_table"].shape[1]
    cd = jnp.dtype(compute_dtype)
    f32 = jnp.float32

    seqs_per_tile = max(1, rows_per_tile // L)  # 128-row tiles (16 seqs at L=8)
    R = seqs_per_tile * L
    T = -(-B // seqs_per_tile)                  # ceil(B / seqs_per_tile)
    Bp = T * seqs_per_tile

    # ---- embedding lookups (glue, plain JAX) ----
    x = question + respond * num_q
    M = jnp.take(params["M_table"], x, axis=0)                  # (B, L, D)
    E = jnp.take(params["E_table"], question_shift, axis=0)     # (B, L, D)
    P = jnp.take(params["P_table"], jnp.arange(L), axis=0)      # (L, D)

    def flat(a):
        if Bp != B:
            a = jnp.pad(a, ((0, Bp - B), (0, 0), (0, 0)))
        return a.reshape(Bp * L, D).astype(cd)

    E_f, M_f = flat(E), flat(M)
    pos_tiled = jnp.tile(P, (seqs_per_tile, 1)).astype(cd)      # (R, D) constant

    # block-diagonal causal additive mask + packing matrix (scaled by 1/num_heads),
    # built once on the host (constant index_map -> fetched once, no refetch).
    r = np.arange(R)
    allowed = ((r[:, None] // L) == (r[None, :] // L)) & \
              ((r[None, :] % L) <= (r[:, None] % L))
    bias = jnp.asarray(np.where(allowed, 0.0, -1e30), dtype=f32)            # (R, R)
    sel = jnp.asarray(((np.arange(R)[None, :] % L) == np.arange(L)[:, None])
                      .astype(np.float32) / num_heads)                      # (L, R)

    # ---- consolidated operands: one weight stack + one bias/LN/pred slab ----
    dh = D // num_heads
    scale = 1.0 / math.sqrt(dh)
    in_w, in_b = params["in_w"], params["in_b"][0]
    wstack = jnp.stack([
        in_w[:D].T * scale, in_w[D:2 * D].T, in_w[2 * D:].T,
        params["out_w"].T, params["w1"].T, params["w2"].T,
    ]).astype(cd)                                                           # (6,D,D)
    slab = jnp.stack([
        in_b[:D] * scale, in_b[D:2 * D], in_b[2 * D:],
        params["out_b"].reshape(D),
        params["ln1_w"].reshape(D), params["ln1_b"].reshape(D),
        params["b1"].reshape(D), params["b2"].reshape(D),
        params["ln2_w"].reshape(D), params["ln2_b"].reshape(D),
        params["pred_w"].reshape(D),
        jnp.broadcast_to(params["pred_b"].reshape(()), (D,)),
    ]).astype(f32)                                                          # (12,D)

    kernel = functools.partial(sakt_kernel, num_heads=num_heads,
                               approx_recip=(cd == jnp.dtype(jnp.bfloat16)))

    row_spec = lambda: pl.BlockSpec((R, D), lambda t: (t, 0))
    const_spec = lambda arr: pl.BlockSpec(arr.shape, lambda t, _n=arr.ndim: (0,) * _n)

    pred_tiles, attn_packed = pl.pallas_call(
        kernel,
        grid=(T,),
        in_specs=[row_spec(), row_spec(),
                  const_spec(pos_tiled), const_spec(bias), const_spec(sel),
                  const_spec(wstack), const_spec(slab)],
        out_specs=(
            pl.BlockSpec((1, 1, R), lambda t: (t, 0, 0)),
            pl.BlockSpec((1, L, R), lambda t: (t, 0, 0)),
        ),
        out_shape=(
            jax.ShapeDtypeStruct((T, 1, R), jnp.float32),
            jax.ShapeDtypeStruct((T, L, R), jnp.float32),
        ),
        compiler_params=pltpu.CompilerParams(dimension_semantics=("parallel",)),
    )(E_f, M_f, pos_tiled, bias, sel, wstack, slab)

    # ---- unpack lane-dense tiles back to torch layout ----
    pred = pred_tiles.reshape(Bp, L)[:B]                                     # (B, L)
    attn = (attn_packed.reshape(T, L, seqs_per_tile, L)
            .transpose(0, 2, 1, 3).reshape(Bp, L, L)[:B])                    # (B,L,L)
    return pred, attn


def sakt_reference(question, respond, question_shift, params, *, num_q, num_heads):
    """Pure-JAX reference mirroring the PyTorch forward (eval mode)."""
    B, L = question.shape
    D = params["M_table"].shape[1]
    dh = D // num_heads
    x = question + respond * num_q
    M = params["M_table"][x]
    E = params["E_table"][question_shift]
    P = params["P_table"][jnp.arange(L)]
    Mhat = M + P[None]

    in_w, in_b = params["in_w"], params["in_b"][0]
    q = E @ in_w[:D].T + in_b[:D]
    k = Mhat @ in_w[D:2 * D].T + in_b[D:2 * D]
    v = Mhat @ in_w[2 * D:].T + in_b[2 * D:]
    qh = q.reshape(B, L, num_heads, dh).transpose(0, 2, 1, 3) / (dh ** 0.5)
    kh = k.reshape(B, L, num_heads, dh).transpose(0, 2, 1, 3)
    vh = v.reshape(B, L, num_heads, dh).transpose(0, 2, 1, 3)
    s = jnp.einsum("bhqd,bhkd->bhqk", qh, kh)
    mask = jnp.triu(jnp.ones((L, L), bool), 1)
    s = jnp.where(mask, -1e30, s)
    p = jax.nn.softmax(s, axis=-1)
    attn = p.mean(axis=1)
    ctx = jnp.einsum("bhqk,bhkd->bhqd", p, vh).transpose(0, 2, 1, 3).reshape(B, L, D)
    S = ctx @ params["out_w"].T + params["out_b"][0]

    def ln(z, w, b):
        mu = z.mean(-1, keepdims=True)
        var = ((z - mu) ** 2).mean(-1, keepdims=True)
        return (z - mu) / jnp.sqrt(var + 1e-5) * w + b

    S = ln(S + M + E, params["ln1_w"][0], params["ln1_b"][0])
    H = jax.nn.relu(S @ params["w1"].T + params["b1"][0])
    F = H @ params["w2"].T + params["b2"][0]
    F = ln(F + S, params["ln2_w"][0], params["ln2_b"][0])
    pred = jax.nn.sigmoid(F @ params["pred_w"].T + params["pred_b"][0])[..., 0]
    return pred, attn


def make_params(key, num_q, D):
    ks = jax.random.split(key, 12)
    n = lambda k, shape, s=0.1: (jax.random.normal(k, shape) * s).astype(jnp.float32)
    return {
        "M_table": n(ks[0], (num_q * 2, D)),
        "E_table": n(ks[1], (num_q, D)),
        "P_table": n(ks[2], (num_q, D)),
        "in_w": n(ks[3], (3 * D, D)),
        "in_b": n(ks[4], (1, 3 * D)),
        "out_w": n(ks[5], (D, D)),
        "out_b": n(ks[6], (1, D)),
        "ln1_w": jnp.ones((1, D), jnp.float32),
        "ln1_b": jnp.zeros((1, D), jnp.float32),
        "w1": n(ks[7], (D, D)),
        "b1": n(ks[8], (1, D)),
        "w2": n(ks[9], (D, D)),
        "b2": n(ks[10], (1, D)),
        "ln2_w": jnp.ones((1, D), jnp.float32),
        "ln2_b": jnp.zeros((1, D), jnp.float32),
        "pred_w": n(ks[11], (1, D)),
        "pred_b": jnp.zeros((1, 1), jnp.float32),
    }


if __name__ == "__main__":
    num_q, D, L, num_heads = 20, 32, 8, 4   # d_dim=32, len_n=8, head_dim(num heads)=4
    B = 2

    key = jax.random.PRNGKey(0)
    kp, kq, kr, ks = jax.random.split(key, 4)
    params = make_params(kp, num_q, D)

    question = jax.random.randint(kq, (B, L), 0, num_q, dtype=jnp.int32)
    respond = jax.random.randint(kr, (B, L), 0, 2, dtype=jnp.int32)
    question_shift = jax.random.randint(ks, (B, L), 0, num_q, dtype=jnp.int32)

    pred_gold, attn_gold = sakt_reference(question, respond, question_shift, params,
                                          num_q=num_q, num_heads=num_heads)

    # f32 compute path: exact forward semantics (strict check)
    pred32, attn32 = sakt_forward(question, respond, question_shift, params,
                                  num_q=num_q, num_heads=num_heads,
                                  compute_dtype=jnp.float32)
    jax.block_until_ready((pred32, attn32))
    assert pred32.shape == (B, L) and attn32.shape == (B, L, L)
    assert np.allclose(np.asarray(pred32), np.asarray(pred_gold), atol=1e-3, rtol=1e-3)
    assert np.allclose(np.asarray(attn32), np.asarray(attn_gold), atol=1e-3, rtol=1e-3)

    # bf16 operands (MXU-native on v6e/v7x), f32 accumulation (looser tolerance)
    predbf, attnbf = sakt_forward(question, respond, question_shift, params,
                                  num_q=num_q, num_heads=num_heads,
                                  compute_dtype=jnp.bfloat16)
    jax.block_until_ready((predbf, attnbf))
    assert np.allclose(np.asarray(predbf), np.asarray(pred_gold), atol=3e-2, rtol=3e-2)
    assert np.allclose(np.asarray(attnbf), np.asarray(attn_gold), atol=3e-2, rtol=3e-2)

    print("KERNEL_OK")
</pallas_src>

<mosaic_0001>
module attributes {stable_mosaic.version = 11 : i64} {
  func.func @sakt_kernel(%arg0: i32, %arg1: memref<128x32xf32, #tpu.memory_space<vmem>>, %arg2: memref<128x32xf32, #tpu.memory_space<vmem>>, %arg3: memref<128x32xf32, #tpu.memory_space<vmem>>, %arg4: memref<128x128xf32, #tpu.memory_space<vmem>>, %arg5: memref<8x128xf32, #tpu.memory_space<vmem>>, %arg6: memref<6x32x32xf32, #tpu.memory_space<vmem>>, %arg7: memref<12x32xf32, #tpu.memory_space<vmem>>, %arg8: memref<1x1x128xf32, #tpu.memory_space<vmem>>, %arg9: memref<1x8x128xf32, #tpu.memory_space<vmem>>) attributes {dimension_semantics = [#tpu.dimension_semantics<parallel>], iteration_bounds = array<i64: 1>, scalar_prefetch = 0 : i64, scratch_operands = 0 : i64, tpu.core_type = #tpu.core_type<tc>, window_params = [{transform_indices = @transform_0, window_bounds = array<i64: 128, 32>}, {transform_indices = @transform_1, window_bounds = array<i64: 128, 32>}, {pipeline_mode = #tpu.pipeline_mode<synchronous>, transform_indices = @transform_2, window_bounds = array<i64: 128, 32>}, {pipeline_mode = #tpu.pipeline_mode<synchronous>, transform_indices = @transform_3, window_bounds = array<i64: 128, 128>}, {pipeline_mode = #tpu.pipeline_mode<synchronous>, transform_indices = @transform_4, window_bounds = array<i64: 8, 128>}, {pipeline_mode = #tpu.pipeline_mode<synchronous>, transform_indices = @transform_5, window_bounds = array<i64: 6, 32, 32>}, {pipeline_mode = #tpu.pipeline_mode<synchronous>, transform_indices = @transform_6, window_bounds = array<i64: 12, 32>}, {transform_indices = @transform_7, window_bounds = array<i64: 1, 1, 128>}, {transform_indices = @transform_8, window_bounds = array<i64: 1, 8, 128>}]} {
    %c0 = arith.constant 0 : index
    %c0_0 = arith.constant 0 : index
    %0 = vector.load %arg1[%c0, %c0_0] : memref<128x32xf32, #tpu.memory_space<vmem>>, vector<128x32xf32>
    %c0_1 = arith.constant 0 : index
    %c0_2 = arith.constant 0 : index
    %1 = vector.load %arg2[%c0_1, %c0_2] : memref<128x32xf32, #tpu.memory_space<vmem>>, vector<128x32xf32>
    %c0_3 = arith.constant 0 : index
    %c0_4 = arith.constant 0 : index
    %2 = vector.load %arg3[%c0_3, %c0_4] : memref<128x32xf32, #tpu.memory_space<vmem>>, vector<128x32xf32>
    %3 = arith.addf %1, %2 : vector<128x32xf32>
    %c0_5 = arith.constant 0 : index
    %c0_6 = arith.constant 0 : index
    %c0_7 = arith.constant 0 : index
    %4 = vector.load %arg6[%c0_5, %c0_6, %c0_7] : memref<6x32x32xf32, #tpu.memory_space<vmem>>, vector<1x32x32xf32>
    %5 = vector.shape_cast %4 : vector<1x32x32xf32> to vector<32x32xf32>
    %c1 = arith.constant 1 : index
    %c0_8 = arith.constant 0 : index
    %c0_9 = arith.constant 0 : index
    %6 = vector.load %arg6[%c1, %c0_8, %c0_9] : memref<6x32x32xf32, #tpu.memory_space<vmem>>, vector<1x32x32xf32>
    %7 = vector.shape_cast %6 : vector<1x32x32xf32> to vector<32x32xf32>
    %c2 = arith.constant 2 : index
    %c0_10 = arith.constant 0 : index
    %c0_11 = arith.constant 0 : index
    %8 = vector.load %arg6[%c2, %c0_10, %c0_11] : memref<6x32x32xf32, #tpu.memory_space<vmem>>, vector<1x32x32xf32>
    %9 = vector.shape_cast %8 : vector<1x32x32xf32> to vector<32x32xf32>
    %c3 = arith.constant 3 : index
    %c0_12 = arith.constant 0 : index
    %c0_13 = arith.constant 0 : index
    %10 = vector.load %arg6[%c3, %c0_12, %c0_13] : memref<6x32x32xf32, #tpu.memory_space<vmem>>, vector<1x32x32xf32>
    %11 = vector.shape_cast %10 : vector<1x32x32xf32> to vector<32x32xf32>
    %c4 = arith.constant 4 : index
    %c0_14 = arith.constant 0 : index
    %c0_15 = arith.constant 0 : index
    %12 = vector.load %arg6[%c4, %c0_14, %c0_15] : memref<6x32x32xf32, #tpu.memory_space<vmem>>, vector<1x32x32xf32>
    %13 = vector.shape_cast %12 : vector<1x32x32xf32> to vector<32x32xf32>
    %c5 = arith.constant 5 : index
    %c0_16 = arith.constant 0 : index
    %c0_17 = arith.constant 0 : index
    %14 = vector.load %arg6[%c5, %c0_16, %c0_17] : memref<6x32x32xf32, #tpu.memory_space<vmem>>, vector<1x32x32xf32>
    %15 = vector.shape_cast %14 : vector<1x32x32xf32> to vector<32x32xf32>
    %c0_18 = arith.constant 0 : index
    %c0_19 = arith.constant 0 : index
    %16 = vector.load %arg7[%c0_18, %c0_19] : memref<12x32xf32, #tpu.memory_space<vmem>>, vector<12x32xf32>
    %17 = vector.extract_strided_slice %16 {offsets = [0, 0], sizes = [1, 32], strides = [1, 1]} : vector<12x32xf32> to vector<1x32xf32>
    %18 = vector.extract_strided_slice %16 {offsets = [1, 0], sizes = [1, 32], strides = [1, 1]} : vector<12x32xf32> to vector<1x32xf32>
    %19 = vector.extract_strided_slice %16 {offsets = [2, 0], sizes = [1, 32], strides = [1, 1]} : vector<12x32xf32> to vector<1x32xf32>
    %20 = vector.extract_strided_slice %16 {offsets = [3, 0], sizes = [1, 32], strides = [1, 1]} : vector<12x32xf32> to vector<1x32xf32>
    %21 = vector.extract_strided_slice %16 {offsets = [4, 0], sizes = [1, 32], strides = [1, 1]} : vector<12x32xf32> to vector<1x32xf32>
    %22 = vector.extract_strided_slice %16 {offsets = [5, 0], sizes = [1, 32], strides = [1, 1]} : vector<12x32xf32> to vector<1x32xf32>
    %23 = vector.extract_strided_slice %16 {offsets = [6, 0], sizes = [1, 32], strides = [1, 1]} : vector<12x32xf32> to vector<1x32xf32>
    %24 = vector.extract_strided_slice %16 {offsets = [7, 0], sizes = [1, 32], strides = [1, 1]} : vector<12x32xf32> to vector<1x32xf32>
    %25 = vector.extract_strided_slice %16 {offsets = [8, 0], sizes = [1, 32], strides = [1, 1]} : vector<12x32xf32> to vector<1x32xf32>
    %26 = vector.extract_strided_slice %16 {offsets = [9, 0], sizes = [1, 32], strides = [1, 1]} : vector<12x32xf32> to vector<1x32xf32>
    %27 = vector.extract_strided_slice %16 {offsets = [10, 0], sizes = [1, 32], strides = [1, 1]} : vector<12x32xf32> to vector<1x32xf32>
    %28 = vector.extract_strided_slice %16 {offsets = [11, 0], sizes = [1, 1], strides = [1, 1]} : vector<12x32xf32> to vector<1x1xf32>
    %cst = arith.constant dense<0.000000e+00> : vector<128x32xf32>
    %29 = tpu.matmul %0, %5, %cst {dimension_numbers = #tpu.dot_dimension_numbers<[1], [0], [0], [1], [0, 0, 1, 1], [], []>} : vector<128x32xf32>, vector<32x32xf32>, vector<128x32xf32> -> vector<128x32xf32>
    %30 = vector.broadcast %17 : vector<1x32xf32> to vector<128x32xf32>
    %31 = arith.addf %29, %30 : vector<128x32xf32>
    %cst_20 = arith.constant dense<0.000000e+00> : vector<128x32xf32>
    %32 = tpu.matmul %3, %7, %cst_20 {dimension_numbers = #tpu.dot_dimension_numbers<[1], [0], [0], [1], [0, 0, 1, 1], [], []>} : vector<128x32xf32>, vector<32x32xf32>, vector<128x32xf32> -> vector<128x32xf32>
    %33 = vector.broadcast %18 : vector<1x32xf32> to vector<128x32xf32>
    %34 = arith.addf %32, %33 : vector<128x32xf32>
    %cst_21 = arith.constant dense<0.000000e+00> : vector<128x32xf32>
    %35 = tpu.matmul %3, %9, %cst_21 {dimension_numbers = #tpu.dot_dimension_numbers<[1], [0], [0], [1], [0, 0, 1, 1], [], []>} : vector<128x32xf32>, vector<32x32xf32>, vector<128x32xf32> -> vector<128x32xf32>
    %36 = vector.broadcast %19 : vector<1x32xf32> to vector<128x32xf32>
    %37 = arith.addf %35, %36 : vector<128x32xf32>
    %c0_22 = arith.constant 0 : index
    %c0_23 = arith.constant 0 : index
    %38 = vector.load %arg4[%c0_22, %c0_23] : memref<128x128xf32, #tpu.memory_space<vmem>>, vector<128x128xf32>
    %c0_24 = arith.constant 0 : index
    %c0_25 = arith.constant 0 : index
    %39 = vector.load %arg5[%c0_24, %c0_25] : memref<8x128xf32, #tpu.memory_space<vmem>>, vector<8x128xf32>
    %cst_26 = arith.constant 0.000000e+00 : f32
    %40 = vector.broadcast %cst_26 : f32 to vector<128x32xf32>
    %cst_27 = arith.constant 0.000000e+00 : f32
    %41 = vector.broadcast %cst_27 : f32 to vector<8x128xf32>
    %42 = vector.extract_strided_slice %31 {offsets = [0, 0], sizes = [128, 8], strides = [1, 1]} : vector<128x32xf32> to vector<128x8xf32>
    %43 = vector.extract_strided_slice %34 {offsets = [0, 0], sizes = [128, 8], strides = [1, 1]} : vector<128x32xf32> to vector<128x8xf32>
    %cst_28 = arith.constant dense<0.000000e+00> : vector<128x128xf32>
    %44 = tpu.matmul %42, %43, %cst_28 {dimension_numbers = #tpu.dot_dimension_numbers<[1], [1], [0], [0], [0, 0, 1, 0], [], []>} : vector<128x8xf32>, vector<128x8xf32>, vector<128x128xf32> -> vector<128x128xf32>
    %45 = arith.addf %44, %38 : vector<128x128xf32>
    %cst_29 = arith.constant dense<0xFF800000> : vector<128xf32>
    %46 = vector.multi_reduction <maximumf>, %45, %cst_29 [1] : vector<128x128xf32> to vector<128xf32>
    %47 = vector.shape_cast %46 : vector<128xf32> to vector<128x1xf32>
    %48 = vector.broadcast %47 : vector<128x1xf32> to vector<128x128xf32>
    %49 = arith.subf %45, %48 : vector<128x128xf32>
    %50 = math.exp %49 : vector<128x128xf32>
    %cst_30 = arith.constant dense<0.000000e+00> : vector<128xf32>
    %51 = vector.multi_reduction <add>, %50, %cst_30 [1] : vector<128x128xf32> to vector<128xf32>
    %52 = vector.shape_cast %51 : vector<128xf32> to vector<128x1xf32>
    %53 = tpu.reciprocal %52 : vector<128x1xf32> -> vector<128x1xf32>
    %54 = vector.broadcast %53 : vector<128x1xf32> to vector<128x128xf32>
    %55 = arith.mulf %50, %54 : vector<128x128xf32>
    %cst_31 = arith.constant dense<0.000000e+00> : vector<8x128xf32>
    %56 = tpu.matmul %39, %55, %cst_31 {dimension_numbers = #tpu.dot_dimension_numbers<[1], [0], [0], [1], [0, 0, 1, 1], [], []>} : vector<8x128xf32>, vector<128x128xf32>, vector<8x128xf32> -> vector<8x128xf32>
    %57 = arith.addf %41, %56 : vector<8x128xf32>
    %58 = vector.extract_strided_slice %37 {offsets = [0, 0], sizes = [128, 8], strides = [1, 1]} : vector<128x32xf32> to vector<128x8xf32>
    %cst_32 = arith.constant dense<0.000000e+00> : vector<128x8xf32>
    %59 = tpu.matmul %55, %58, %cst_32 {dimension_numbers = #tpu.dot_dimension_numbers<[1], [0], [0], [1], [0, 0, 1, 1], [], []>} : vector<128x128xf32>, vector<128x8xf32>, vector<128x8xf32> -> vector<128x8xf32>
    %60 = vector.extract_strided_slice %11 {offsets = [0, 0], sizes = [8, 32], strides = [1, 1]} : vector<32x32xf32> to vector<8x32xf32>
    %cst_33 = arith.constant dense<0.000000e+00> : vector<128x32xf32>
    %61 = tpu.matmul %59, %60, %cst_33 {dimension_numbers = #tpu.dot_dimension_numbers<[1], [0], [0], [1], [0, 0, 1, 1], [], []>} : vector<128x8xf32>, vector<8x32xf32>, vector<128x32xf32> -> vector<128x32xf32>
    %62 = arith.addf %40, %61 : vector<128x32xf32>
    %63 = vector.extract_strided_slice %31 {offsets = [0, 8], sizes = [128, 8], strides = [1, 1]} : vector<128x32xf32> to vector<128x8xf32>
    %64 = vector.extract_strided_slice %34 {offsets = [0, 8], sizes = [128, 8], strides = [1, 1]} : vector<128x32xf32> to vector<128x8xf32>
    %cst_34 = arith.constant dense<0.000000e+00> : vector<128x128xf32>
    %65 = tpu.matmul %63, %64, %cst_34 {dimension_numbers = #tpu.dot_dimension_numbers<[1], [1], [0], [0], [0, 0, 1, 0], [], []>} : vector<128x8xf32>, vector<128x8xf32>, vector<128x128xf32> -> vector<128x128xf32>
    %66 = arith.addf %65, %38 : vector<128x128xf32>
    %cst_35 = arith.constant dense<0xFF800000> : vector<128xf32>
    %67 = vector.multi_reduction <maximumf>, %66, %cst_35 [1] : vector<128x128xf32> to vector<128xf32>
    %68 = vector.shape_cast %67 : vector<128xf32> to vector<128x1xf32>
    %69 = vector.broadcast %68 : vector<128x1xf32> to vector<128x128xf32>
    %70 = arith.subf %66, %69 : vector<128x128xf32>
    %71 = math.exp %70 : vector<128x128xf32>
    %cst_36 = arith.constant dense<0.000000e+00> : vector<128xf32>
    %72 = vector.multi_reduction <add>, %71, %cst_36 [1] : vector<128x128xf32> to vector<128xf32>
    %73 = vector.shape_cast %72 : vector<128xf32> to vector<128x1xf32>
    %74 = tpu.reciprocal %73 : vector<128x1xf32> -> vector<128x1xf32>
    %75 = vector.broadcast %74 : vector<128x1xf32> to vector<128x128xf32>
    %76 = arith.mulf %71, %75 : vector<128x128xf32>
    %cst_37 = arith.constant dense<0.000000e+00> : vector<8x128xf32>
    %77 = tpu.matmul %39, %76, %cst_37 {dimension_numbers = #tpu.dot_dimension_numbers<[1], [0], [0], [1], [0, 0, 1, 1], [], []>} : vector<8x128xf32>, vector<128x128xf32>, vector<8x128xf32> -> vector<8x128xf32>
    %78 = arith.addf %57, %77 : vector<8x128xf32>
    %79 = vector.extract_strided_slice %37 {offsets = [0, 8], sizes = [128, 8], strides = [1, 1]} : vector<128x32xf32> to vector<128x8xf32>
    %cst_38 = arith.constant dense<0.000000e+00> : vector<128x8xf32>
    %80 = tpu.matmul %76, %79, %cst_38 {dimension_numbers = #tpu.dot_dimension_numbers<[1], [0], [0], [1], [0, 0, 1, 1], [], []>} : vector<128x128xf32>, vector<128x8xf32>, vector<128x8xf32> -> vector<128x8xf32>
    %81 = vector.extract_strided_slice %11 {offsets = [8, 0], sizes = [8, 32], strides = [1, 1]} : vector<32x32xf32> to vector<8x32xf32>
    %cst_39 = arith.constant dense<0.000000e+00> : vector<128x32xf32>
    %82 = tpu.matmul %80, %81, %cst_39 {dimension_numbers = #tpu.dot_dimension_numbers<[1], [0], [0], [1], [0, 0, 1, 1], [], []>} : vector<128x8xf32>, vector<8x32xf32>, vector<128x32xf32> -> vector<128x32xf32>
    %83 = arith.addf %62, %82 : vector<128x32xf32>
    %84 = vector.extract_strided_slice %31 {offsets = [0, 16], sizes = [128, 8], strides = [1, 1]} : vector<128x32xf32> to vector<128x8xf32>
    %85 = vector.extract_strided_slice %34 {offsets = [0, 16], sizes = [128, 8], strides = [1, 1]} : vector<128x32xf32> to vector<128x8xf32>
    %cst_40 = arith.constant dense<0.000000e+00> : vector<128x128xf32>
    %86 = tpu.matmul %84, %85, %cst_40 {dimension_numbers = #tpu.dot_dimension_numbers<[1], [1], [0], [0], [0, 0, 1, 0], [], []>} : vector<128x8xf32>, vector<128x8xf32>, vector<128x128xf32> -> vector<128x128xf32>
    %87 = arith.addf %86, %38 : vector<128x128xf32>
    %cst_41 = arith.constant dense<0xFF800000> : vector<128xf32>
    %88 = vector.multi_reduction <maximumf>, %87, %cst_41 [1] : vector<128x128xf32> to vector<128xf32>
    %89 = vector.shape_cast %88 : vector<128xf32> to vector<128x1xf32>
    %90 = vector.broadcast %89 : vector<128x1xf32> to vector<128x128xf32>
    %91 = arith.subf %87, %90 : vector<128x128xf32>
    %92 = math.exp %91 : vector<128x128xf32>
    %cst_42 = arith.constant dense<0.000000e+00> : vector<128xf32>
    %93 = vector.multi_reduction <add>, %92, %cst_42 [1] : vector<128x128xf32> to vector<128xf32>
    %94 = vector.shape_cast %93 : vector<128xf32> to vector<128x1xf32>
    %95 = tpu.reciprocal %94 : vector<128x1xf32> -> vector<128x1xf32>
    %96 = vector.broadcast %95 : vector<128x1xf32> to vector<128x128xf32>
    %97 = arith.mulf %92, %96 : vector<128x128xf32>
    %cst_43 = arith.constant dense<0.000000e+00> : vector<8x128xf32>
    %98 = tpu.matmul %39, %97, %cst_43 {dimension_numbers = #tpu.dot_dimension_numbers<[1], [0], [0], [1], [0, 0, 1, 1], [], []>} : vector<8x128xf32>, vector<128x128xf32>, vector<8x128xf32> -> vector<8x128xf32>
    %99 = arith.addf %78, %98 : vector<8x128xf32>
    %100 = vector.extract_strided_slice %37 {offsets = [0, 16], sizes = [128, 8], strides = [1, 1]} : vector<128x32xf32> to vector<128x8xf32>
    %cst_44 = arith.constant dense<0.000000e+00> : vector<128x8xf32>
    %101 = tpu.matmul %97, %100, %cst_44 {dimension_numbers = #tpu.dot_dimension_numbers<[1], [0], [0], [1], [0, 0, 1, 1], [], []>} : vector<128x128xf32>, vector<128x8xf32>, vector<128x8xf32> -> vector<128x8xf32>
    %102 = vector.extract_strided_slice %11 {offsets = [16, 0], sizes = [8, 32], strides = [1, 1]} : vector<32x32xf32> to vector<8x32xf32>
    %cst_45 = arith.constant dense<0.000000e+00> : vector<128x32xf32>
    %103 = tpu.matmul %101, %102, %cst_45 {dimension_numbers = #tpu.dot_dimension_numbers<[1], [0], [0], [1], [0, 0, 1, 1], [], []>} : vector<128x8xf32>, vector<8x32xf32>, vector<128x32xf32> -> vector<128x32xf32>
    %104 = arith.addf %83, %103 : vector<128x32xf32>
    %105 = vector.extract_strided_slice %31 {offsets = [0, 24], sizes = [128, 8], strides = [1, 1]} : vector<128x32xf32> to vector<128x8xf32>
    %106 = vector.extract_strided_slice %34 {offsets = [0, 24], sizes = [128, 8], strides = [1, 1]} : vector<128x32xf32> to vector<128x8xf32>
    %cst_46 = arith.constant dense<0.000000e+00> : vector<128x128xf32>
    %107 = tpu.matmul %105, %106, %cst_46 {dimension_numbers = #tpu.dot_dimension_numbers<[1], [1], [0], [0], [0, 0, 1, 0], [], []>} : vector<128x8xf32>, vector<128x8xf32>, vector<128x128xf32> -> vector<128x128xf32>
    %108 = arith.addf %107, %38 : vector<128x128xf32>
    %cst_47 = arith.constant dense<0xFF800000> : vector<128xf32>
    %109 = vector.multi_reduction <maximumf>, %108, %cst_47 [1] : vector<128x128xf32> to vector<128xf32>
    %110 = vector.shape_cast %109 : vector<128xf32> to vector<128x1xf32>
    %111 = vector.broadcast %110 : vector<128x1xf32> to vector<128x128xf32>
    %112 = arith.subf %108, %111 : vector<128x128xf32>
    %113 = math.exp %112 : vector<128x128xf32>
    %cst_48 = arith.constant dense<0.000000e+00> : vector<128xf32>
    %114 = vector.multi_reduction <add>, %113, %cst_48 [1] : vector<128x128xf32> to vector<128xf32>
    %115 = vector.shape_cast %114 : vector<128xf32> to vector<128x1xf32>
    %116 = tpu.reciprocal %115 : vector<128x1xf32> -> vector<128x1xf32>
    %117 = vector.broadcast %116 : vector<128x1xf32> to vector<128x128xf32>
    %118 = arith.mulf %113, %117 : vector<128x128xf32>
    %cst_49 = arith.constant dense<0.000000e+00> : vector<8x128xf32>
    %119 = tpu.matmul %39, %118, %cst_49 {dimension_numbers = #tpu.dot_dimension_numbers<[1], [0], [0], [1], [0, 0, 1, 1], [], []>} : vector<8x128xf32>, vector<128x128xf32>, vector<8x128xf32> -> vector<8x128xf32>
    %120 = arith.addf %99, %119 : vector<8x128xf32>
    %121 = vector.extract_strided_slice %37 {offsets = [0, 24], sizes = [128, 8], strides = [1, 1]} : vector<128x32xf32> to vector<128x8xf32>
    %cst_50 = arith.constant dense<0.000000e+00> : vector<128x8xf32>
    %122 = tpu.matmul %118, %121, %cst_50 {dimension_numbers = #tpu.dot_dimension_numbers<[1], [0], [0], [1], [0, 0, 1, 1], [], []>} : vector<128x128xf32>, vector<128x8xf32>, vector<128x8xf32> -> vector<128x8xf32>
    %123 = vector.extract_strided_slice %11 {offsets = [24, 0], sizes = [8, 32], strides = [1, 1]} : vector<32x32xf32> to vector<8x32xf32>
    %cst_51 = arith.constant dense<0.000000e+00> : vector<128x32xf32>
    %124 = tpu.matmul %122, %123, %cst_51 {dimension_numbers = #tpu.dot_dimension_numbers<[1], [0], [0], [1], [0, 0, 1, 1], [], []>} : vector<128x8xf32>, vector<8x32xf32>, vector<128x32xf32> -> vector<128x32xf32>
    %125 = arith.addf %104, %124 : vector<128x32xf32>
    %c0_52 = arith.constant 0 : index
    %c0_53 = arith.constant 0 : index
    %c0_54 = arith.constant 0 : index
    %126 = vector.load %arg9[%c0_52, %c0_53, %c0_54] : memref<1x8x128xf32, #tpu.memory_space<vmem>>, vector<1x8x128xf32>
    %127 = vector.shape_cast %126 : vector<1x8x128xf32> to vector<8x128xf32>
    %128 = vector.shape_cast %120 : vector<8x128xf32> to vector<1x8x128xf32>
    tpu.vector_store %arg9[%c0_52, %c0_53, %c0_54], %128 {strides = array<i32>} : memref<1x8x128xf32, #tpu.memory_space<vmem>>, vector<1x8x128xf32>,
    %129 = vector.broadcast %20 : vector<1x32xf32> to vector<128x32xf32>
    %130 = arith.addf %125, %129 : vector<128x32xf32>
    %131 = arith.addf %130, %1 : vector<128x32xf32>
    %132 = arith.addf %131, %0 : vector<128x32xf32>
    %cst_55 = arith.constant dense<0.000000e+00> : vector<128xf32>
    %133 = vector.multi_reduction <add>, %132, %cst_55 [1] : vector<128x32xf32> to vector<128xf32>
    %134 = vector.shape_cast %133 : vector<128xf32> to vector<128x1xf32>
    %cst_56 = arith.constant 3.200000e+01 : f32
    %135 = vector.broadcast %cst_56 : f32 to vector<128x1xf32>
    %136 = arith.divf %134, %135 : vector<128x1xf32>
    %137 = vector.broadcast %136 : vector<128x1xf32> to vector<128x32xf32>
    %138 = arith.subf %132, %137 : vector<128x32xf32>
    %139 = arith.mulf %138, %138 : vector<128x32xf32>
    %cst_57 = arith.constant dense<0.000000e+00> : vector<128xf32>
    %140 = vector.multi_reduction <add>, %139, %cst_57 [1] : vector<128x32xf32> to vector<128xf32>
    %141 = vector.shape_cast %140 : vector<128xf32> to vector<128x1xf32>
    %cst_58 = arith.constant 3.200000e+01 : f32
    %142 = vector.broadcast %cst_58 : f32 to vector<128x1xf32>
    %143 = arith.divf %141, %142 : vector<128x1xf32>
    %144 = vector.broadcast %136 : vector<128x1xf32> to vector<128x32xf32>
    %145 = arith.subf %132, %144 : vector<128x32xf32>
    %cst_59 = arith.constant 9.99999974E-6 : f32
    %146 = vector.broadcast %cst_59 : f32 to vector<128x1xf32>
    %147 = arith.addf %143, %146 : vector<128x1xf32>
    %148 = math.rsqrt %147 : vector<128x1xf32>
    %149 = vector.broadcast %148 : vector<128x1xf32> to vector<128x32xf32>
    %150 = arith.mulf %145, %149 : vector<128x32xf32>
    %151 = vector.broadcast %21 : vector<1x32xf32> to vector<128x32xf32>
    %152 = arith.mulf %150, %151 : vector<128x32xf32>
    %153 = vector.broadcast %22 : vector<1x32xf32> to vector<128x32xf32>
    %154 = arith.addf %152, %153 : vector<128x32xf32>
    %cst_60 = arith.constant dense<0.000000e+00> : vector<128x32xf32>
    %155 = tpu.matmul %154, %13, %cst_60 {dimension_numbers = #tpu.dot_dimension_numbers<[1], [0], [0], [1], [0, 0, 1, 1], [], []>} : vector<128x32xf32>, vector<32x32xf32>, vector<128x32xf32> -> vector<128x32xf32>
    %156 = vector.broadcast %23 : vector<1x32xf32> to vector<128x32xf32>
    %157 = arith.addf %155, %156 : vector<128x32xf32>
    %cst_61 = arith.constant 0.000000e+00 : f32
    %158 = vector.broadcast %cst_61 : f32 to vector<128x32xf32>
    %159 = arith.maximumf %157, %158 : vector<128x32xf32>
    %cst_62 = arith.constant dense<0.000000e+00> : vector<128x32xf32>
    %160 = tpu.matmul %159, %15, %cst_62 {dimension_numbers = #tpu.dot_dimension_numbers<[1], [0], [0], [1], [0, 0, 1, 1], [], []>} : vector<128x32xf32>, vector<32x32xf32>, vector<128x32xf32> -> vector<128x32xf32>
    %161 = vector.broadcast %24 : vector<1x32xf32> to vector<128x32xf32>
    %162 = arith.addf %160, %161 : vector<128x32xf32>
    %163 = arith.addf %162, %154 : vector<128x32xf32>
    %cst_63 = arith.constant dense<0.000000e+00> : vector<128xf32>
    %164 = vector.multi_reduction <add>, %163, %cst_63 [1] : vector<128x32xf32> to vector<128xf32>
    %165 = vector.shape_cast %164 : vector<128xf32> to vector<128x1xf32>
    %cst_64 = arith.constant 3.200000e+01 : f32
    %166 = vector.broadcast %cst_64 : f32 to vector<128x1xf32>
    %167 = arith.divf %165, %166 : vector<128x1xf32>
    %168 = vector.broadcast %167 : vector<128x1xf32> to vector<128x32xf32>
    %169 = arith.subf %163, %168 : vector<128x32xf32>
    %170 = arith.mulf %169, %169 : vector<128x32xf32>
    %cst_65 = arith.constant dense<0.000000e+00> : vector<128xf32>
    %171 = vector.multi_reduction <add>, %170, %cst_65 [1] : vector<128x32xf32> to vector<128xf32>
    %172 = vector.shape_cast %171 : vector<128xf32> to vector<128x1xf32>
    %cst_66 = arith.constant 3.200000e+01 : f32
    %173 = vector.broadcast %cst_66 : f32 to vector<128x1xf32>
    %174 = arith.divf %172, %173 : vector<128x1xf32>
    %175 = vector.broadcast %167 : vector<128x1xf32> to vector<128x32xf32>
    %176 = arith.subf %163, %175 : vector<128x32xf32>
    %cst_67 = arith.constant 9.99999974E-6 : f32
    %177 = vector.broadcast %cst_67 : f32 to vector<128x1xf32>
    %178 = arith.addf %174, %177 : vector<128x1xf32>
    %179 = math.rsqrt %178 : vector<128x1xf32>
    %180 = vector.broadcast %179 : vector<128x1xf32> to vector<128x32xf32>
    %181 = arith.mulf %176, %180 : vector<128x32xf32>
    %182 = vector.broadcast %25 : vector<1x32xf32> to vector<128x32xf32>
    %183 = arith.mulf %181, %182 : vector<128x32xf32>
    %184 = vector.broadcast %26 : vector<1x32xf32> to vector<128x32xf32>
    %185 = arith.addf %183, %184 : vector<128x32xf32>
    %cst_68 = arith.constant dense<0.000000e+00> : vector<1x128xf32>
    %186 = tpu.matmul %27, %185, %cst_68 {dimension_numbers = #tpu.dot_dimension_numbers<[1], [1], [0], [0], [0, 0, 1, 0], [], []>} : vector<1x32xf32>, vector<128x32xf32>, vector<1x128xf32> -> vector<1x128xf32>
    %187 = vector.broadcast %28 : vector<1x1xf32> to vector<1x128xf32>
    %188 = arith.addf %186, %187 : vector<1x128xf32>
    %189 = arith.negf %188 : vector<1x128xf32>
    %190 = math.exp %189 : vector<1x128xf32>
    %cst_69 = arith.constant 1.000000e+00 : f32
    %191 = vector.broadcast %cst_69 : f32 to vector<1x128xf32>
    %192 = arith.addf %191, %190 : vector<1x128xf32>
    %193 = arith.divf %191, %192 : vector<1x128xf32>
    %c0_70 = arith.constant 0 : index
    %c0_71 = arith.constant 0 : index
    %c0_72 = arith.constant 0 : index
    %194 = vector.load %arg8[%c0_70, %c0_71, %c0_72] : memref<1x1x128xf32, #tpu.memory_space<vmem>>, vector<1x1x128xf32>
    %195 = vector.shape_cast %194 : vector<1x1x128xf32> to vector<1x128xf32>
    %196 = vector.shape_cast %193 : vector<1x128xf32> to vector<1x1x128xf32>
    tpu.vector_store %arg8[%c0_70, %c0_71, %c0_72], %196 {strides = array<i32>} : memref<1x1x128xf32, #tpu.memory_space<vmem>>, vector<1x1x128xf32>,
    return
  }
  func.func @transform_0(%arg0: i32) -> (i32, i32) {
    %c0_i32 = arith.constant 0 : i32
    %c0_i32_0 = arith.constant 0 : i32
    return %arg0, %c0_i32 : i32, i32
  }
  func.func @transform_1(%arg0: i32) -> (i32, i32) {
    %c0_i32 = arith.constant 0 : i32
    %c0_i32_0 = arith.constant 0 : i32
    return %arg0, %c0_i32 : i32, i32
  }
  func.func @transform_2(%arg0: i32) -> (i32, i32) {
    %c0_i32 = arith.constant 0 : i32
    %c0_i32_0 = arith.constant 0 : i32
    %c0_i32_1 = arith.constant 0 : i32
    return %c0_i32, %c0_i32_0 : i32, i32
  }
  func.func @transform_3(%arg0: i32) -> (i32, i32) {
    %c0_i32 = arith.constant 0 : i32
    %c0_i32_0 = arith.constant 0 : i32
    %c0_i32_1 = arith.constant 0 : i32
    return %c0_i32, %c0_i32_0 : i32, i32
  }
  func.func @transform_4(%arg0: i32) -> (i32, i32) {
    %c0_i32 = arith.constant 0 : i32
    %c0_i32_0 = arith.constant 0 : i32
    %c0_i32_1 = arith.constant 0 : i32
    return %c0_i32, %c0_i32_0 : i32, i32
  }
  func.func @transform_5(%arg0: i32) -> (i32, i32, i32) {
    %c0_i32 = arith.constant 0 : i32
    %c0_i32_0 = arith.constant 0 : i32
    %c0_i32_1 = arith.constant 0 : i32
    %c0_i32_2 = arith.constant 0 : i32
    return %c0_i32, %c0_i32_0, %c0_i32_1 : i32, i32, i32
  }
  func.func @transform_6(%arg0: i32) -> (i32, i32) {
    %c0_i32 = arith.constant 0 : i32
    %c0_i32_0 = arith.constant 0 : i32
    %c0_i32_1 = arith.constant 0 : i32
    return %c0_i32, %c0_i32_0 : i32, i32
  }
  func.func @transform_7(%arg0: i32) -> (i32, i32, i32) {
    %c0_i32 = arith.constant 0 : i32
    %c0_i32_0 = arith.constant 0 : i32
    %c0_i32_1 = arith.constant 0 : i32
    return %arg0, %c0_i32, %c0_i32_0 : i32, i32, i32
  }
  func.func @transform_8(%arg0: i32) -> (i32, i32, i32) {
    %c0_i32 = arith.constant 0 : i32
    %c0_i32_0 = arith.constant 0 : i32
    %c0_i32_1 = arith.constant 0 : i32
    return %arg0, %c0_i32, %c0_i32_0 : i32, i32, i32
  }
}

</mosaic_0001>

<llo_original>
// kernel: tpu_custom_call.1
$region0: #{tpu_custom_call.1}
  #allocation0 [shape = 'u32[]', space=smem, size = 0x4, offset = 0x4, fixed_abs, tag = 'smem constant byte address 0x4 - core index']
  #allocation1 [shape = 'u32[72,128]{1,0:T(1,128)}', space=vmem, size = 0x9000, scoped, tag = 'internal scratch']
  %s0 = inlined_call_operand.vmem [shape: f32[128,32], index: 0, kind: input, shape index: {}]
  %s1 = inlined_call_operand.vmem [shape: f32[128,32], index: 1, kind: input, shape index: {}]
  %s2 = inlined_call_operand.vmem [shape: f32[128,32], index: 2, kind: input, shape index: {}]
  %s3 = inlined_call_operand.vmem [shape: f32[128,128], index: 3, kind: input, shape index: {}]
  %s4 = inlined_call_operand.vmem [shape: f32[8,128], index: 4, kind: input, shape index: {}]
  %s5 = inlined_call_operand.vmem [shape: f32[6,32,32], index: 5, kind: input, shape index: {}]
  %s6 = inlined_call_operand.vmem [shape: f32[12,32], index: 6, kind: input, shape index: {}]
  %s7 = inlined_call_operand.hbm [shape: f32[1,1,128], index: 7, kind: output, shape index: {0}]
  %s8 = inlined_call_operand.hbm [shape: f32[1,8,128], index: 8, kind: output, shape index: {1}]
  %9 = xla_tuple %s7, %s8
  %s10 = sld [smem:[#allocation0]]
  $region46: #{tpu_custom_call.1} parent=0
    _
  %s12 = ssub.s32 1, %s10
  %s13 = scalar_select 0, %s12, %s10
  $region1: #{tpu_custom_call.1} parent=0
    #allocation2 [shape = 'u8[512]{0}', space=vmem, size = 0x400, scoped, tag = 'output window, operand 0, single buffered']
    #allocation3 [shape = 's32[1]{0}', space=sflag, size = 0x4, scoped, tag = 'scoped memory for tpu_custom_call.1']
    #allocation4 [shape = 'u8[4096]{0}', space=vmem, size = 0x1000, scoped, tag = 'output window, operand 1, single buffered']
    #allocation5 [shape = 's32[1]{0}', space=sflag, size = 0x4, scoped, tag = 'scoped memory for tpu_custom_call.1']
    %14 = vsyncpa [#allocation3], 0
    %15 = vsyncpa [#allocation5], 0
    // Predicated region
    $region2: #{tpu_custom_call.1} parent=1 // pred_check
      _
    $region3: #{tpu_custom_call.1} parent=1 // pred_check_branch
      %17 = sbr.rel (0) target = $region5
    $region4: #{tpu_custom_call.1} parent=1 // pred_region
      _
    $region5: #{tpu_custom_call.1} parent=1 // pred_fallthru
      _
    // Predicated region
    $region6: #{tpu_custom_call.1} parent=1 // pred_check
      _
    $region7: #{tpu_custom_call.1} parent=1 // pred_check_branch
      %19 = sbr.rel (0) target = $region9
    $region8: #{tpu_custom_call.1} parent=1 // pred_region
      _
    $region9: #{tpu_custom_call.1} parent=1 // pred_fallthru
      _
    // Predicated region
    $region10: #{tpu_custom_call.1} parent=1 // pred_check
      _
    $region11: #{tpu_custom_call.1} parent=1 // pred_check_branch
      %21 = sbr.rel (0) target = $region13
    $region12: #{tpu_custom_call.1} parent=1 // pred_region
      _
    $region13: #{tpu_custom_call.1} parent=1 // pred_fallthru
      _
    // Predicated region
    $region14: #{tpu_custom_call.1} parent=1 // pred_check
      _
    $region15: #{tpu_custom_call.1} parent=1 // pred_check_branch
      %23 = sbr.rel (0) target = $region17
    $region16: #{tpu_custom_call.1} parent=1 // pred_region
      _
    $region17: #{tpu_custom_call.1} parent=1 // pred_fallthru
      _
    // Predicated region
    $region18: #{tpu_custom_call.1} parent=1 // pred_check
      _
    $region19: #{tpu_custom_call.1} parent=1 // pred_check_branch
      %25 = sbr.rel (0) target = $region21
    $region20: #{tpu_custom_call.1} parent=1 // pred_region
      _
    $region21: #{tpu_custom_call.1} parent=1 // pred_fallthru
      _
    // Predicated region
    $region22: #{tpu_custom_call.1} parent=1 // pred_check
      _
    $region23: #{tpu_custom_call.1} parent=1 // pred_check_branch
      %27 = sbr.rel (0) target = $region25
    $region24: #{tpu_custom_call.1} parent=1 // pred_region
      _
    $region25: #{tpu_custom_call.1} parent=1 // pred_fallthru
      _
    // Predicated region
    $region26: #{tpu_custom_call.1} parent=1 // pred_check
      _
    $region27: #{tpu_custom_call.1} parent=1 // pred_check_branch
      %29 = sbr.rel (0) target = $region29
    $region28: #{tpu_custom_call.1} parent=1 // pred_region
      _
    $region29: #{tpu_custom_call.1} parent=1 // pred_fallthru
      _
    %v30 = vld [vmem:[%s0] sm:$0xff]
    %v31 = vld [vmem:[%s0 + $0x8] sm:$0xff]
    %v32 = vld [vmem:[%s0 + $0x10] sm:$0xff]
    %v33 = vld [vmem:[%s0 + $0x18] sm:$0xff]
    %v34 = vld [vmem:[%s0 + $0x20] sm:$0xff]
    %v35 = vld [vmem:[%s0 + $0x28] sm:$0xff]
    %v36 = vld [vmem:[%s0 + $0x30] sm:$0xff]
    %v37 = vld [vmem:[%s0 + $0x38] sm:$0xff]
    %v38 = vld [vmem:[%s0 + $0x40] sm:$0xff]
    %v39 = vld [vmem:[%s0 + $0x48] sm:$0xff]
    %v40 = vld [vmem:[%s0 + $0x50] sm:$0xff]
    %v41 = vld [vmem:[%s0 + $0x58] sm:$0xff]
    %v42 = vld [vmem:[%s0 + $0x60] sm:$0xff]
    %v43 = vld [vmem:[%s0 + $0x68] sm:$0xff]
    %v44 = vld [vmem:[%s0 + $0x70] sm:$0xff]
    %v45 = vld [vmem:[%s0 + $0x78] sm:$0xff]
    %v46 = vld [vmem:[%s1] sm:$0xff]
    %v47 = vld [vmem:[%s1 + $0x8] sm:$0xff]
    %v48 = vld [vmem:[%s1 + $0x10] sm:$0xff]
    %v49 = vld [vmem:[%s1 + $0x18] sm:$0xff]
    %v50 = vld [vmem:[%s1 + $0x20] sm:$0xff]
    %v51 = vld [vmem:[%s1 + $0x28] sm:$0xff]
    %v52 = vld [vmem:[%s1 + $0x30] sm:$0xff]
    %v53 = vld [vmem:[%s1 + $0x38] sm:$0xff]
    %v54 = vld [vmem:[%s1 + $0x40] sm:$0xff]
    %v55 = vld [vmem:[%s1 + $0x48] sm:$0xff]
    %v56 = vld [vmem:[%s1 + $0x50] sm:$0xff]
    %v57 = vld [vmem:[%s1 + $0x58] sm:$0xff]
    %v58 = vld [vmem:[%s1 + $0x60] sm:$0xff]
    %v59 = vld [vmem:[%s1 + $0x68] sm:$0xff]
    %v60 = vld [vmem:[%s1 + $0x70] sm:$0xff]
    %v61 = vld [vmem:[%s1 + $0x78] sm:$0xff]
    %v62 = vld [vmem:[%s2] sm:$0xff]
    %v63 = vld [vmem:[%s2 + $0x8] sm:$0xff]
    %v64 = vld [vmem:[%s2 + $0x10] sm:$0xff]
    %v65 = vld [vmem:[%s2 + $0x18] sm:$0xff]
    %v66 = vld [vmem:[%s2 + $0x20] sm:$0xff]
    %v67 = vld [vmem:[%s2 + $0x28] sm:$0xff]
    %v68 = vld [vmem:[%s2 + $0x30] sm:$0xff]
    %v69 = vld [vmem:[%s2 + $0x38] sm:$0xff]
    %v70 = vld [vmem:[%s2 + $0x40] sm:$0xff]
    %v71 = vld [vmem:[%s2 + $0x48] sm:$0xff]
    %v72 = vld [vmem:[%s2 + $0x50] sm:$0xff]
    %v73 = vld [vmem:[%s2 + $0x58] sm:$0xff]
    %v74 = vld [vmem:[%s2 + $0x60] sm:$0xff]
    %v75 = vld [vmem:[%s2 + $0x68] sm:$0xff]
    %v76 = vld [vmem:[%s2 + $0x70] sm:$0xff]
    %v77 = vld [vmem:[%s2 + $0x78] sm:$0xff]
    %v78 = vadd.f32 %v46, %v62
    %v79 = vadd.f32 %v47, %v63
    %v80 = vadd.f32 %v48, %v64
    %v81 = vadd.f32 %v49, %v65
    %v82 = vadd.f32 %v50, %v66
    %v83 = vadd.f32 %v51, %v67
    %v84 = vadd.f32 %v52, %v68
    %v85 = vadd.f32 %v53, %v69
    %v86 = vadd.f32 %v54, %v70
    %v87 = vadd.f32 %v55, %v71
    %v88 = vadd.f32 %v56, %v72
    %v89 = vadd.f32 %v57, %v73
    %v90 = vadd.f32 %v58, %v74
    %v91 = vadd.f32 %v59, %v75
    %v92 = vadd.f32 %v60, %v76
    %v93 = vadd.f32 %v61, %v77
    %v94 = vld [vmem:[%s5] sm:$0xff]
    %v95 = vld [vmem:[%s5 + $0x8] sm:$0xff]
    %v96 = vld [vmem:[%s5 + $0x10] sm:$0xff]
    %v97 = vld [vmem:[%s5 + $0x18] sm:$0xff]
    %s98 = scalar_lea.vmem %s5, 32
    %v99 = vld [vmem:[%s98] sm:$0xff]
    %v100 = vld [vmem:[%s98 + $0x8] sm:$0xff]
    %v101 = vld [vmem:[%s98 + $0x10] sm:$0xff]
    %v102 = vld [vmem:[%s98 + $0x18] sm:$0xff]
    %s103 = scalar_lea.vmem %s5, 64
    %v104 = vld [vmem:[%s103] sm:$0xff]
    %v105 = vld [vmem:[%s103 + $0x8] sm:$0xff]
    %v106 = vld [vmem:[%s103 + $0x10] sm:$0xff]
    %v107 = vld [vmem:[%s103 + $0x18] sm:$0xff]
    %s108 = scalar_lea.vmem %s5, 96
    %v109 = vld [vmem:[%s108] sm:$0xff]
    %v110 = vld [vmem:[%s108 + $0x8] sm:$0xff]
    %v111 = vld [vmem:[%s108 + $0x10] sm:$0xff]
    %v112 = vld [vmem:[%s108 + $0x18] sm:$0xff]
    %s113 = scalar_lea.vmem %s5, 128
    %v114 = vld [vmem:[%s113] sm:$0xff]
    %v115 = vld [vmem:[%s113 + $0x8] sm:$0xff]
    %v116 = vld [vmem:[%s113 + $0x10] sm:$0xff]
    %v117 = vld [vmem:[%s113 + $0x18] sm:$0xff]
    %s118 = scalar_lea.vmem %s5, 160
    %v119 = vld [vmem:[%s118] sm:$0xff]
    %v120 = vld [vmem:[%s118 + $0x8] sm:$0xff]
    %v121 = vld [vmem:[%s118 + $0x10] sm:$0xff]
    %v122 = vld [vmem:[%s118 + $0x18] sm:$0xff]
    %v123 = vld [vmem:[%s6] sm:$0xff]
    %v124 = vld [vmem:[%s6 + $0x8] sm:$0xf]
    %v125 = vperm.slane %v123, 0
    %vm126 = vcmask 261120
    %v128 = vsel %vm126, %v30, 0
    %v131 = vsel %vm126, %v31, 0
    %v134 = vsel %vm126, %v32, 0
    %v137 = vsel %vm126, %v33, 0
    %v140 = vsel %vm126, %v34, 0
    %v143 = vsel %vm126, %v35, 0
    %v146 = vsel %vm126, %v36, 0
    %v149 = vsel %vm126, %v37, 0
    %v152 = vsel %vm126, %v38, 0
    %v155 = vsel %vm126, %v39, 0
    %v158 = vsel %vm126, %v40, 0
    %v161 = vsel %vm126, %v41, 0
    %v164 = vsel %vm126, %v42, 0
    %v167 = vsel %vm126, %v43, 0
    %v170 = vsel %vm126, %v44, 0
    %v173 = vsel %vm126, %v45, 0
    %175 = vmatpush.msra.mxu0 0.0
    %176 = vmatpush.msra.mxu0 0.0
    %177 = vmatpush.msra.mxu0 0.0
    %178 = vmatpush.msra.mxu0 0.0
    %179 = vmatpush.msra.mxu0 0.0
    %180 = vmatpush.msra.mxu0 0.0
    %181 = vmatpush.msra.mxu0 0.0
    %182 = vmatpush.msra.mxu0 0.0
    %183 = vmatpush.msra.mxu0 0.0
    %184 = vmatpush.msra.mxu0 0.0
    %185 = vmatpush.msra.mxu0 0.0
    %186 = vmatpush.msra.mxu0 0.0
    %187 = vmatpush.msra.mxu0 %v97
    %188 = vmatpush.msra.mxu0 %v96
    %189 = vmatpush.msra.mxu0 %v95
    %190 = vmatpush.msra.mxu0 %v94
    %191 = vmatmul.f32.gmra.mxu0 %v128
    %v192 = vpop.f32.mrf.mxu0
    %v193 = vadd.f32 %v125, %v192
    %194 = vmatmul.f32.gmra.mxu0 %v131
    %v195 = vpop.f32.mrf.mxu0
    %v196 = vadd.f32 %v125, %v195
    %197 = vmatmul.f32.gmra.mxu0 %v134
    %v198 = vpop.f32.mrf.mxu0
    %v199 = vadd.f32 %v125, %v198
    %200 = vmatmul.f32.gmra.mxu0 %v137
    %v201 = vpop.f32.mrf.mxu0
    %v202 = vadd.f32 %v125, %v201
    %203 = vmatmul.f32.gmra.mxu0 %v140
    %v204 = vpop.f32.mrf.mxu0
    %v205 = vadd.f32 %v125, %v204
    %206 = vmatmul.f32.gmra.mxu0 %v143
    %v207 = vpop.f32.mrf.mxu0
    %v208 = vadd.f32 %v125, %v207
    %209 = vmatmul.f32.gmra.mxu0 %v146
    %v210 = vpop.f32.mrf.mxu0
    %v211 = vadd.f32 %v125, %v210
    %212 = vmatmul.f32.gmra.mxu0 %v149
    %v213 = vpop.f32.mrf.mxu0
    %v214 = vadd.f32 %v125, %v213
    %215 = vmatmul.f32.gmra.mxu0 %v152
    %v216 = vpop.f32.mrf.mxu0
    %v217 = vadd.f32 %v125, %v216
    %218 = vmatmul.f32.gmra.mxu0 %v155
    %v219 = vpop.f32.mrf.mxu0
    %v220 = vadd.f32 %v125, %v219
    %221 = vmatmul.f32.gmra.mxu0 %v158
    %v222 = vpop.f32.mrf.mxu0
    %v223 = vadd.f32 %v125, %v222
    %224 = vmatmul.f32.gmra.mxu0 %v161
    %v225 = vpop.f32.mrf.mxu0
    %v226 = vadd.f32 %v125, %v225
    %227 = vmatmul.f32.gmra.mxu0 %v164
    %v228 = vpop.f32.mrf.mxu0
    %v229 = vadd.f32 %v125, %v228
    %230 = vmatmul.f32.gmra.mxu0 %v167
    %v231 = vpop.f32.mrf.mxu0
    %v232 = vadd.f32 %v125, %v231
    %233 = vmatmul.f32.gmra.mxu0 %v170
    %v234 = vpop.f32.mrf.mxu0
    %v235 = vadd.f32 %v125, %v234
    %236 = vmatmul.f32.gmra.mxu0 %v173
    %v237 = vpop.f32.mrf.mxu0
    %v238 = vadd.f32 %v125, %v237
    %239 = vdwg.mxu0
    %v240 = vperm.slane %v123, 1
    %v242 = vsel %vm126, %v78, 0
    %v245 = vsel %vm126, %v79, 0
    %v248 = vsel %vm126, %v80, 0
    %v251 = vsel %vm126, %v81, 0
    %v254 = vsel %vm126, %v82, 0
    %v257 = vsel %vm126, %v83, 0
    %v260 = vsel %vm126, %v84, 0
    %v263 = vsel %vm126, %v85, 0
    %v266 = vsel %vm126, %v86, 0
    %v269 = vsel %vm126, %v87, 0
    %v272 = vsel %vm126, %v88, 0
    %v275 = vsel %vm126, %v89, 0
    %v278 = vsel %vm126, %v90, 0
    %v281 = vsel %vm126, %v91, 0
    %v284 = vsel %vm126, %v92, 0
    %v287 = vsel %vm126, %v93, 0
    %289 = vmatpush.msra.mxu0 0.0
    %290 = vmatpush.msra.mxu0 0.0
    %291 = vmatpush.msra.mxu0 0.0
    %292 = vmatpush.msra.mxu0 0.0
    %293 = vmatpush.msra.mxu0 0.0
    %294 = vmatpush.msra.mxu0 0.0
    %295 = vmatpush.msra.mxu0 0.0
    %296 = vmatpush.msra.mxu0 0.0
    %297 = vmatpush.msra.mxu0 0.0
    %298 = vmatpush.msra.mxu0 0.0
    %299 = vmatpush.msra.mxu0 0.0
    %300 = vmatpush.msra.mxu0 0.0
    %301 = vmatpush.msra.mxu0 %v102
    %302 = vmatpush.msra.mxu0 %v101
    %303 = vmatpush.msra.mxu0 %v100
    %304 = vmatpush.msra.mxu0 %v99
    %305 = vmatmul.f32.gmra.mxu0 %v242
    %v306 = vpop.f32.mrf.mxu0
    %v307 = vadd.f32 %v240, %v306
    %308 = vmatmul.f32.gmra.mxu0 %v245
    %v309 = vpop.f32.mrf.mxu0
    %v310 = vadd.f32 %v240, %v309
    %311 = vmatmul.f32.gmra.mxu0 %v248
    %v312 = vpop.f32.mrf.mxu0
    %v313 = vadd.f32 %v240, %v312
    %314 = vmatmul.f32.gmra.mxu0 %v251
    %v315 = vpop.f32.mrf.mxu0
    %v316 = vadd.f32 %v240, %v315
    %317 = vmatmul.f32.gmra.mxu0 %v254
    %v318 = vpop.f32.mrf.mxu0
    %v319 = vadd.f32 %v240, %v318
    %320 = vmatmul.f32.gmra.mxu0 %v257
    %v321 = vpop.f32.mrf.mxu0
    %v322 = vadd.f32 %v240, %v321
    %323 = vmatmul.f32.gmra.mxu0 %v260
    %v324 = vpop.f32.mrf.mxu0
    %v325 = vadd.f32 %v240, %v324
    %326 = vmatmul.f32.gmra.mxu0 %v263
    %v327 = vpop.f32.mrf.mxu0
    %v328 = vadd.f32 %v240, %v327
    %329 = vmatmul.f32.gmra.mxu0 %v266
    %v330 = vpop.f32.mrf.mxu0
    %v331 = vadd.f32 %v240, %v330
    %332 = vmatmul.f32.gmra.mxu0 %v269
    %v333 = vpop.f32.mrf.mxu0
    %v334 = vadd.f32 %v240, %v333
    %335 = vmatmul.f32.gmra.mxu0 %v272
    %v336 = vpop.f32.mrf.mxu0
    %v337 = vadd.f32 %v240, %v336
    %338 = vmatmul.f32.gmra.mxu0 %v275
    %v339 = vpop.f32.mrf.mxu0
    %v340 = vadd.f32 %v240, %v339
    %341 = vmatmul.f32.gmra.mxu0 %v278
    %v342 = vpop.f32.mrf.mxu0
    %v343 = vadd.f32 %v240, %v342
    %344 = vmatmul.f32.gmra.mxu0 %v281
    %v345 = vpop.f32.mrf.mxu0
    %v346 = vadd.f32 %v240, %v345
    %347 = vmatmul.f32.gmra.mxu0 %v284
    %v348 = vpop.f32.mrf.mxu0
    %v349 = vadd.f32 %v240, %v348
    %350 = vmatmul.f32.gmra.mxu0 %v287
    %v351 = vpop.f32.mrf.mxu0
    %v352 = vadd.f32 %v240, %v351
    %353 = vdwg.mxu0
    %v354 = vperm.slane %v123, 2
    %355 = vmatpush.msra.mxu0 0.0
    %356 = vmatpush.msra.mxu0 0.0
    %357 = vmatpush.msra.mxu0 0.0
    %358 = vmatpush.msra.mxu0 0.0
    %359 = vmatpush.msra.mxu0 0.0
    %360 = vmatpush.msra.mxu0 0.0
    %361 = vmatpush.msra.mxu0 0.0
    %362 = vmatpush.msra.mxu0 0.0
    %363 = vmatpush.msra.mxu0 0.0
    %364 = vmatpush.msra.mxu0 0.0
    %365 = vmatpush.msra.mxu0 0.0
    %366 = vmatpush.msra.mxu0 0.0
    %367 = vmatpush.msra.mxu0 %v107
    %368 = vmatpush.msra.mxu0 %v106
    %369 = vmatpush.msra.mxu0 %v105
    %370 = vmatpush.msra.mxu0 %v104
    %371 = vmatmul.f32.gmra.mxu0 %v242
    %v372 = vpop.f32.mrf.mxu0
    %v373 = vadd.f32 %v354, %v372
    %374 = vmatmul.f32.gmra.mxu0 %v245
    %v375 = vpop.f32.mrf.mxu0
    %v376 = vadd.f32 %v354, %v375
    %377 = vmatmul.f32.gmra.mxu0 %v248
    %v378 = vpop.f32.mrf.mxu0
    %v379 = vadd.f32 %v354, %v378
    %380 = vmatmul.f32.gmra.mxu0 %v251
    %v381 = vpop.f32.mrf.mxu0
    %v382 = vadd.f32 %v354, %v381
    %383 = vmatmul.f32.gmra.mxu0 %v254
    %v384 = vpop.f32.mrf.mxu0
    %v385 = vadd.f32 %v354, %v384
    %386 = vmatmul.f32.gmra.mxu0 %v257
    %v387 = vpop.f32.mrf.mxu0
    %v388 = vadd.f32 %v354, %v387
    %389 = vmatmul.f32.gmra.mxu0 %v260
    %v390 = vpop.f32.mrf.mxu0
    %v391 = vadd.f32 %v354, %v390
    %392 = vmatmul.f32.gmra.mxu0 %v263
    %v393 = vpop.f32.mrf.mxu0
    %v394 = vadd.f32 %v354, %v393
    %395 = vmatmul.f32.gmra.mxu0 %v266
    %v396 = vpop.f32.mrf.mxu0
    %v397 = vadd.f32 %v354, %v396
    %398 = vmatmul.f32.gmra.mxu0 %v269
    %v399 = vpop.f32.mrf.mxu0
    %v400 = vadd.f32 %v354, %v399
    %401 = vmatmul.f32.gmra.mxu0 %v272
    %v402 = vpop.f32.mrf.mxu0
    %v403 = vadd.f32 %v354, %v402
    %404 = vmatmul.f32.gmra.mxu0 %v275
    %v405 = vpop.f32.mrf.mxu0
    %v406 = vadd.f32 %v354, %v405
    %407 = vmatmul.f32.gmra.mxu0 %v278
    %v408 = vpop.f32.mrf.mxu0
    %v409 = vadd.f32 %v354, %v408
    %410 = vmatmul.f32.gmra.mxu0 %v281
    %v411 = vpop.f32.mrf.mxu0
    %v412 = vadd.f32 %v354, %v411
    %413 = vmatmul.f32.gmra.mxu0 %v284
    %v414 = vpop.f32.mrf.mxu0
    %v415 = vadd.f32 %v354, %v414
    %416 = vmatmul.f32.gmra.mxu0 %v287
    %v417 = vpop.f32.mrf.mxu0
    %v418 = vadd.f32 %v354, %v417
    %419 = vdwg.mxu0
    %v420 = vld [vmem:[%s3] sm:$0xff]
    %v421 = vld [vmem:[%s3 + $0x8] sm:$0xff]
    %v422 = vld [vmem:[%s3 + $0x10] sm:$0xff]
    %v423 = vld [vmem:[%s3 + $0x18] sm:$0xff]
    %v424 = vld [vmem:[%s3 + $0x20] sm:$0xff]
    %v425 = vld [vmem:[%s3 + $0x28] sm:$0xff]
    %v426 = vld [vmem:[%s3 + $0x30] sm:$0xff]
    %v427 = vld [vmem:[%s3 + $0x38] sm:$0xff]
    %v428 = vld [vmem:[%s3 + $0x40] sm:$0xff]
    %v429 = vld [vmem:[%s3 + $0x48] sm:$0xff]
    %v430 = vld [vmem:[%s3 + $0x50] sm:$0xff]
    %v431 = vld [vmem:[%s3 + $0x58] sm:$0xff]
    %v432 = vld [vmem:[%s3 + $0x60] sm:$0xff]
    %v433 = vld [vmem:[%s3 + $0x68] sm:$0xff]
    %v434 = vld [vmem:[%s3 + $0x70] sm:$0xff]
    %v435 = vld [vmem:[%s3 + $0x78] sm:$0xff]
    %v436 = vld [vmem:[%s4] sm:$0xff]
    %vm437 = vcmask 64512
    %v439 = vsel %vm437, %v193, 0
    %v442 = vsel %vm437, %v196, 0
    %v445 = vsel %vm437, %v199, 0
    %v448 = vsel %vm437, %v202, 0
    %v451 = vsel %vm437, %v205, 0
    %v454 = vsel %vm437, %v208, 0
    %v457 = vsel %vm437, %v211, 0
    %v460 = vsel %vm437, %v214, 0
    %v463 = vsel %vm437, %v217, 0
    %v466 = vsel %vm437, %v220, 0
    %v469 = vsel %vm437, %v223, 0
    %v472 = vsel %vm437, %v226, 0
    %v475 = vsel %vm437, %v229, 0
    %v478 = vsel %vm437, %v232, 0
    %v481 = vsel %vm437, %v235, 0
    %v484 = vsel %vm437, %v238, 0
    %v487 = vsel %vm437, %v307, 0
    %v490 = vsel %vm437, %v310, 0
    %v493 = vsel %vm437, %v313, 0
    %v496 = vsel %vm437, %v316, 0
    %v499 = vsel %vm437, %v319, 0
    %v502 = vsel %vm437, %v322, 0
    %v505 = vsel %vm437, %v325, 0
    %v508 = vsel %vm437, %v328, 0
    %v511 = vsel %vm437, %v331, 0
    %v514 = vsel %vm437, %v334, 0
    %v517 = vsel %vm437, %v337, 0
    %v520 = vsel %vm437, %v340, 0
    %v523 = vsel %vm437, %v343, 0
    %v526 = vsel %vm437, %v346, 0
    %v529 = vsel %vm437, %v349, 0
    %v532 = vsel %vm437, %v352, 0
    %534 = vmatpush.xpose.msra.mxu0 %v532
    %535 = vmatpush.xpose.msra.mxu0 %v529
    %536 = vmatpush.xpose.msra.mxu0 %v526
    %537 = vmatpush.xpose.msra.mxu0 %v523
    %538 = vmatpush.xpose.msra.mxu0 %v520
    %539 = vmatpush.xpose.msra.mxu0 %v517
    %540 = vmatpush.xpose.msra.mxu0 %v514
    %541 = vmatpush.xpose.msra.mxu0 %v511
    %542 = vmatpush.xpose.msra.mxu0 %v508
    %543 = vmatpush.xpose.msra.mxu0 %v505
    %544 = vmatpush.xpose.msra.mxu0 %v502
    %545 = vmatpush.xpose.msra.mxu0 %v499
    %546 = vmatpush.xpose.msra.mxu0 %v496
    %547 = vmatpush.xpose.msra.mxu0 %v493
    %548 = vmatpush.xpose.msra.mxu0 %v490
    %549 = vmatpush.xpose.msra.mxu0 %v487
    %550 = vmatmul.f32.gmra.mxu0 %v439
    %v551 = vpop.f32.mrf.mxu0
    %v552 = vadd.f32 %v420, %v551
    %553 = vmatmul.f32.gmra.mxu0 %v442
    %v554 = vpop.f32.mrf.mxu0
    %v555 = vadd.f32 %v421, %v554
    %556 = vmatmul.f32.gmra.mxu0 %v445
    %v557 = vpop.f32.mrf.mxu0
    %v558 = vadd.f32 %v422, %v557
    %559 = vmatmul.f32.gmra.mxu0 %v448
    %v560 = vpop.f32.mrf.mxu0
    %v561 = vadd.f32 %v423, %v560
    %562 = vmatmul.f32.gmra.mxu0 %v451
    %v563 = vpop.f32.mrf.mxu0
    %v564 = vadd.f32 %v424, %v563
    %565 = vmatmul.f32.gmra.mxu0 %v454
    %v566 = vpop.f32.mrf.mxu0
    %v567 = vadd.f32 %v425, %v566
    %568 = vmatmul.f32.gmra.mxu0 %v457
    %v569 = vpop.f32.mrf.mxu0
    %v570 = vadd.f32 %v426, %v569
    %571 = vmatmul.f32.gmra.mxu0 %v460
    %v572 = vpop.f32.mrf.mxu0
    %v573 = vadd.f32 %v427, %v572
    %574 = vmatmul.f32.gmra.mxu0 %v463
    %v575 = vpop.f32.mrf.mxu0
    %v576 = vadd.f32 %v428, %v575
    %577 = vmatmul.f32.gmra.mxu0 %v466
    %v578 = vpop.f32.mrf.mxu0
    %v579 = vadd.f32 %v429, %v578
    %580 = vmatmul.f32.gmra.mxu0 %v469
    %v581 = vpop.f32.mrf.mxu0
    %v582 = vadd.f32 %v430, %v581
    %583 = vmatmul.f32.gmra.mxu0 %v472
    %v584 = vpop.f32.mrf.mxu0
    %v585 = vadd.f32 %v431, %v584
    %586 = vmatmul.f32.gmra.mxu0 %v475
    %v587 = vpop.f32.mrf.mxu0
    %v588 = vadd.f32 %v432, %v587
    %589 = vmatmul.f32.gmra.mxu0 %v478
    %v590 = vpop.f32.mrf.mxu0
    %v591 = vadd.f32 %v433, %v590
    %592 = vmatmul.f32.gmra.mxu0 %v481
    %v593 = vpop.f32.mrf.mxu0
    %v594 = vadd.f32 %v434, %v593
    %595 = vmatmul.f32.gmra.mxu0 %v484
    %v596 = vpop.f32.mrf.mxu0
    %v597 = vadd.f32 %v435, %v596
    %598 = vdwg.mxu0
    %599 = vmax.xlane.f32.xlu0 %v552
    %v600 = vpop.xlane.xlu0 %599
    %601 = vmax.xlane.f32.xlu0 %v555
    %v602 = vpop.xlane.xlu0 %601
    %603 = vmax.xlane.f32.xlu0 %v558
    %v604 = vpop.xlane.xlu0 %603
    %605 = vmax.xlane.f32.xlu0 %v561
    %v606 = vpop.xlane.xlu0 %605
    %607 = vmax.xlane.f32.xlu0 %v564
    %v608 = vpop.xlane.xlu0 %607
    %609 = vmax.xlane.f32.xlu0 %v567
    %v610 = vpop.xlane.xlu0 %609
    %611 = vmax.xlane.f32.xlu0 %v570
    %v612 = vpop.xlane.xlu0 %611
    %613 = vmax.xlane.f32.xlu0 %v573
    %v614 = vpop.xlane.xlu0 %613
    %615 = vmax.xlane.f32.xlu0 %v576
    %v616 = vpop.xlane.xlu0 %615
    %617 = vmax.xlane.f32.xlu0 %v579
    %v618 = vpop.xlane.xlu0 %617
    %619 = vmax.xlane.f32.xlu0 %v582
    %v620 = vpop.xlane.xlu0 %619
    %621 = vmax.xlane.f32.xlu0 %v585
    %v622 = vpop.xlane.xlu0 %621
    %623 = vmax.xlane.f32.xlu0 %v588
    %v624 = vpop.xlane.xlu0 %623
    %625 = vmax.xlane.f32.xlu0 %v591
    %v626 = vpop.xlane.xlu0 %625
    %627 = vmax.xlane.f32.xlu0 %v594
    %v628 = vpop.xlane.xlu0 %627
    %629 = vmax.xlane.f32.xlu0 %v597
    %v630 = vpop.xlane.xlu0 %629
    %v631 = vsub.f32 %v552, %v600
    %v632 = vsub.f32 %v555, %v602
    %v633 = vsub.f32 %v558, %v604
    %v634 = vsub.f32 %v561, %v606
    %v635 = vsub.f32 %v564, %v608
    %v636 = vsub.f32 %v567, %v610
    %v637 = vsub.f32 %v570, %v612
    %v638 = vsub.f32 %v573, %v614
    %v639 = vsub.f32 %v576, %v616
    %v640 = vsub.f32 %v579, %v618
    %v641 = vsub.f32 %v582, %v620
    %v642 = vsub.f32 %v585, %v622
    %v643 = vsub.f32 %v588, %v624
    %v644 = vsub.f32 %v591, %v626
    %v645 = vsub.f32 %v594, %v628
    %v646 = vsub.f32 %v597, %v630
    %v647 = vmul.f32 %v631, 1.442695
    %v648 = vpow.pop %v647
    %v649 = vmul.f32 %v632, 1.442695
    %v650 = vpow.pop %v649
    %v651 = vmul.f32 %v633, 1.442695
    %v652 = vpow.pop %v651
    %v653 = vmul.f32 %v634, 1.442695
    %v654 = vpow.pop %v653
    %v655 = vmul.f32 %v635, 1.442695
    %v656 = vpow.pop %v655
    %v657 = vmul.f32 %v636, 1.442695
    %v658 = vpow.pop %v657
    %v659 = vmul.f32 %v637, 1.442695
    %v660 = vpow.pop %v659
    %v661 = vmul.f32 %v638, 1.442695
    %v662 = vpow.pop %v661
    %v663 = vmul.f32 %v639, 1.442695
    %v664 = vpow.pop %v663
    %v665 = vmul.f32 %v640, 1.442695
    %v666 = vpow.pop %v665
    %v667 = vmul.f32 %v641, 1.442695
    %v668 = vpow.pop %v667
    %v669 = vmul.f32 %v642, 1.442695
    %v670 = vpow.pop %v669
    %v671 = vmul.f32 %v643, 1.442695
    %v672 = vpow.pop %v671
    %v673 = vmul.f32 %v644, 1.442695
    %v674 = vpow.pop %v673
    %v675 = vmul.f32 %v645, 1.442695
    %v676 = vpow.pop %v675
    %v677 = vmul.f32 %v646, 1.442695
    %v678 = vpow.pop %v677
    %679 = vadd.xlane.f32.xlu0 %v648
    %v680 = vpop.xlane.xlu0 %679
    %681 = vadd.xlane.f32.xlu0 %v650
    %v682 = vpop.xlane.xlu0 %681
    %683 = vadd.xlane.f32.xlu0 %v652
    %v684 = vpop.xlane.xlu0 %683
    %685 = vadd.xlane.f32.xlu0 %v654
    %v686 = vpop.xlane.xlu0 %685
    %687 = vadd.xlane.f32.xlu0 %v656
    %v688 = vpop.xlane.xlu0 %687
    %689 = vadd.xlane.f32.xlu0 %v658
    %v690 = vpop.xlane.xlu0 %689
    %691 = vadd.xlane.f32.xlu0 %v660
    %v692 = vpop.xlane.xlu0 %691
    %693 = vadd.xlane.f32.xlu0 %v662
    %v694 = vpop.xlane.xlu0 %693
    %695 = vadd.xlane.f32.xlu0 %v664
    %v696 = vpop.xlane.xlu0 %695
    %697 = vadd.xlane.f32.xlu0 %v666
    %v698 = vpop.xlane.xlu0 %697
    %699 = vadd.xlane.f32.xlu0 %v668
    %v700 = vpop.xlane.xlu0 %699
    %701 = vadd.xlane.f32.xlu0 %v670
    %v702 = vpop.xlane.xlu0 %701
    %703 = vadd.xlane.f32.xlu0 %v672
    %v704 = vpop.xlane.xlu0 %703
    %705 = vadd.xlane.f32.xlu0 %v674
    %v706 = vpop.xlane.xlu0 %705
    %707 = vadd.xlane.f32.xlu0 %v676
    %v708 = vpop.xlane.xlu0 %707
    %709 = vadd.xlane.f32.xlu0 %v678
    %v710 = vpop.xlane.xlu0 %709
    %v711 = vrcp.pop %v680
    %v712 = vmul.f32 %v680, %v711
    %v713 = vsub.f32 1.0, %v712
    %v714 = vmul.f32 %v711, %v713
    %v715 = vadd.f32 %v711, %v714
    %vm716 = vweird.f32 %v680
    %vm717 = vweird.f32 %v711
    %vm718 = vmor %vm716, %vm717
    %v719 = vsel %vm718, %v711, %v715
    %v720 = vand.u32 2147483647, %v680
    %vm721 = vcmp.eq.f32.partialorder %v720, 8.507059e+37
    %v722 = vand.u32 %v680, 2147483648
    %v723 = vor.u32 1.1754944e-38, %v722
    %v724 = vsel %vm721, %v723, %v719
    %v725 = vrcp.pop %v682
    %v726 = vmul.f32 %v682, %v725
    %v727 = vsub.f32 1.0, %v726
    %v728 = vmul.f32 %v725, %v727
    %v729 = vadd.f32 %v725, %v728
    %vm730 = vweird.f32 %v682
    %vm731 = vweird.f32 %v725
    %vm732 = vmor %vm730, %vm731
    %v733 = vsel %vm732, %v725, %v729
    %v734 = vand.u32 2147483647, %v682
    %vm735 = vcmp.eq.f32.partialorder %v734, 8.507059e+37
    %v736 = vand.u32 %v682, 2147483648
    %v737 = vor.u32 1.1754944e-38, %v736
    %v738 = vsel %vm735, %v737, %v733
    %v739 = vrcp.pop %v684
    %v740 = vmul.f32 %v684, %v739
    %v741 = vsub.f32 1.0, %v740
    %v742 = vmul.f32 %v739, %v741
    %v743 = vadd.f32 %v739, %v742
    %vm744 = vweird.f32 %v684
    %vm745 = vweird.f32 %v739
    %vm746 = vmor %vm744, %vm745
    %v747 = vsel %vm746, %v739, %v743
    %v748 = vand.u32 2147483647, %v684
    %vm749 = vcmp.eq.f32.partialorder %v748, 8.507059e+37
    %v750 = vand.u32 %v684, 2147483648
    %v751 = vor.u32 1.1754944e-38, %v750
    %v752 = vsel %vm749, %v751, %v747
    %v753 = vrcp.pop %v686
    %v754 = vmul.f32 %v686, %v753
    %v755 = vsub.f32 1.0, %v754
    %v756 = vmul.f32 %v753, %v755
    %v757 = vadd.f32 %v753, %v756
    %vm758 = vweird.f32 %v686
    %vm759 = vweird.f32 %v753
    %vm760 = vmor %vm758, %vm759
    %v761 = vsel %vm760, %v753, %v757
    %v762 = vand.u32 2147483647, %v686
    %vm763 = vcmp.eq.f32.partialorder %v762, 8.507059e+37
    %v764 = vand.u32 %v686, 2147483648
    %v765 = vor.u32 1.1754944e-38, %v764
    %v766 = vsel %vm763, %v765, %v761
    %v767 = vrcp.pop %v688
    %v768 = vmul.f32 %v688, %v767
    %v769 = vsub.f32 1.0, %v768
    %v770 = vmul.f32 %v767, %v769
    %v771 = vadd.f32 %v767, %v770
    %vm772 = vweird.f32 %v688
    %vm773 = vweird.f32 %v767
    %vm774 = vmor %vm772, %vm773
    %v775 = vsel %vm774, %v767, %v771
    %v776 = vand.u32 2147483647, %v688
    %vm777 = vcmp.eq.f32.partialorder %v776, 8.507059e+37
    %v778 = vand.u32 %v688, 2147483648
    %v779 = vor.u32 1.1754944e-38, %v778
    %v780 = vsel %vm777, %v779, %v775
    %v781 = vrcp.pop %v690
    %v782 = vmul.f32 %v690, %v781
    %v783 = vsub.f32 1.0, %v782
    %v784 = vmul.f32 %v781, %v783
    %v785 = vadd.f32 %v781, %v784
    %vm786 = vweird.f32 %v690
    %vm787 = vweird.f32 %v781
    %vm788 = vmor %vm786, %vm787
    %v789 = vsel %vm788, %v781, %v785
    %v790 = vand.u32 2147483647, %v690
    %vm791 = vcmp.eq.f32.partialorder %v790, 8.507059e+37
    %v792 = vand.u32 %v690, 2147483648
    %v793 = vor.u32 1.1754944e-38, %v792
    %v794 = vsel %vm791, %v793, %v789
    %v795 = vrcp.pop %v692
    %v796 = vmul.f32 %v692, %v795
    %v797 = vsub.f32 1.0, %v796
    %v798 = vmul.f32 %v795, %v797
    %v799 = vadd.f32 %v795, %v798
    %vm800 = vweird.f32 %v692
    %vm801 = vweird.f32 %v795
    %vm802 = vmor %vm800, %vm801
    %v803 = vsel %vm802, %v795, %v799
    %v804 = vand.u32 2147483647, %v692
    %vm805 = vcmp.eq.f32.partialorder %v804, 8.507059e+37
    %v806 = vand.u32 %v692, 2147483648
    %v807 = vor.u32 1.1754944e-38, %v806
    %v808 = vsel %vm805, %v807, %v803
    %v809 = vrcp.pop %v694
    %v810 = vmul.f32 %v694, %v809
    %v811 = vsub.f32 1.0, %v810
    %v812 = vmul.f32 %v809, %v811
    %v813 = vadd.f32 %v809, %v812
    %vm814 = vweird.f32 %v694
    %vm815 = vweird.f32 %v809
    %vm816 = vmor %vm814, %vm815
    %v817 = vsel %vm816, %v809, %v813
    %v818 = vand.u32 2147483647, %v694
    %vm819 = vcmp.eq.f32.partialorder %v818, 8.507059e+37
    %v820 = vand.u32 %v694, 2147483648
    %v821 = vor.u32 1.1754944e-38, %v820
    %v822 = vsel %vm819, %v821, %v817
    %v823 = vrcp.pop %v696
    %v824 = vmul.f32 %v696, %v823
    %v825 = vsub.f32 1.0, %v824
    %v826 = vmul.f32 %v823, %v825
    %v827 = vadd.f32 %v823, %v826
    %vm828 = vweird.f32 %v696
    %vm829 = vweird.f32 %v823
    %vm830 = vmor %vm828, %vm829
    %v831 = vsel %vm830, %v823, %v827
    %v832 = vand.u32 2147483647, %v696
    %vm833 = vcmp.eq.f32.partialorder %v832, 8.507059e+37
    %v834 = vand.u32 %v696, 2147483648
    %v835 = vor.u32 1.1754944e-38, %v834
    %v836 = vsel %vm833, %v835, %v831
    %v837 = vrcp.pop %v698
    %v838 = vmul.f32 %v698, %v837
    %v839 = vsub.f32 1.0, %v838
    %v840 = vmul.f32 %v837, %v839
    %v841 = vadd.f32 %v837, %v840
    %vm842 = vweird.f32 %v698
    %vm843 = vweird.f32 %v837
    %vm844 = vmor %vm842, %vm843
    %v845 = vsel %vm844, %v837, %v841
    %v846 = vand.u32 2147483647, %v698
    %vm847 = vcmp.eq.f32.partialorder %v846, 8.507059e+37
    %v848 = vand.u32 %v698, 2147483648
    %v849 = vor.u32 1.1754944e-38, %v848
    %v850 = vsel %vm847, %v849, %v845
    %v851 = vrcp.pop %v700
    %v852 = vmul.f32 %v700, %v851
    %v853 = vsub.f32 1.0, %v852
    %v854 = vmul.f32 %v851, %v853
    %v855 = vadd.f32 %v851, %v854
    %vm856 = vweird.f32 %v700
    %vm857 = vweird.f32 %v851
    %vm858 = vmor %vm856, %vm857
    %v859 = vsel %vm858, %v851, %v855
    %v860 = vand.u32 2147483647, %v700
    %vm861 = vcmp.eq.f32.partialorder %v860, 8.507059e+37
    %v862 = vand.u32 %v700, 2147483648
    %v863 = vor.u32 1.1754944e-38, %v862
    %v864 = vsel %vm861, %v863, %v859
    %v865 = vrcp.pop %v702
    %v866 = vmul.f32 %v702, %v865
    %v867 = vsub.f32 1.0, %v866
    %v868 = vmul.f32 %v865, %v867
    %v869 = vadd.f32 %v865, %v868
    %vm870 = vweird.f32 %v702
    %vm871 = vweird.f32 %v865
    %vm872 = vmor %vm870, %vm871
    %v873 = vsel %vm872, %v865, %v869
    %v874 = vand.u32 2147483647, %v702
    %vm875 = vcmp.eq.f32.partialorder %v874, 8.507059e+37
    %v876 = vand.u32 %v702, 2147483648
    %v877 = vor.u32 1.1754944e-38, %v876
    %v878 = vsel %vm875, %v877, %v873
    %v879 = vrcp.pop %v704
    %v880 = vmul.f32 %v704, %v879
    %v881 = vsub.f32 1.0, %v880
    %v882 = vmul.f32 %v879, %v881
    %v883 = vadd.f32 %v879, %v882
    %vm884 = vweird.f32 %v704
    %vm885 = vweird.f32 %v879
    %vm886 = vmor %vm884, %vm885
    %v887 = vsel %vm886, %v879, %v883
    %v888 = vand.u32 2147483647, %v704
    %vm889 = vcmp.eq.f32.partialorder %v888, 8.507059e+37
    %v890 = vand.u32 %v704, 2147483648
    %v891 = vor.u32 1.1754944e-38, %v890
    %v892 = vsel %vm889, %v891, %v887
    %v893 = vrcp.pop %v706
    %v894 = vmul.f32 %v706, %v893
    %v895 = vsub.f32 1.0, %v894
    %v896 = vmul.f32 %v893, %v895
    %v897 = vadd.f32 %v893, %v896
    %vm898 = vweird.f32 %v706
    %vm899 = vweird.f32 %v893
    %vm900 = vmor %vm898, %vm899
    %v901 = vsel %vm900, %v893, %v897
    %v902 = vand.u32 2147483647, %v706
    %vm903 = vcmp.eq.f32.partialorder %v902, 8.507059e+37
    %v904 = vand.u32 %v706, 2147483648
    %v905 = vor.u32 1.1754944e-38, %v904
    %v906 = vsel %vm903, %v905, %v901
    %v907 = vrcp.pop %v708
    %v908 = vmul.f32 %v708, %v907
    %v909 = vsub.f32 1.0, %v908
    %v910 = vmul.f32 %v907, %v909
    %v911 = vadd.f32 %v907, %v910
    %vm912 = vweird.f32 %v708
    %vm913 = vweird.f32 %v907
    %vm914 = vmor %vm912, %vm913
    %v915 = vsel %vm914, %v907, %v911
    %v916 = vand.u32 2147483647, %v708
    %vm917 = vcmp.eq.f32.partialorder %v916, 8.507059e+37
    %v918 = vand.u32 %v708, 2147483648
    %v919 = vor.u32 1.1754944e-38, %v918
    %v920 = vsel %vm917, %v919, %v915
    %v921 = vrcp.pop %v710
    %v922 = vmul.f32 %v710, %v921
    %v923 = vsub.f32 1.0, %v922
    %v924 = vmul.f32 %v921, %v923
    %v925 = vadd.f32 %v921, %v924
    %vm926 = vweird.f32 %v710
    %vm927 = vweird.f32 %v921
    %vm928 = vmor %vm926, %vm927
    %v929 = vsel %vm928, %v921, %v925
    %v930 = vand.u32 2147483647, %v710
    %vm931 = vcmp.eq.f32.partialorder %v930, 8.507059e+37
    %v932 = vand.u32 %v710, 2147483648
    %v933 = vor.u32 1.1754944e-38, %v932
    %v934 = vsel %vm931, %v933, %v929
    %v935 = vmul.f32 %v648, %v724
    %v936 = vmul.f32 %v650, %v738
    %v937 = vmul.f32 %v652, %v752
    %v938 = vmul.f32 %v654, %v766
    %v939 = vmul.f32 %v656, %v780
    %v940 = vmul.f32 %v658, %v794
    %v941 = vmul.f32 %v660, %v808
    %v942 = vmul.f32 %v662, %v822
    %v943 = vmul.f32 %v664, %v836
    %v944 = vmul.f32 %v666, %v850
    %v945 = vmul.f32 %v668, %v864
    %v946 = vmul.f32 %v670, %v878
    %v947 = vmul.f32 %v672, %v892
    %v948 = vmul.f32 %v674, %v906
    %v949 = vmul.f32 %v676, %v920
    %v950 = vmul.f32 %v678, %v934
    %951 = vmatpush.msra.mxu0 %v418
    %952 = vmatpush.msra.mxu0 %v415
    %953 = vmatpush.msra.mxu0 %v412
    %954 = vmatpush.msra.mxu0 %v409
    %955 = vmatpush.msra.mxu0 %v406
    %956 = vmatpush.msra.mxu0 %v403
    %957 = vmatpush.msra.mxu0 %v400
    %958 = vmatpush.msra.mxu0 %v397
    %959 = vmatpush.msra.mxu0 %v394
    %960 = vmatpush.msra.mxu0 %v391
    %961 = vmatpush.msra.mxu0 %v388
    %962 = vmatpush.msra.mxu0 %v385
    %963 = vmatpush.msra.mxu0 %v382
    %964 = vmatpush.msra.mxu0 %v379
    %965 = vmatpush.msra.mxu0 %v376
    %966 = vmatpush.msra.mxu0 %v373
    %967 = vmatmul.f32.gmra.mxu0 %v935
    %v968 = vpop.f32.mrf.mxu0
    %v969 = vadd.f32 0.0, %v968
    %970 = vmatmul.f32.gmra.mxu0 %v936
    %v971 = vpop.f32.mrf.mxu0
    %v972 = vadd.f32 0.0, %v971
    %973 = vmatmul.f32.gmra.mxu0 %v937
    %v974 = vpop.f32.mrf.mxu0
    %v975 = vadd.f32 0.0, %v974
    %976 = vmatmul.f32.gmra.mxu0 %v938
    %v977 = vpop.f32.mrf.mxu0
    %v978 = vadd.f32 0.0, %v977
    %979 = vmatmul.f32.gmra.mxu0 %v939
    %v980 = vpop.f32.mrf.mxu0
    %v981 = vadd.f32 0.0, %v980
    %982 = vmatmul.f32.gmra.mxu0 %v940
    %v983 = vpop.f32.mrf.mxu0
    %v984 = vadd.f32 0.0, %v983
    %985 = vmatmul.f32.gmra.mxu0 %v941
    %v986 = vpop.f32.mrf.mxu0
    %v987 = vadd.f32 0.0, %v986
    %988 = vmatmul.f32.gmra.mxu0 %v942
    %v989 = vpop.f32.mrf.mxu0
    %v990 = vadd.f32 0.0, %v989
    %991 = vmatmul.f32.gmra.mxu0 %v943
    %v992 = vpop.f32.mrf.mxu0
    %v993 = vadd.f32 0.0, %v992
    %994 = vmatmul.f32.gmra.mxu0 %v944
    %v995 = vpop.f32.mrf.mxu0
    %v996 = vadd.f32 0.0, %v995
    %997 = vmatmul.f32.gmra.mxu0 %v945
    %v998 = vpop.f32.mrf.mxu0
    %v999 = vadd.f32 0.0, %v998
    %1000 = vmatmul.f32.gmra.mxu0 %v946
    %v1001 = vpop.f32.mrf.mxu0
    %v1002 = vadd.f32 0.0, %v1001
    %1003 = vmatmul.f32.gmra.mxu0 %v947
    %v1004 = vpop.f32.mrf.mxu0
    %v1005 = vadd.f32 0.0, %v1004
    %1006 = vmatmul.f32.gmra.mxu0 %v948
    %v1007 = vpop.f32.mrf.mxu0
    %v1008 = vadd.f32 0.0, %v1007
    %1009 = vmatmul.f32.gmra.mxu0 %v949
    %v1010 = vpop.f32.mrf.mxu0
    %v1011 = vadd.f32 0.0, %v1010
    %1012 = vmatmul.f32.gmra.mxu0 %v950
    %v1013 = vpop.f32.mrf.mxu0
    %v1014 = vadd.f32 0.0, %v1013
    %1015 = vdwg.mxu0
    %1016 = vrot.lane.b32.xlu0 %v193, 120
    %v1017 = vpop.permute.xlu0 %1016
    %1018 = vrot.lane.b32.xlu0 %v196, 120
    %v1019 = vpop.permute.xlu0 %1018
    %1020 = vrot.lane.b32.xlu0 %v199, 120
    %v1021 = vpop.permute.xlu0 %1020
    %1022 = vrot.lane.b32.xlu0 %v202, 120
    %v1023 = vpop.permute.xlu0 %1022
    %1024 = vrot.lane.b32.xlu0 %v205, 120
    %v1025 = vpop.permute.xlu0 %1024
    %1026 = vrot.lane.b32.xlu0 %v208, 120
    %v1027 = vpop.permute.xlu0 %1026
    %1028 = vrot.lane.b32.xlu0 %v211, 120
    %v1029 = vpop.permute.xlu0 %1028
    %1030 = vrot.lane.b32.xlu0 %v214, 120
    %v1031 = vpop.permute.xlu0 %1030
    %1032 = vrot.lane.b32.xlu0 %v217, 120
    %v1033 = vpop.permute.xlu0 %1032
    %1034 = vrot.lane.b32.xlu0 %v220, 120
    %v1035 = vpop.permute.xlu0 %1034
    %1036 = vrot.lane.b32.xlu0 %v223, 120
    %v1037 = vpop.permute.xlu0 %1036
    %1038 = vrot.lane.b32.xlu0 %v226, 120
    %v1039 = vpop.permute.xlu0 %1038
    %1040 = vrot.lane.b32.xlu0 %v229, 120
    %v1041 = vpop.permute.xlu0 %1040
    %1042 = vrot.lane.b32.xlu0 %v232, 120
    %v1043 = vpop.permute.xlu0 %1042
    %1044 = vrot.lane.b32.xlu0 %v235, 120
    %v1045 = vpop.permute.xlu0 %1044
    %1046 = vrot.lane.b32.xlu0 %v238, 120
    %v1047 = vpop.permute.xlu0 %1046
    %1048 = vrot.lane.b32.xlu0 %v307, 120
    %v1049 = vpop.permute.xlu0 %1048
    %1050 = vrot.lane.b32.xlu0 %v310, 120
    %v1051 = vpop.permute.xlu0 %1050
    %1052 = vrot.lane.b32.xlu0 %v313, 120
    %v1053 = vpop.permute.xlu0 %1052
    %1054 = vrot.lane.b32.xlu0 %v316, 120
    %v1055 = vpop.permute.xlu0 %1054
    %1056 = vrot.lane.b32.xlu0 %v319, 120
    %v1057 = vpop.permute.xlu0 %1056
    %1058 = vrot.lane.b32.xlu0 %v322, 120
    %v1059 = vpop.permute.xlu0 %1058
    %1060 = vrot.lane.b32.xlu0 %v325, 120
    %v1061 = vpop.permute.xlu0 %1060
    %1062 = vrot.lane.b32.xlu0 %v328, 120
    %v1063 = vpop.permute.xlu0 %1062
    %1064 = vrot.lane.b32.xlu0 %v331, 120
    %v1065 = vpop.permute.xlu0 %1064
    %1066 = vrot.lane.b32.xlu0 %v334, 120
    %v1067 = vpop.permute.xlu0 %1066
    %1068 = vrot.lane.b32.xlu0 %v337, 120
    %v1069 = vpop.permute.xlu0 %1068
    %1070 = vrot.lane.b32.xlu0 %v340, 120
    %v1071 = vpop.permute.xlu0 %1070
    %1072 = vrot.lane.b32.xlu0 %v343, 120
    %v1073 = vpop.permute.xlu0 %1072
    %1074 = vrot.lane.b32.xlu0 %v346, 120
    %v1075 = vpop.permute.xlu0 %1074
    %1076 = vrot.lane.b32.xlu0 %v349, 120
    %v1077 = vpop.permute.xlu0 %1076
    %1078 = vrot.lane.b32.xlu0 %v352, 120
    %v1079 = vpop.permute.xlu0 %1078
    %v1080 = vsel %vm437, %v1017, 0
    %v1082 = vsel %vm437, %v1019, 0
    %v1084 = vsel %vm437, %v1021, 0
    %v1086 = vsel %vm437, %v1023, 0
    %v1088 = vsel %vm437, %v1025, 0
    %v1090 = vsel %vm437, %v1027, 0
    %v1092 = vsel %vm437, %v1029, 0
    %v1094 = vsel %vm437, %v1031, 0
    %v1096 = vsel %vm437, %v1033, 0
    %v1098 = vsel %vm437, %v1035, 0
    %v1100 = vsel %vm437, %v1037, 0
    %v1102 = vsel %vm437, %v1039, 0
    %v1104 = vsel %vm437, %v1041, 0
    %v1106 = vsel %vm437, %v1043, 0
    %v1108 = vsel %vm437, %v1045, 0
    %v1110 = vsel %vm437, %v1047, 0
    %v1112 = vsel %vm437, %v1049, 0
    %v1114 = vsel %vm437, %v1051, 0
    %v1116 = vsel %vm437, %v1053, 0
    %v1118 = vsel %vm437, %v1055, 0
    %v1120 = vsel %vm437, %v1057, 0
    %v1122 = vsel %vm437, %v1059, 0
    %v1124 = vsel %vm437, %v1061, 0
    %v1126 = vsel %vm437, %v1063, 0
    %v1128 = vsel %vm437, %v1065, 0
    %v1130 = vsel %vm437, %v1067, 0
    %v1132 = vsel %vm437, %v1069, 0
    %v1134 = vsel %vm437, %v1071, 0
    %v1136 = vsel %vm437, %v1073, 0
    %v1138 = vsel %vm437, %v1075, 0
    %v1140 = vsel %vm437, %v1077, 0
    %v1142 = vsel %vm437, %v1079, 0
    %1144 = vmatpush.xpose.msra.mxu0 %v1142
    %1145 = vmatpush.xpose.msra.mxu0 %v1140
    %1146 = vmatpush.xpose.msra.mxu0 %v1138
    %1147 = vmatpush.xpose.msra.mxu0 %v1136
    %1148 = vmatpush.xpose.msra.mxu0 %v1134
    %1149 = vmatpush.xpose.msra.mxu0 %v1132
    %1150 = vmatpush.xpose.msra.mxu0 %v1130
    %1151 = vmatpush.xpose.msra.mxu0 %v1128
    %1152 = vmatpush.xpose.msra.mxu0 %v1126
    %1153 = vmatpush.xpose.msra.mxu0 %v1124
    %1154 = vmatpush.xpose.msra.mxu0 %v1122
    %1155 = vmatpush.xpose.msra.mxu0 %v1120
    %1156 = vmatpush.xpose.msra.mxu0 %v1118
    %1157 = vmatpush.xpose.msra.mxu0 %v1116
    %1158 = vmatpush.xpose.msra.mxu0 %v1114
    %1159 = vmatpush.xpose.msra.mxu0 %v1112
    %1160 = vmatmul.f32.gmra.mxu0 %v1080
    %v1161 = vpop.f32.mrf.mxu0
    %v1162 = vadd.f32 %v420, %v1161
    %1163 = vmatmul.f32.gmra.mxu0 %v1082
    %v1164 = vpop.f32.mrf.mxu0
    %v1165 = vadd.f32 %v421, %v1164
    %1166 = vmatmul.f32.gmra.mxu0 %v1084
    %v1167 = vpop.f32.mrf.mxu0
    %v1168 = vadd.f32 %v422, %v1167
    %1169 = vmatmul.f32.gmra.mxu0 %v1086
    %v1170 = vpop.f32.mrf.mxu0
    %v1171 = vadd.f32 %v423, %v1170
    %1172 = vmatmul.f32.gmra.mxu0 %v1088
    %v1173 = vpop.f32.mrf.mxu0
    %v1174 = vadd.f32 %v424, %v1173
    %1175 = vmatmul.f32.gmra.mxu0 %v1090
    %v1176 = vpop.f32.mrf.mxu0
    %v1177 = vadd.f32 %v425, %v1176
    %1178 = vmatmul.f32.gmra.mxu0 %v1092
    %v1179 = vpop.f32.mrf.mxu0
    %v1180 = vadd.f32 %v426, %v1179
    %1181 = vmatmul.f32.gmra.mxu0 %v1094
    %v1182 = vpop.f32.mrf.mxu0
    %v1183 = vadd.f32 %v427, %v1182
    %1184 = vmatmul.f32.gmra.mxu0 %v1096
    %v1185 = vpop.f32.mrf.mxu0
    %v1186 = vadd.f32 %v428, %v1185
    %1187 = vmatmul.f32.gmra.mxu0 %v1098
    %v1188 = vpop.f32.mrf.mxu0
    %v1189 = vadd.f32 %v429, %v1188
    %1190 = vmatmul.f32.gmra.mxu0 %v1100
    %v1191 = vpop.f32.mrf.mxu0
    %v1192 = vadd.f32 %v430, %v1191
    %1193 = vmatmul.f32.gmra.mxu0 %v1102
    %v1194 = vpop.f32.mrf.mxu0
    %v1195 = vadd.f32 %v431, %v1194
    %1196 = vmatmul.f32.gmra.mxu0 %v1104
    %v1197 = vpop.f32.mrf.mxu0
    %v1198 = vadd.f32 %v432, %v1197
    %1199 = vmatmul.f32.gmra.mxu0 %v1106
    %v1200 = vpop.f32.mrf.mxu0
    %v1201 = vadd.f32 %v433, %v1200
    %1202 = vmatmul.f32.gmra.mxu0 %v1108
    %v1203 = vpop.f32.mrf.mxu0
    %v1204 = vadd.f32 %v434, %v1203
    %1205 = vmatmul.f32.gmra.mxu0 %v1110
    %v1206 = vpop.f32.mrf.mxu0
    %v1207 = vadd.f32 %v435, %v1206
    %1208 = vdwg.mxu0
    %1209 = vmax.xlane.f32.xlu0 %v1162
    %v1210 = vpop.xlane.xlu0 %1209
    %1211 = vmax.xlane.f32.xlu0 %v1165
    %v1212 = vpop.xlane.xlu0 %1211
    %1213 = vmax.xlane.f32.xlu0 %v1168
    %v1214 = vpop.xlane.xlu0 %1213
    %1215 = vmax.xlane.f32.xlu0 %v1171
    %v1216 = vpop.xlane.xlu0 %1215
    %1217 = vmax.xlane.f32.xlu0 %v1174
    %v1218 = vpop.xlane.xlu0 %1217
    %1219 = vmax.xlane.f32.xlu0 %v1177
    %v1220 = vpop.xlane.xlu0 %1219
    %1221 = vmax.xlane.f32.xlu0 %v1180
    %v1222 = vpop.xlane.xlu0 %1221
    %1223 = vmax.xlane.f32.xlu0 %v1183
    %v1224 = vpop.xlane.xlu0 %1223
    %1225 = vmax.xlane.f32.xlu0 %v1186
    %v1226 = vpop.xlane.xlu0 %1225
    %1227 = vmax.xlane.f32.xlu0 %v1189
    %v1228 = vpop.xlane.xlu0 %1227
    %1229 = vmax.xlane.f32.xlu0 %v1192
    %v1230 = vpop.xlane.xlu0 %1229
    %1231 = vmax.xlane.f32.xlu0 %v1195
    %v1232 = vpop.xlane.xlu0 %1231
    %1233 = vmax.xlane.f32.xlu0 %v1198
    %v1234 = vpop.xlane.xlu0 %1233
    %1235 = vmax.xlane.f32.xlu0 %v1201
    %v1236 = vpop.xlane.xlu0 %1235
    %1237 = vmax.xlane.f32.xlu0 %v1204
    %v1238 = vpop.xlane.xlu0 %1237
    %1239 = vmax.xlane.f32.xlu0 %v1207
    %v1240 = vpop.xlane.xlu0 %1239
    %v1241 = vsub.f32 %v1162, %v1210
    %v1242 = vsub.f32 %v1165, %v1212
    %v1243 = vsub.f32 %v1168, %v1214
    %v1244 = vsub.f32 %v1171, %v1216
    %v1245 = vsub.f32 %v1174, %v1218
    %v1246 = vsub.f32 %v1177, %v1220
    %v1247 = vsub.f32 %v1180, %v1222
    %v1248 = vsub.f32 %v1183, %v1224
    %v1249 = vsub.f32 %v1186, %v1226
    %v1250 = vsub.f32 %v1189, %v1228
    %v1251 = vsub.f32 %v1192, %v1230
    %v1252 = vsub.f32 %v1195, %v1232
    %v1253 = vsub.f32 %v1198, %v1234
    %v1254 = vsub.f32 %v1201, %v1236
    %v1255 = vsub.f32 %v1204, %v1238
    %v1256 = vsub.f32 %v1207, %v1240
    %v1257 = vmul.f32 %v1241, 1.442695
    %v1258 = vpow.pop %v1257
    %v1259 = vmul.f32 %v1242, 1.442695
    %v1260 = vpow.pop %v1259
    %v1261 = vmul.f32 %v1243, 1.442695
    %v1262 = vpow.pop %v1261
    %v1263 = vmul.f32 %v1244, 1.442695
    %v1264 = vpow.pop %v1263
    %v1265 = vmul.f32 %v1245, 1.442695
    %v1266 = vpow.pop %v1265
    %v1267 = vmul.f32 %v1246, 1.442695
    %v1268 = vpow.pop %v1267
    %v1269 = vmul.f32 %v1247, 1.442695
    %v1270 = vpow.pop %v1269
    %v1271 = vmul.f32 %v1248, 1.442695
    %v1272 = vpow.pop %v1271
    %v1273 = vmul.f32 %v1249, 1.442695
    %v1274 = vpow.pop %v1273
    %v1275 = vmul.f32 %v1250, 1.442695
    %v1276 = vpow.pop %v1275
    %v1277 = vmul.f32 %v1251, 1.442695
    %v1278 = vpow.pop %v1277
    %v1279 = vmul.f32 %v1252, 1.442695
    %v1280 = vpow.pop %v1279
    %v1281 = vmul.f32 %v1253, 1.442695
    %v1282 = vpow.pop %v1281
    %v1283 = vmul.f32 %v1254, 1.442695
    %v1284 = vpow.pop %v1283
    %v1285 = vmul.f32 %v1255, 1.442695
    %v1286 = vpow.pop %v1285
    %v1287 = vmul.f32 %v1256, 1.442695
    %v1288 = vpow.pop %v1287
    %1289 = vadd.xlane.f32.xlu0 %v1258
    %v1290 = vpop.xlane.xlu0 %1289
    %1291 = vadd.xlane.f32.xlu0 %v1260
    %v1292 = vpop.xlane.xlu0 %1291
    %1293 = vadd.xlane.f32.xlu0 %v1262
    %v1294 = vpop.xlane.xlu0 %1293
    %1295 = vadd.xlane.f32.xlu0 %v1264
    %v1296 = vpop.xlane.xlu0 %1295
    %1297 = vadd.xlane.f32.xlu0 %v1266
    %v1298 = vpop.xlane.xlu0 %1297
    %1299 = vadd.xlane.f32.xlu0 %v1268
    %v1300 = vpop.xlane.xlu0 %1299
    %1301 = vadd.xlane.f32.xlu0 %v1270
    %v1302 = vpop.xlane.xlu0 %1301
    %1303 = vadd.xlane.f32.xlu0 %v1272
    %v1304 = vpop.xlane.xlu0 %1303
    %1305 = vadd.xlane.f32.xlu0 %v1274
    %v1306 = vpop.xlane.xlu0 %1305
    %1307 = vadd.xlane.f32.xlu0 %v1276
    %v1308 = vpop.xlane.xlu0 %1307
    %1309 = vadd.xlane.f32.xlu0 %v1278
    %v1310 = vpop.xlane.xlu0 %1309
    %1311 = vadd.xlane.f32.xlu0 %v1280
    %v1312 = vpop.xlane.xlu0 %1311
    %1313 = vadd.xlane.f32.xlu0 %v1282
    %v1314 = vpop.xlane.xlu0 %1313
    %1315 = vadd.xlane.f32.xlu0 %v1284
    %v1316 = vpop.xlane.xlu0 %1315
    %1317 = vadd.xlane.f32.xlu0 %v1286
    %v1318 = vpop.xlane.xlu0 %1317
    %1319 = vadd.xlane.f32.xlu0 %v1288
    %v1320 = vpop.xlane.xlu0 %1319
    %v1321 = vrcp.pop %v1290
    %v1322 = vmul.f32 %v1290, %v1321
    %v1323 = vsub.f32 1.0, %v1322
    %v1324 = vmul.f32 %v1321, %v1323
    %v1325 = vadd.f32 %v1321, %v1324
    %vm1326 = vweird.f32 %v1290
    %vm1327 = vweird.f32 %v1321
    %vm1328 = vmor %vm1326, %vm1327
    %v1329 = vsel %vm1328, %v1321, %v1325
    %v1330 = vand.u32 2147483647, %v1290
    %vm1331 = vcmp.eq.f32.partialorder %v1330, 8.507059e+37
    %v1332 = vand.u32 %v1290, 2147483648
    %v1333 = vor.u32 1.1754944e-38, %v1332
    %v1334 = vsel %vm1331, %v1333, %v1329
    %v1335 = vrcp.pop %v1292
    %v1336 = vmul.f32 %v1292, %v1335
    %v1337 = vsub.f32 1.0, %v1336
    %v1338 = vmul.f32 %v1335, %v1337
    %v1339 = vadd.f32 %v1335, %v1338
    %vm1340 = vweird.f32 %v1292
    %vm1341 = vweird.f32 %v1335
    %vm1342 = vmor %vm1340, %vm1341
    %v1343 = vsel %vm1342, %v1335, %v1339
    %v1344 = vand.u32 2147483647, %v1292
    %vm1345 = vcmp.eq.f32.partialorder %v1344, 8.507059e+37
    %v1346 = vand.u32 %v1292, 2147483648
    %v1347 = vor.u32 1.1754944e-38, %v1346
    %v1348 = vsel %vm1345, %v1347, %v1343
    %v1349 = vrcp.pop %v1294
    %v1350 = vmul.f32 %v1294, %v1349
    %v1351 = vsub.f32 1.0, %v1350
    %v1352 = vmul.f32 %v1349, %v1351
    %v1353 = vadd.f32 %v1349, %v1352
    %vm1354 = vweird.f32 %v1294
    %vm1355 = vweird.f32 %v1349
    %vm1356 = vmor %vm1354, %vm1355
    %v1357 = vsel %vm1356, %v1349, %v1353
    %v1358 = vand.u32 2147483647, %v1294
    %vm1359 = vcmp.eq.f32.partialorder %v1358, 8.507059e+37
    %v1360 = vand.u32 %v1294, 2147483648
    %v1361 = vor.u32 1.1754944e-38, %v1360
    %v1362 = vsel %vm1359, %v1361, %v1357
    %v1363 = vrcp.pop %v1296
    %v1364 = vmul.f32 %v1296, %v1363
    %v1365 = vsub.f32 1.0, %v1364
    %v1366 = vmul.f32 %v1363, %v1365
    %v1367 = vadd.f32 %v1363, %v1366
    %vm1368 = vweird.f32 %v1296
    %vm1369 = vweird.f32 %v1363
    %vm1370 = vmor %vm1368, %vm1369
    %v1371 = vsel %vm1370, %v1363, %v1367
    %v1372 = vand.u32 2147483647, %v1296
    %vm1373 = vcmp.eq.f32.partialorder %v1372, 8.507059e+37
    %v1374 = vand.u32 %v1296, 2147483648
    %v1375 = vor.u32 1.1754944e-38, %v1374
    %v1376 = vsel %vm1373, %v1375, %v1371
    %v1377 = vrcp.pop %v1298
    %v1378 = vmul.f32 %v1298, %v1377
    %v1379 = vsub.f32 1.0, %v1378
    %v1380 = vmul.f32 %v1377, %v1379
    %v1381 = vadd.f32 %v1377, %v1380
    %vm1382 = vweird.f32 %v1298
    %vm1383 = vweird.f32 %v1377
    %vm1384 = vmor %vm1382, %vm1383
    %v1385 = vsel %vm1384, %v1377, %v1381
    %v1386 = vand.u32 2147483647, %v1298
    %vm1387 = vcmp.eq.f32.partialorder %v1386, 8.507059e+37
    %v1388 = vand.u32 %v1298, 2147483648
    %v1389 = vor.u32 1.1754944e-38, %v1388
    %v1390 = vsel %vm1387, %v1389, %v1385
    %v1391 = vrcp.pop %v1300
    %v1392 = vmul.f32 %v1300, %v1391
    %v1393 = vsub.f32 1.0, %v1392
    %v1394 = vmul.f32 %v1391, %v1393
    %v1395 = vadd.f32 %v1391, %v1394
    %vm1396 = vweird.f32 %v1300
    %vm1397 = vweird.f32 %v1391
    %vm1398 = vmor %vm1396, %vm1397
    %v1399 = vsel %vm1398, %v1391, %v1395
    %v1400 = vand.u32 2147483647, %v1300
    %vm1401 = vcmp.eq.f32.partialorder %v1400, 8.507059e+37
    %v1402 = vand.u32 %v1300, 2147483648
    %v1403 = vor.u32 1.1754944e-38, %v1402
    %v1404 = vsel %vm1401, %v1403, %v1399
    %v1405 = vrcp.pop %v1302
    %v1406 = vmul.f32 %v1302, %v1405
    %v1407 = vsub.f32 1.0, %v1406
    %v1408 = vmul.f32 %v1405, %v1407
    %v1409 = vadd.f32 %v1405, %v1408
    %vm1410 = vweird.f32 %v1302
    %vm1411 = vweird.f32 %v1405
    %vm1412 = vmor %vm1410, %vm1411
    %v1413 = vsel %vm1412, %v1405, %v1409
    %v1414 = vand.u32 2147483647, %v1302
    %vm1415 = vcmp.eq.f32.partialorder %v1414, 8.507059e+37
    %v1416 = vand.u32 %v1302, 2147483648
    %v1417 = vor.u32 1.1754944e-38, %v1416
    %v1418 = vsel %vm1415, %v1417, %v1413
    %v1419 = vrcp.pop %v1304
    %v1420 = vmul.f32 %v1304, %v1419
    %v1421 = vsub.f32 1.0, %v1420
    %v1422 = vmul.f32 %v1419, %v1421
    %v1423 = vadd.f32 %v1419, %v1422
    %vm1424 = vweird.f32 %v1304
    %vm1425 = vweird.f32 %v1419
    %vm1426 = vmor %vm1424, %vm1425
    %v1427 = vsel %vm1426, %v1419, %v1423
    %v1428 = vand.u32 2147483647, %v1304
    %vm1429 = vcmp.eq.f32.partialorder %v1428, 8.507059e+37
    %v1430 = vand.u32 %v1304, 2147483648
    %v1431 = vor.u32 1.1754944e-38, %v1430
    %v1432 = vsel %vm1429, %v1431, %v1427
    %v1433 = vrcp.pop %v1306
    %v1434 = vmul.f32 %v1306, %v1433
    %v1435 = vsub.f32 1.0, %v1434
    %v1436 = vmul.f32 %v1433, %v1435
    %v1437 = vadd.f32 %v1433, %v1436
    %vm1438 = vweird.f32 %v1306
    %vm1439 = vweird.f32 %v1433
    %vm1440 = vmor %vm1438, %vm1439
    %v1441 = vsel %vm1440, %v1433, %v1437
    %v1442 = vand.u32 2147483647, %v1306
    %vm1443 = vcmp.eq.f32.partialorder %v1442, 8.507059e+37
    %v1444 = vand.u32 %v1306, 2147483648
    %v1445 = vor.u32 1.1754944e-38, %v1444
    %v1446 = vsel %vm1443, %v1445, %v1441
    %v1447 = vrcp.pop %v1308
    %v1448 = vmul.f32 %v1308, %v1447
    %v1449 = vsub.f32 1.0, %v1448
    %v1450 = vmul.f32 %v1447, %v1449
    %v1451 = vadd.f32 %v1447, %v1450
    %vm1452 = vweird.f32 %v1308
    %vm1453 = vweird.f32 %v1447
    %vm1454 = vmor %vm1452, %vm1453
    %v1455 = vsel %vm1454, %v1447, %v1451
    %v1456 = vand.u32 2147483647, %v1308
    %vm1457 = vcmp.eq.f32.partialorder %v1456, 8.507059e+37
    %v1458 = vand.u32 %v1308, 2147483648
    %v1459 = vor.u32 1.1754944e-38, %v1458
    %v1460 = vsel %vm1457, %v1459, %v1455
    %v1461 = vrcp.pop %v1310
    %v1462 = vmul.f32 %v1310, %v1461
    %v1463 = vsub.f32 1.0, %v1462
    %v1464 = vmul.f32 %v1461, %v1463
    %v1465 = vadd.f32 %v1461, %v1464
    %vm1466 = vweird.f32 %v1310
    %vm1467 = vweird.f32 %v1461
    %vm1468 = vmor %vm1466, %vm1467
    %v1469 = vsel %vm1468, %v1461, %v1465
    %v1470 = vand.u32 2147483647, %v1310
    %vm1471 = vcmp.eq.f32.partialorder %v1470, 8.507059e+37
    %v1472 = vand.u32 %v1310, 2147483648
    %v1473 = vor.u32 1.1754944e-38, %v1472
    %v1474 = vsel %vm1471, %v1473, %v1469
    %v1475 = vrcp.pop %v1312
    %v1476 = vmul.f32 %v1312, %v1475
    %v1477 = vsub.f32 1.0, %v1476
    %v1478 = vmul.f32 %v1475, %v1477
    %v1479 = vadd.f32 %v1475, %v1478
    %vm1480 = vweird.f32 %v1312
    %vm1481 = vweird.f32 %v1475
    %vm1482 = vmor %vm1480, %vm1481
    %v1483 = vsel %vm1482, %v1475, %v1479
    %v1484 = vand.u32 2147483647, %v1312
    %vm1485 = vcmp.eq.f32.partialorder %v1484, 8.507059e+37
    %v1486 = vand.u32 %v1312, 2147483648
    %v1487 = vor.u32 1.1754944e-38, %v1486
    %v1488 = vsel %vm1485, %v1487, %v1483
    %v1489 = vrcp.pop %v1314
    %v1490 = vmul.f32 %v1314, %v1489
    %v1491 = vsub.f32 1.0, %v1490
    %v1492 = vmul.f32 %v1489, %v1491
    %v1493 = vadd.f32 %v1489, %v1492
    %vm1494 = vweird.f32 %v1314
    %vm1495 = vweird.f32 %v1489
    %vm1496 = vmor %vm1494, %vm1495
    %v1497 = vsel %vm1496, %v1489, %v1493
    %v1498 = vand.u32 2147483647, %v1314
    %vm1499 = vcmp.eq.f32.partialorder %v1498, 8.507059e+37
    %v1500 = vand.u32 %v1314, 2147483648
    %v1501 = vor.u32 1.1754944e-38, %v1500
    %v1502 = vsel %vm1499, %v1501, %v1497
    %v1503 = vrcp.pop %v1316
    %v1504 = vmul.f32 %v1316, %v1503
    %v1505 = vsub.f32 1.0, %v1504
    %v1506 = vmul.f32 %v1503, %v1505
    %v1507 = vadd.f32 %v1503, %v1506
    %vm1508 = vweird.f32 %v1316
    %vm1509 = vweird.f32 %v1503
    %vm1510 = vmor %vm1508, %vm1509
    %v1511 = vsel %vm1510, %v1503, %v1507
    %v1512 = vand.u32 2147483647, %v1316
    %vm1513 = vcmp.eq.f32.partialorder %v1512, 8.507059e+37
    %v1514 = vand.u32 %v1316, 2147483648
    %v1515 = vor.u32 1.1754944e-38, %v1514
    %v1516 = vsel %vm1513, %v1515, %v1511
    %v1517 = vrcp.pop %v1318
    %v1518 = vmul.f32 %v1318, %v1517
    %v1519 = vsub.f32 1.0, %v1518
    %v1520 = vmul.f32 %v1517, %v1519
    %v1521 = vadd.f32 %v1517, %v1520
    %vm1522 = vweird.f32 %v1318
    %vm1523 = vweird.f32 %v1517
    %vm1524 = vmor %vm1522, %vm1523
    %v1525 = vsel %vm1524, %v1517, %v1521
    %v1526 = vand.u32 2147483647, %v1318
    %vm1527 = vcmp.eq.f32.partialorder %v1526, 8.507059e+37
    %v1528 = vand.u32 %v1318, 2147483648
    %v1529 = vor.u32 1.1754944e-38, %v1528
    %v1530 = vsel %vm1527, %v1529, %v1525
    %v1531 = vrcp.pop %v1320
    %v1532 = vmul.f32 %v1320, %v1531
    %v1533 = vsub.f32 1.0, %v1532
    %v1534 = vmul.f32 %v1531, %v1533
    %v1535 = vadd.f32 %v1531, %v1534
    %vm1536 = vweird.f32 %v1320
    %vm1537 = vweird.f32 %v1531
    %vm1538 = vmor %vm1536, %vm1537
    %v1539 = vsel %vm1538, %v1531, %v1535
    %v1540 = vand.u32 2147483647, %v1320
    %vm1541 = vcmp.eq.f32.partialorder %v1540, 8.507059e+37
    %v1542 = vand.u32 %v1320, 2147483648
    %v1543 = vor.u32 1.1754944e-38, %v1542
    %v1544 = vsel %vm1541, %v1543, %v1539
    %v1545 = vmul.f32 %v1258, %v1334
    %v1546 = vmul.f32 %v1260, %v1348
    %v1547 = vmul.f32 %v1262, %v1362
    %v1548 = vmul.f32 %v1264, %v1376
    %v1549 = vmul.f32 %v1266, %v1390
    %v1550 = vmul.f32 %v1268, %v1404
    %v1551 = vmul.f32 %v1270, %v1418
    %v1552 = vmul.f32 %v1272, %v1432
    %v1553 = vmul.f32 %v1274, %v1446
    %v1554 = vmul.f32 %v1276, %v1460
    %v1555 = vmul.f32 %v1278, %v1474
    %v1556 = vmul.f32 %v1280, %v1488
    %v1557 = vmul.f32 %v1282, %v1502
    %v1558 = vmul.f32 %v1284, %v1516
    %v1559 = vmul.f32 %v1286, %v1530
    %v1560 = vmul.f32 %v1288, %v1544
    %1561 = vmatpush.msra.mxu0 %v1560
    %1562 = vmatpush.msra.mxu0 %v1559
    %1563 = vmatpush.msra.mxu0 %v1558
    %1564 = vmatpush.msra.mxu0 %v1557
    %1565 = vmatpush.msra.mxu0 %v1556
    %1566 = vmatpush.msra.mxu0 %v1555
    %1567 = vmatpush.msra.mxu0 %v1554
    %1568 = vmatpush.msra.mxu0 %v1553
    %1569 = vmatpush.msra.mxu0 %v1552
    %1570 = vmatpush.msra.mxu0 %v1551
    %1571 = vmatpush.msra.mxu0 %v1550
    %1572 = vmatpush.msra.mxu0 %v1549
    %1573 = vmatpush.msra.mxu0 %v1548
    %1574 = vmatpush.msra.mxu0 %v1547
    %1575 = vmatpush.msra.mxu0 %v1546
    %1576 = vmatpush.msra.mxu0 %v1545
    %1577 = vmatmul.f32.gmra.mxu0 %v436
    %v1578 = vpop.f32.mrf.mxu0
    %v1579 = vadd.f32 0.0, %v1578
    %1580 = vdwg.mxu0
    %1581 = vmatpush.msra.mxu0 %v950
    %1582 = vmatpush.msra.mxu0 %v949
    %1583 = vmatpush.msra.mxu0 %v948
    %1584 = vmatpush.msra.mxu0 %v947
    %1585 = vmatpush.msra.mxu0 %v946
    %1586 = vmatpush.msra.mxu0 %v945
    %1587 = vmatpush.msra.mxu0 %v944
    %1588 = vmatpush.msra.mxu0 %v943
    %1589 = vmatpush.msra.mxu0 %v942
    %1590 = vmatpush.msra.mxu0 %v941
    %1591 = vmatpush.msra.mxu0 %v940
    %1592 = vmatpush.msra.mxu0 %v939
    %1593 = vmatpush.msra.mxu0 %v938
    %1594 = vmatpush.msra.mxu0 %v937
    %1595 = vmatpush.msra.mxu0 %v936
    %1596 = vmatpush.msra.mxu0 %v935
    %1597 = vmatmul.f32.gmra.mxu0 %v436
    %v1598 = vpop.f32.mrf.mxu0
    %v1599 = vadd.f32 %v1579, %v1598
    %1600 = vdwg.mxu0
    %1617 = vrot.lane.b32.xlu0 %v373, 120
    %v1618 = vpop.permute.xlu0 %1617
    %1619 = vrot.lane.b32.xlu0 %v376, 120
    %v1620 = vpop.permute.xlu0 %1619
    %1621 = vrot.lane.b32.xlu0 %v379, 120
    %v1622 = vpop.permute.xlu0 %1621
    %1623 = vrot.lane.b32.xlu0 %v382, 120
    %v1624 = vpop.permute.xlu0 %1623
    %1625 = vrot.lane.b32.xlu0 %v385, 120
    %v1626 = vpop.permute.xlu0 %1625
    %1627 = vrot.lane.b32.xlu0 %v388, 120
    %v1628 = vpop.permute.xlu0 %1627
    %1629 = vrot.lane.b32.xlu0 %v391, 120
    %v1630 = vpop.permute.xlu0 %1629
    %1631 = vrot.lane.b32.xlu0 %v394, 120
    %v1632 = vpop.permute.xlu0 %1631
    %1633 = vrot.lane.b32.xlu0 %v397, 120
    %v1634 = vpop.permute.xlu0 %1633
    %1635 = vrot.lane.b32.xlu0 %v400, 120
    %v1636 = vpop.permute.xlu0 %1635
    %1637 = vrot.lane.b32.xlu0 %v403, 120
    %v1638 = vpop.permute.xlu0 %1637
    %1639 = vrot.lane.b32.xlu0 %v406, 120
    %v1640 = vpop.permute.xlu0 %1639
    %1641 = vrot.lane.b32.xlu0 %v409, 120
    %v1642 = vpop.permute.xlu0 %1641
    %1643 = vrot.lane.b32.xlu0 %v412, 120
    %v1644 = vpop.permute.xlu0 %1643
    %1645 = vrot.lane.b32.xlu0 %v415, 120
    %v1646 = vpop.permute.xlu0 %1645
    %1647 = vrot.lane.b32.xlu0 %v418, 120
    %v1648 = vpop.permute.xlu0 %1647
    %1665 = vmatpush.msra.mxu0 %v1648
    %1666 = vmatpush.msra.mxu0 %v1646
    %1667 = vmatpush.msra.mxu0 %v1644
    %1668 = vmatpush.msra.mxu0 %v1642
    %1669 = vmatpush.msra.mxu0 %v1640
    %1670 = vmatpush.msra.mxu0 %v1638
    %1671 = vmatpush.msra.mxu0 %v1636
    %1672 = vmatpush.msra.mxu0 %v1634
    %1673 = vmatpush.msra.mxu0 %v1632
    %1674 = vmatpush.msra.mxu0 %v1630
    %1675 = vmatpush.msra.mxu0 %v1628
    %1676 = vmatpush.msra.mxu0 %v1626
    %1677 = vmatpush.msra.mxu0 %v1624
    %1678 = vmatpush.msra.mxu0 %v1622
    %1679 = vmatpush.msra.mxu0 %v1620
    %1680 = vmatpush.msra.mxu0 %v1618
    %1681 = vmatmul.f32.gmra.mxu0 %v1545
    %v1682 = vpop.f32.mrf.mxu0
    %v1683 = vadd.f32 0.0, %v1682
    %1684 = vmatmul.f32.gmra.mxu0 %v1546
    %v1685 = vpop.f32.mrf.mxu0
    %v1686 = vadd.f32 0.0, %v1685
    %1687 = vmatmul.f32.gmra.mxu0 %v1547
    %v1688 = vpop.f32.mrf.mxu0
    %v1689 = vadd.f32 0.0, %v1688
    %1690 = vmatmul.f32.gmra.mxu0 %v1548
    %v1691 = vpop.f32.mrf.mxu0
    %v1692 = vadd.f32 0.0, %v1691
    %1693 = vmatmul.f32.gmra.mxu0 %v1549
    %v1694 = vpop.f32.mrf.mxu0
    %v1695 = vadd.f32 0.0, %v1694
    %1696 = vmatmul.f32.gmra.mxu0 %v1550
    %v1697 = vpop.f32.mrf.mxu0
    %v1698 = vadd.f32 0.0, %v1697
    %1699 = vmatmul.f32.gmra.mxu0 %v1551
    %v1700 = vpop.f32.mrf.mxu0
    %v1701 = vadd.f32 0.0, %v1700
    %1702 = vmatmul.f32.gmra.mxu0 %v1552
    %v1703 = vpop.f32.mrf.mxu0
    %v1704 = vadd.f32 0.0, %v1703
    %1705 = vmatmul.f32.gmra.mxu0 %v1553
    %v1706 = vpop.f32.mrf.mxu0
    %v1707 = vadd.f32 0.0, %v1706
    %1708 = vmatmul.f32.gmra.mxu0 %v1554
    %v1709 = vpop.f32.mrf.mxu0
    %v1710 = vadd.f32 0.0, %v1709
    %1711 = vmatmul.f32.gmra.mxu0 %v1555
    %v1712 = vpop.f32.mrf.mxu0
    %v1713 = vadd.f32 0.0, %v1712
    %1714 = vmatmul.f32.gmra.mxu0 %v1556
    %v1715 = vpop.f32.mrf.mxu0
    %v1716 = vadd.f32 0.0, %v1715
    %1717 = vmatmul.f32.gmra.mxu0 %v1557
    %v1718 = vpop.f32.mrf.mxu0
    %v1719 = vadd.f32 0.0, %v1718
    %1720 = vmatmul.f32.gmra.mxu0 %v1558
    %v1721 = vpop.f32.mrf.mxu0
    %v1722 = vadd.f32 0.0, %v1721
    %1723 = vmatmul.f32.gmra.mxu0 %v1559
    %v1724 = vpop.f32.mrf.mxu0
    %v1725 = vadd.f32 0.0, %v1724
    %1726 = vmatmul.f32.gmra.mxu0 %v1560
    %v1727 = vpop.f32.mrf.mxu0
    %v1728 = vadd.f32 0.0, %v1727
    %1729 = vdwg.mxu0
    %v1731 = vsel %vm437, %v1683, 0
    %v1734 = vsel %vm437, %v1686, 0
    %v1737 = vsel %vm437, %v1689, 0
    %v1740 = vsel %vm437, %v1692, 0
    %v1743 = vsel %vm437, %v1695, 0
    %v1746 = vsel %vm437, %v1698, 0
    %v1749 = vsel %vm437, %v1701, 0
    %v1752 = vsel %vm437, %v1704, 0
    %v1755 = vsel %vm437, %v1707, 0
    %v1758 = vsel %vm437, %v1710, 0
    %v1761 = vsel %vm437, %v1713, 0
    %v1764 = vsel %vm437, %v1716, 0
    %v1767 = vsel %vm437, %v1719, 0
    %v1770 = vsel %vm437, %v1722, 0
    %v1773 = vsel %vm437, %v1725, 0
    %v1776 = vsel %vm437, %v1728, 0
    %1778 = vmatpush.msra.mxu0 0.0
    %1779 = vmatpush.msra.mxu0 0.0
    %1780 = vmatpush.msra.mxu0 0.0
    %1781 = vmatpush.msra.mxu0 0.0
    %1782 = vmatpush.msra.mxu0 0.0
    %1783 = vmatpush.msra.mxu0 0.0
    %1784 = vmatpush.msra.mxu0 0.0
    %1785 = vmatpush.msra.mxu0 0.0
    %1786 = vmatpush.msra.mxu0 0.0
    %1787 = vmatpush.msra.mxu0 0.0
    %1788 = vmatpush.msra.mxu0 0.0
    %1789 = vmatpush.msra.mxu0 0.0
    %1790 = vmatpush.msra.mxu0 0.0
    %1791 = vmatpush.msra.mxu0 0.0
    %1792 = vmatpush.msra.mxu0 0.0
    %1793 = vmatpush.msra.mxu0 %v110
    %1794 = vmatmul.f32.gmra.mxu0 %v1731
    %v1795 = vpop.f32.mrf.mxu0
    %v1796 = vadd.f32 0.0, %v1795
    %1797 = vmatmul.f32.gmra.mxu0 %v1734
    %v1798 = vpop.f32.mrf.mxu0
    %v1799 = vadd.f32 0.0, %v1798
    %1800 = vmatmul.f32.gmra.mxu0 %v1737
    %v1801 = vpop.f32.mrf.mxu0
    %v1802 = vadd.f32 0.0, %v1801
    %1803 = vmatmul.f32.gmra.mxu0 %v1740
    %v1804 = vpop.f32.mrf.mxu0
    %v1805 = vadd.f32 0.0, %v1804
    %1806 = vmatmul.f32.gmra.mxu0 %v1743
    %v1807 = vpop.f32.mrf.mxu0
    %v1808 = vadd.f32 0.0, %v1807
    %1809 = vmatmul.f32.gmra.mxu0 %v1746
    %v1810 = vpop.f32.mrf.mxu0
    %v1811 = vadd.f32 0.0, %v1810
    %1812 = vmatmul.f32.gmra.mxu0 %v1749
    %v1813 = vpop.f32.mrf.mxu0
    %v1814 = vadd.f32 0.0, %v1813
    %1815 = vmatmul.f32.gmra.mxu0 %v1752
    %v1816 = vpop.f32.mrf.mxu0
    %v1817 = vadd.f32 0.0, %v1816
    %1818 = vmatmul.f32.gmra.mxu0 %v1755
    %v1819 = vpop.f32.mrf.mxu0
    %v1820 = vadd.f32 0.0, %v1819
    %1821 = vmatmul.f32.gmra.mxu0 %v1758
    %v1822 = vpop.f32.mrf.mxu0
    %v1823 = vadd.f32 0.0, %v1822
    %1824 = vmatmul.f32.gmra.mxu0 %v1761
    %v1825 = vpop.f32.mrf.mxu0
    %v1826 = vadd.f32 0.0, %v1825
    %1827 = vmatmul.f32.gmra.mxu0 %v1764
    %v1828 = vpop.f32.mrf.mxu0
    %v1829 = vadd.f32 0.0, %v1828
    %1830 = vmatmul.f32.gmra.mxu0 %v1767
    %v1831 = vpop.f32.mrf.mxu0
    %v1832 = vadd.f32 0.0, %v1831
    %1833 = vmatmul.f32.gmra.mxu0 %v1770
    %v1834 = vpop.f32.mrf.mxu0
    %v1835 = vadd.f32 0.0, %v1834
    %1836 = vmatmul.f32.gmra.mxu0 %v1773
    %v1837 = vpop.f32.mrf.mxu0
    %v1838 = vadd.f32 0.0, %v1837
    %1839 = vmatmul.f32.gmra.mxu0 %v1776
    %v1840 = vpop.f32.mrf.mxu0
    %v1841 = vadd.f32 0.0, %v1840
    %1842 = vdwg.mxu0
    %v1844 = vsel %vm437, %v969, 0
    %v1847 = vsel %vm437, %v972, 0
    %v1850 = vsel %vm437, %v975, 0
    %v1853 = vsel %vm437, %v978, 0
    %v1856 = vsel %vm437, %v981, 0
    %v1859 = vsel %vm437, %v984, 0
    %v1862 = vsel %vm437, %v987, 0
    %v1865 = vsel %vm437, %v990, 0
    %v1868 = vsel %vm437, %v993, 0
    %v1871 = vsel %vm437, %v996, 0
    %v1874 = vsel %vm437, %v999, 0
    %v1877 = vsel %vm437, %v1002, 0
    %v1880 = vsel %vm437, %v1005, 0
    %v1883 = vsel %vm437, %v1008, 0
    %v1886 = vsel %vm437, %v1011, 0
    %v1889 = vsel %vm437, %v1014, 0
    %1891 = vmatpush.msra.mxu0 0.0
    %1892 = vmatpush.msra.mxu0 0.0
    %1893 = vmatpush.msra.mxu0 0.0
    %1894 = vmatpush.msra.mxu0 0.0
    %1895 = vmatpush.msra.mxu0 0.0
    %1896 = vmatpush.msra.mxu0 0.0
    %1897 = vmatpush.msra.mxu0 0.0
    %1898 = vmatpush.msra.mxu0 0.0
    %1899 = vmatpush.msra.mxu0 0.0
    %1900 = vmatpush.msra.mxu0 0.0
    %1901 = vmatpush.msra.mxu0 0.0
    %1902 = vmatpush.msra.mxu0 0.0
    %1903 = vmatpush.msra.mxu0 0.0
    %1904 = vmatpush.msra.mxu0 0.0
    %1905 = vmatpush.msra.mxu0 0.0
    %1906 = vmatpush.msra.mxu0 %v109
    %1907 = vmatmul.f32.gmra.mxu0 %v1844
    %v1908 = vpop.f32.mrf.mxu0
    %v1909 = vadd.f32 %v1796, %v1908
    %1910 = vmatmul.f32.gmra.mxu0 %v1847
    %v1911 = vpop.f32.mrf.mxu0
    %v1912 = vadd.f32 %v1799, %v1911
    %1913 = vmatmul.f32.gmra.mxu0 %v1850
    %v1914 = vpop.f32.mrf.mxu0
    %v1915 = vadd.f32 %v1802, %v1914
    %1916 = vmatmul.f32.gmra.mxu0 %v1853
    %v1917 = vpop.f32.mrf.mxu0
    %v1918 = vadd.f32 %v1805, %v1917
    %1919 = vmatmul.f32.gmra.mxu0 %v1856
    %v1920 = vpop.f32.mrf.mxu0
    %v1921 = vadd.f32 %v1808, %v1920
    %1922 = vmatmul.f32.gmra.mxu0 %v1859
    %v1923 = vpop.f32.mrf.mxu0
    %v1924 = vadd.f32 %v1811, %v1923
    %1925 = vmatmul.f32.gmra.mxu0 %v1862
    %v1926 = vpop.f32.mrf.mxu0
    %v1927 = vadd.f32 %v1814, %v1926
    %1928 = vmatmul.f32.gmra.mxu0 %v1865
    %v1929 = vpop.f32.mrf.mxu0
    %v1930 = vadd.f32 %v1817, %v1929
    %1931 = vmatmul.f32.gmra.mxu0 %v1868
    %v1932 = vpop.f32.mrf.mxu0
    %v1933 = vadd.f32 %v1820, %v1932
    %1934 = vmatmul.f32.gmra.mxu0 %v1871
    %v1935 = vpop.f32.mrf.mxu0
    %v1936 = vadd.f32 %v1823, %v1935
    %1937 = vmatmul.f32.gmra.mxu0 %v1874
    %v1938 = vpop.f32.mrf.mxu0
    %v1939 = vadd.f32 %v1826, %v1938
    %1940 = vmatmul.f32.gmra.mxu0 %v1877
    %v1941 = vpop.f32.mrf.mxu0
    %v1942 = vadd.f32 %v1829, %v1941
    %1943 = vmatmul.f32.gmra.mxu0 %v1880
    %v1944 = vpop.f32.mrf.mxu0
    %v1945 = vadd.f32 %v1832, %v1944
    %1946 = vmatmul.f32.gmra.mxu0 %v1883
    %v1947 = vpop.f32.mrf.mxu0
    %v1948 = vadd.f32 %v1835, %v1947
    %1949 = vmatmul.f32.gmra.mxu0 %v1886
    %v1950 = vpop.f32.mrf.mxu0
    %v1951 = vadd.f32 %v1838, %v1950
    %1952 = vmatmul.f32.gmra.mxu0 %v1889
    %v1953 = vpop.f32.mrf.mxu0
    %v1954 = vadd.f32 %v1841, %v1953
    %1955 = vdwg.mxu0
    %1956 = vrot.lane.b32.xlu0 %v193, 112
    %v1957 = vpop.permute.xlu0 %1956
    %1958 = vrot.lane.b32.xlu0 %v196, 112
    %v1959 = vpop.permute.xlu0 %1958
    %1960 = vrot.lane.b32.xlu0 %v199, 112
    %v1961 = vpop.permute.xlu0 %1960
    %1962 = vrot.lane.b32.xlu0 %v202, 112
    %v1963 = vpop.permute.xlu0 %1962
    %1964 = vrot.lane.b32.xlu0 %v205, 112
    %v1965 = vpop.permute.xlu0 %1964
    %1966 = vrot.lane.b32.xlu0 %v208, 112
    %v1967 = vpop.permute.xlu0 %1966
    %1968 = vrot.lane.b32.xlu0 %v211, 112
    %v1969 = vpop.permute.xlu0 %1968
    %1970 = vrot.lane.b32.xlu0 %v214, 112
    %v1971 = vpop.permute.xlu0 %1970
    %1972 = vrot.lane.b32.xlu0 %v217, 112
    %v1973 = vpop.permute.xlu0 %1972
    %1974 = vrot.lane.b32.xlu0 %v220, 112
    %v1975 = vpop.permute.xlu0 %1974
    %1976 = vrot.lane.b32.xlu0 %v223, 112
    %v1977 = vpop.permute.xlu0 %1976
    %1978 = vrot.lane.b32.xlu0 %v226, 112
    %v1979 = vpop.permute.xlu0 %1978
    %1980 = vrot.lane.b32.xlu0 %v229, 112
    %v1981 = vpop.permute.xlu0 %1980
    %1982 = vrot.lane.b32.xlu0 %v232, 112
    %v1983 = vpop.permute.xlu0 %1982
    %1984 = vrot.lane.b32.xlu0 %v235, 112
    %v1985 = vpop.permute.xlu0 %1984
    %1986 = vrot.lane.b32.xlu0 %v238, 112
    %v1987 = vpop.permute.xlu0 %1986
    %1988 = vrot.lane.b32.xlu0 %v307, 112
    %v1989 = vpop.permute.xlu0 %1988
    %1990 = vrot.lane.b32.xlu0 %v310, 112
    %v1991 = vpop.permute.xlu0 %1990
    %1992 = vrot.lane.b32.xlu0 %v313, 112
    %v1993 = vpop.permute.xlu0 %1992
    %1994 = vrot.lane.b32.xlu0 %v316, 112
    %v1995 = vpop.permute.xlu0 %1994
    %1996 = vrot.lane.b32.xlu0 %v319, 112
    %v1997 = vpop.permute.xlu0 %1996
    %1998 = vrot.lane.b32.xlu0 %v322, 112
    %v1999 = vpop.permute.xlu0 %1998
    %2000 = vrot.lane.b32.xlu0 %v325, 112
    %v2001 = vpop.permute.xlu0 %2000
    %2002 = vrot.lane.b32.xlu0 %v328, 112
    %v2003 = vpop.permute.xlu0 %2002
    %2004 = vrot.lane.b32.xlu0 %v331, 112
    %v2005 = vpop.permute.xlu0 %2004
    %2006 = vrot.lane.b32.xlu0 %v334, 112
    %v2007 = vpop.permute.xlu0 %2006
    %2008 = vrot.lane.b32.xlu0 %v337, 112
    %v2009 = vpop.permute.xlu0 %2008
    %2010 = vrot.lane.b32.xlu0 %v340, 112
    %v2011 = vpop.permute.xlu0 %2010
    %2012 = vrot.lane.b32.xlu0 %v343, 112
    %v2013 = vpop.permute.xlu0 %2012
    %2014 = vrot.lane.b32.xlu0 %v346, 112
    %v2015 = vpop.permute.xlu0 %2014
    %2016 = vrot.lane.b32.xlu0 %v349, 112
    %v2017 = vpop.permute.xlu0 %2016
    %2018 = vrot.lane.b32.xlu0 %v352, 112
    %v2019 = vpop.permute.xlu0 %2018
    %v2020 = vsel %vm437, %v1957, 0
    %v2022 = vsel %vm437, %v1959, 0
    %v2024 = vsel %vm437, %v1961, 0
    %v2026 = vsel %vm437, %v1963, 0
    %v2028 = vsel %vm437, %v1965, 0
    %v2030 = vsel %vm437, %v1967, 0
    %v2032 = vsel %vm437, %v1969, 0
    %v2034 = vsel %vm437, %v1971, 0
    %v2036 = vsel %vm437, %v1973, 0
    %v2038 = vsel %vm437, %v1975, 0
    %v2040 = vsel %vm437, %v1977, 0
    %v2042 = vsel %vm437, %v1979, 0
    %v2044 = vsel %vm437, %v1981, 0
    %v2046 = vsel %vm437, %v1983, 0
    %v2048 = vsel %vm437, %v1985, 0
    %v2050 = vsel %vm437, %v1987, 0
    %v2052 = vsel %vm437, %v1989, 0
    %v2054 = vsel %vm437, %v1991, 0
    %v2056 = vsel %vm437, %v1993, 0
    %v2058 = vsel %vm437, %v1995, 0
    %v2060 = vsel %vm437, %v1997, 0
    %v2062 = vsel %vm437, %v1999, 0
    %v2064 = vsel %vm437, %v2001, 0
    %v2066 = vsel %vm437, %v2003, 0
    %v2068 = vsel %vm437, %v2005, 0
    %v2070 = vsel %vm437, %v2007, 0
    %v2072 = vsel %vm437, %v2009, 0
    %v2074 = vsel %vm437, %v2011, 0
    %v2076 = vsel %vm437, %v2013, 0
    %v2078 = vsel %vm437, %v2015, 0
    %v2080 = vsel %vm437, %v2017, 0
    %v2082 = vsel %vm437, %v2019, 0
    %2084 = vmatpush.xpose.msra.mxu0 %v2082
    %2085 = vmatpush.xpose.msra.mxu0 %v2080
    %2086 = vmatpush.xpose.msra.mxu0 %v2078
    %2087 = vmatpush.xpose.msra.mxu0 %v2076
    %2088 = vmatpush.xpose.msra.mxu0 %v2074
    %2089 = vmatpush.xpose.msra.mxu0 %v2072
    %2090 = vmatpush.xpose.msra.mxu0 %v2070
    %2091 = vmatpush.xpose.msra.mxu0 %v2068
    %2092 = vmatpush.xpose.msra.mxu0 %v2066
    %2093 = vmatpush.xpose.msra.mxu0 %v2064
    %2094 = vmatpush.xpose.msra.mxu0 %v2062
    %2095 = vmatpush.xpose.msra.mxu0 %v2060
    %2096 = vmatpush.xpose.msra.mxu0 %v2058
    %2097 = vmatpush.xpose.msra.mxu0 %v2056
    %2098 = vmatpush.xpose.msra.mxu0 %v2054
    %2099 = vmatpush.xpose.msra.mxu0 %v2052
    %2100 = vmatmul.f32.gmra.mxu0 %v2020
    %v2101 = vpop.f32.mrf.mxu0
    %v2102 = vadd.f32 %v420, %v2101
    %2103 = vmatmul.f32.gmra.mxu0 %v2022
    %v2104 = vpop.f32.mrf.mxu0
    %v2105 = vadd.f32 %v421, %v2104
    %2106 = vmatmul.f32.gmra.mxu0 %v2024
    %v2107 = vpop.f32.mrf.mxu0
    %v2108 = vadd.f32 %v422, %v2107
    %2109 = vmatmul.f32.gmra.mxu0 %v2026
    %v2110 = vpop.f32.mrf.mxu0
    %v2111 = vadd.f32 %v423, %v2110
    %2112 = vmatmul.f32.gmra.mxu0 %v2028
    %v2113 = vpop.f32.mrf.mxu0
    %v2114 = vadd.f32 %v424, %v2113
    %2115 = vmatmul.f32.gmra.mxu0 %v2030
    %v2116 = vpop.f32.mrf.mxu0
    %v2117 = vadd.f32 %v425, %v2116
    %2118 = vmatmul.f32.gmra.mxu0 %v2032
    %v2119 = vpop.f32.mrf.mxu0
    %v2120 = vadd.f32 %v426, %v2119
    %2121 = vmatmul.f32.gmra.mxu0 %v2034
    %v2122 = vpop.f32.mrf.mxu0
    %v2123 = vadd.f32 %v427, %v2122
    %2124 = vmatmul.f32.gmra.mxu0 %v2036
    %v2125 = vpop.f32.mrf.mxu0
    %v2126 = vadd.f32 %v428, %v2125
    %2127 = vmatmul.f32.gmra.mxu0 %v2038
    %v2128 = vpop.f32.mrf.mxu0
    %v2129 = vadd.f32 %v429, %v2128
    %2130 = vmatmul.f32.gmra.mxu0 %v2040
    %v2131 = vpop.f32.mrf.mxu0
    %v2132 = vadd.f32 %v430, %v2131
    %2133 = vmatmul.f32.gmra.mxu0 %v2042
    %v2134 = vpop.f32.mrf.mxu0
    %v2135 = vadd.f32 %v431, %v2134
    %2136 = vmatmul.f32.gmra.mxu0 %v2044
    %v2137 = vpop.f32.mrf.mxu0
    %v2138 = vadd.f32 %v432, %v2137
    %2139 = vmatmul.f32.gmra.mxu0 %v2046
    %v2140 = vpop.f32.mrf.mxu0
    %v2141 = vadd.f32 %v433, %v2140
    %2142 = vmatmul.f32.gmra.mxu0 %v2048
    %v2143 = vpop.f32.mrf.mxu0
    %v2144 = vadd.f32 %v434, %v2143
    %2145 = vmatmul.f32.gmra.mxu0 %v2050
    %v2146 = vpop.f32.mrf.mxu0
    %v2147 = vadd.f32 %v435, %v2146
    %2148 = vdwg.mxu0
    %2149 = vmax.xlane.f32.xlu0 %v2102
    %v2150 = vpop.xlane.xlu0 %2149
    %2151 = vmax.xlane.f32.xlu0 %v2105
    %v2152 = vpop.xlane.xlu0 %2151
    %2153 = vmax.xlane.f32.xlu0 %v2108
    %v2154 = vpop.xlane.xlu0 %2153
    %2155 = vmax.xlane.f32.xlu0 %v2111
    %v2156 = vpop.xlane.xlu0 %2155
    %2157 = vmax.xlane.f32.xlu0 %v2114
    %v2158 = vpop.xlane.xlu0 %2157
    %2159 = vmax.xlane.f32.xlu0 %v2117
    %v2160 = vpop.xlane.xlu0 %2159
    %2161 = vmax.xlane.f32.xlu0 %v2120
    %v2162 = vpop.xlane.xlu0 %2161
    %2163 = vmax.xlane.f32.xlu0 %v2123
    %v2164 = vpop.xlane.xlu0 %2163
    %2165 = vmax.xlane.f32.xlu0 %v2126
    %v2166 = vpop.xlane.xlu0 %2165
    %2167 = vmax.xlane.f32.xlu0 %v2129
    %v2168 = vpop.xlane.xlu0 %2167
    %2169 = vmax.xlane.f32.xlu0 %v2132
    %v2170 = vpop.xlane.xlu0 %2169
    %2171 = vmax.xlane.f32.xlu0 %v2135
    %v2172 = vpop.xlane.xlu0 %2171
    %2173 = vmax.xlane.f32.xlu0 %v2138
    %v2174 = vpop.xlane.xlu0 %2173
    %2175 = vmax.xlane.f32.xlu0 %v2141
    %v2176 = vpop.xlane.xlu0 %2175
    %2177 = vmax.xlane.f32.xlu0 %v2144
    %v2178 = vpop.xlane.xlu0 %2177
    %2179 = vmax.xlane.f32.xlu0 %v2147
    %v2180 = vpop.xlane.xlu0 %2179
    %v2181 = vsub.f32 %v2102, %v2150
    %v2182 = vsub.f32 %v2105, %v2152
    %v2183 = vsub.f32 %v2108, %v2154
    %v2184 = vsub.f32 %v2111, %v2156
    %v2185 = vsub.f32 %v2114, %v2158
    %v2186 = vsub.f32 %v2117, %v2160
    %v2187 = vsub.f32 %v2120, %v2162
    %v2188 = vsub.f32 %v2123, %v2164
    %v2189 = vsub.f32 %v2126, %v2166
    %v2190 = vsub.f32 %v2129, %v2168
    %v2191 = vsub.f32 %v2132, %v2170
    %v2192 = vsub.f32 %v2135, %v2172
    %v2193 = vsub.f32 %v2138, %v2174
    %v2194 = vsub.f32 %v2141, %v2176
    %v2195 = vsub.f32 %v2144, %v2178
    %v2196 = vsub.f32 %v2147, %v2180
    %v2197 = vmul.f32 %v2181, 1.442695
    %v2198 = vpow.pop %v2197
    %v2199 = vmul.f32 %v2182, 1.442695
    %v2200 = vpow.pop %v2199
    %v2201 = vmul.f32 %v2183, 1.442695
    %v2202 = vpow.pop %v2201
    %v2203 = vmul.f32 %v2184, 1.442695
    %v2204 = vpow.pop %v2203
    %v2205 = vmul.f32 %v2185, 1.442695
    %v2206 = vpow.pop %v2205
    %v2207 = vmul.f32 %v2186, 1.442695
    %v2208 = vpow.pop %v2207
    %v2209 = vmul.f32 %v2187, 1.442695
    %v2210 = vpow.pop %v2209
    %v2211 = vmul.f32 %v2188, 1.442695
    %v2212 = vpow.pop %v2211
    %v2213 = vmul.f32 %v2189, 1.442695
    %v2214 = vpow.pop %v2213
    %v2215 = vmul.f32 %v2190, 1.442695
    %v2216 = vpow.pop %v2215
    %v2217 = vmul.f32 %v2191, 1.442695
    %v2218 = vpow.pop %v2217
    %v2219 = vmul.f32 %v2192, 1.442695
    %v2220 = vpow.pop %v2219
    %v2221 = vmul.f32 %v2193, 1.442695
    %v2222 = vpow.pop %v2221
    %v2223 = vmul.f32 %v2194, 1.442695
    %v2224 = vpow.pop %v2223
    %v2225 = vmul.f32 %v2195, 1.442695
    %v2226 = vpow.pop %v2225
    %v2227 = vmul.f32 %v2196, 1.442695
    %v2228 = vpow.pop %v2227
    %2229 = vadd.xlane.f32.xlu0 %v2198
    %v2230 = vpop.xlane.xlu0 %2229
    %2231 = vadd.xlane.f32.xlu0 %v2200
    %v2232 = vpop.xlane.xlu0 %2231
    %2233 = vadd.xlane.f32.xlu0 %v2202
    %v2234 = vpop.xlane.xlu0 %2233
    %2235 = vadd.xlane.f32.xlu0 %v2204
    %v2236 = vpop.xlane.xlu0 %2235
    %2237 = vadd.xlane.f32.xlu0 %v2206
    %v2238 = vpop.xlane.xlu0 %2237
    %2239 = vadd.xlane.f32.xlu0 %v2208
    %v2240 = vpop.xlane.xlu0 %2239
    %2241 = vadd.xlane.f32.xlu0 %v2210
    %v2242 = vpop.xlane.xlu0 %2241
    %2243 = vadd.xlane.f32.xlu0 %v2212
    %v2244 = vpop.xlane.xlu0 %2243
    %2245 = vadd.xlane.f32.xlu0 %v2214
    %v2246 = vpop.xlane.xlu0 %2245
    %2247 = vadd.xlane.f32.xlu0 %v2216
    %v2248 = vpop.xlane.xlu0 %2247
    %2249 = vadd.xlane.f32.xlu0 %v2218
    %v2250 = vpop.xlane.xlu0 %2249
    %2251 = vadd.xlane.f32.xlu0 %v2220
    %v2252 = vpop.xlane.xlu0 %2251
    %2253 = vadd.xlane.f32.xlu0 %v2222
    %v2254 = vpop.xlane.xlu0 %2253
    %2255 = vadd.xlane.f32.xlu0 %v2224
    %v2256 = vpop.xlane.xlu0 %2255
    %2257 = vadd.xlane.f32.xlu0 %v2226
    %v2258 = vpop.xlane.xlu0 %2257
    %2259 = vadd.xlane.f32.xlu0 %v2228
    %v2260 = vpop.xlane.xlu0 %2259
    %v2261 = vrcp.pop %v2230
    %v2262 = vmul.f32 %v2230, %v2261
    %v2263 = vsub.f32 1.0, %v2262
    %v2264 = vmul.f32 %v2261, %v2263
    %v2265 = vadd.f32 %v2261, %v2264
    %vm2266 = vweird.f32 %v2230
    %vm2267 = vweird.f32 %v2261
    %vm2268 = vmor %vm2266, %vm2267
    %v2269 = vsel %vm2268, %v2261, %v2265
    %v2270 = vand.u32 2147483647, %v2230
    %vm2271 = vcmp.eq.f32.partialorder %v2270, 8.507059e+37
    %v2272 = vand.u32 %v2230, 2147483648
    %v2273 = vor.u32 1.1754944e-38, %v2272
    %v2274 = vsel %vm2271, %v2273, %v2269
    %v2275 = vrcp.pop %v2232
    %v2276 = vmul.f32 %v2232, %v2275
    %v2277 = vsub.f32 1.0, %v2276
    %v2278 = vmul.f32 %v2275, %v2277
    %v2279 = vadd.f32 %v2275, %v2278
    %vm2280 = vweird.f32 %v2232
    %vm2281 = vweird.f32 %v2275
    %vm2282 = vmor %vm2280, %vm2281
    %v2283 = vsel %vm2282, %v2275, %v2279
    %v2284 = vand.u32 2147483647, %v2232
    %vm2285 = vcmp.eq.f32.partialorder %v2284, 8.507059e+37
    %v2286 = vand.u32 %v2232, 2147483648
    %v2287 = vor.u32 1.1754944e-38, %v2286
    %v2288 = vsel %vm2285, %v2287, %v2283
    %v2289 = vrcp.pop %v2234
    %v2290 = vmul.f32 %v2234, %v2289
    %v2291 = vsub.f32 1.0, %v2290
    %v2292 = vmul.f32 %v2289, %v2291
    %v2293 = vadd.f32 %v2289, %v2292
    %vm2294 = vweird.f32 %v2234
    %vm2295 = vweird.f32 %v2289
    %vm2296 = vmor %vm2294, %vm2295
    %v2297 = vsel %vm2296, %v2289, %v2293
    %v2298 = vand.u32 2147483647, %v2234
    %vm2299 = vcmp.eq.f32.partialorder %v2298, 8.507059e+37
    %v2300 = vand.u32 %v2234, 2147483648
    %v2301 = vor.u32 1.1754944e-38, %v2300
    %v2302 = vsel %vm2299, %v2301, %v2297
    %v2303 = vrcp.pop %v2236
    %v2304 = vmul.f32 %v2236, %v2303
    %v2305 = vsub.f32 1.0, %v2304
    %v2306 = vmul.f32 %v2303, %v2305
    %v2307 = vadd.f32 %v2303, %v2306
    %vm2308 = vweird.f32 %v2236
    %vm2309 = vweird.f32 %v2303
    %vm2310 = vmor %vm2308, %vm2309
    %v2311 = vsel %vm2310, %v2303, %v2307
    %v2312 = vand.u32 2147483647, %v2236
    %vm2313 = vcmp.eq.f32.partialorder %v2312, 8.507059e+37
    %v2314 = vand.u32 %v2236, 2147483648
    %v2315 = vor.u32 1.1754944e-38, %v2314
    %v2316 = vsel %vm2313, %v2315, %v2311
    %v2317 = vrcp.pop %v2238
    %v2318 = vmul.f32 %v2238, %v2317
    %v2319 = vsub.f32 1.0, %v2318
    %v2320 = vmul.f32 %v2317, %v2319
    %v2321 = vadd.f32 %v2317, %v2320
    %vm2322 = vweird.f32 %v2238
    %vm2323 = vweird.f32 %v2317
    %vm2324 = vmor %vm2322, %vm2323
    %v2325 = vsel %vm2324, %v2317, %v2321
    %v2326 = vand.u32 2147483647, %v2238
    %vm2327 = vcmp.eq.f32.partialorder %v2326, 8.507059e+37
    %v2328 = vand.u32 %v2238, 2147483648
    %v2329 = vor.u32 1.1754944e-38, %v2328
    %v2330 = vsel %vm2327, %v2329, %v2325
    %v2331 = vrcp.pop %v2240
    %v2332 = vmul.f32 %v2240, %v2331
    %v2333 = vsub.f32 1.0, %v2332
    %v2334 = vmul.f32 %v2331, %v2333
    %v2335 = vadd.f32 %v2331, %v2334
    %vm2336 = vweird.f32 %v2240
    %vm2337 = vweird.f32 %v2331
    %vm2338 = vmor %vm2336, %vm2337
    %v2339 = vsel %vm2338, %v2331, %v2335
    %v2340 = vand.u32 2147483647, %v2240
    %vm2341 = vcmp.eq.f32.partialorder %v2340, 8.507059e+37
    %v2342 = vand.u32 %v2240, 2147483648
    %v2343 = vor.u32 1.1754944e-38, %v2342
    %v2344 = vsel %vm2341, %v2343, %v2339
    %v2345 = vrcp.pop %v2242
    %v2346 = vmul.f32 %v2242, %v2345
    %v2347 = vsub.f32 1.0, %v2346
    %v2348 = vmul.f32 %v2345, %v2347
    %v2349 = vadd.f32 %v2345, %v2348
    %vm2350 = vweird.f32 %v2242
    %vm2351 = vweird.f32 %v2345
    %vm2352 = vmor %vm2350, %vm2351
    %v2353 = vsel %vm2352, %v2345, %v2349
    %v2354 = vand.u32 2147483647, %v2242
    %vm2355 = vcmp.eq.f32.partialorder %v2354, 8.507059e+37
    %v2356 = vand.u32 %v2242, 2147483648
    %v2357 = vor.u32 1.1754944e-38, %v2356
    %v2358 = vsel %vm2355, %v2357, %v2353
    %v2359 = vrcp.pop %v2244
    %v2360 = vmul.f32 %v2244, %v2359
    %v2361 = vsub.f32 1.0, %v2360
    %v2362 = vmul.f32 %v2359, %v2361
    %v2363 = vadd.f32 %v2359, %v2362
    %vm2364 = vweird.f32 %v2244
    %vm2365 = vweird.f32 %v2359
    %vm2366 = vmor %vm2364, %vm2365
    %v2367 = vsel %vm2366, %v2359, %v2363
    %v2368 = vand.u32 2147483647, %v2244
    %vm2369 = vcmp.eq.f32.partialorder %v2368, 8.507059e+37
    %v2370 = vand.u32 %v2244, 2147483648
    %v2371 = vor.u32 1.1754944e-38, %v2370
    %v2372 = vsel %vm2369, %v2371, %v2367
    %v2373 = vrcp.pop %v2246
    %v2374 = vmul.f32 %v2246, %v2373
    %v2375 = vsub.f32 1.0, %v2374
    %v2376 = vmul.f32 %v2373, %v2375
    %v2377 = vadd.f32 %v2373, %v2376
    %vm2378 = vweird.f32 %v2246
    %vm2379 = vweird.f32 %v2373
    %vm2380 = vmor %vm2378, %vm2379
    %v2381 = vsel %vm2380, %v2373, %v2377
    %v2382 = vand.u32 2147483647, %v2246
    %vm2383 = vcmp.eq.f32.partialorder %v2382, 8.507059e+37
    %v2384 = vand.u32 %v2246, 2147483648
    %v2385 = vor.u32 1.1754944e-38, %v2384
    %v2386 = vsel %vm2383, %v2385, %v2381
    %v2387 = vrcp.pop %v2248
    %v2388 = vmul.f32 %v2248, %v2387
    %v2389 = vsub.f32 1.0, %v2388
    %v2390 = vmul.f32 %v2387, %v2389
    %v2391 = vadd.f32 %v2387, %v2390
    %vm2392 = vweird.f32 %v2248
    %vm2393 = vweird.f32 %v2387
    %vm2394 = vmor %vm2392, %vm2393
    %v2395 = vsel %vm2394, %v2387, %v2391
    %v2396 = vand.u32 2147483647, %v2248
    %vm2397 = vcmp.eq.f32.partialorder %v2396, 8.507059e+37
    %v2398 = vand.u32 %v2248, 2147483648
    %v2399 = vor.u32 1.1754944e-38, %v2398
    %v2400 = vsel %vm2397, %v2399, %v2395
    %v2401 = vrcp.pop %v2250
    %v2402 = vmul.f32 %v2250, %v2401
    %v2403 = vsub.f32 1.0, %v2402
    %v2404 = vmul.f32 %v2401, %v2403
    %v2405 = vadd.f32 %v2401, %v2404
    %vm2406 = vweird.f32 %v2250
    %vm2407 = vweird.f32 %v2401
    %vm2408 = vmor %vm2406, %vm2407
    %v2409 = vsel %vm2408, %v2401, %v2405
    %v2410 = vand.u32 2147483647, %v2250
    %vm2411 = vcmp.eq.f32.partialorder %v2410, 8.507059e+37
    %v2412 = vand.u32 %v2250, 2147483648
    %v2413 = vor.u32 1.1754944e-38, %v2412
    %v2414 = vsel %vm2411, %v2413, %v2409
    %v2415 = vrcp.pop %v2252
    %v2416 = vmul.f32 %v2252, %v2415
    %v2417 = vsub.f32 1.0, %v2416
    %v2418 = vmul.f32 %v2415, %v2417
    %v2419 = vadd.f32 %v2415, %v2418
    %vm2420 = vweird.f32 %v2252
    %vm2421 = vweird.f32 %v2415
    %vm2422 = vmor %vm2420, %vm2421
    %v2423 = vsel %vm2422, %v2415, %v2419
    %v2424 = vand.u32 2147483647, %v2252
    %vm2425 = vcmp.eq.f32.partialorder %v2424, 8.507059e+37
    %v2426 = vand.u32 %v2252, 2147483648
    %v2427 = vor.u32 1.1754944e-38, %v2426
    %v2428 = vsel %vm2425, %v2427, %v2423
    %v2429 = vrcp.pop %v2254
    %v2430 = vmul.f32 %v2254, %v2429
    %v2431 = vsub.f32 1.0, %v2430
    %v2432 = vmul.f32 %v2429, %v2431
    %v2433 = vadd.f32 %v2429, %v2432
    %vm2434 = vweird.f32 %v2254
    %vm2435 = vweird.f32 %v2429
    %vm2436 = vmor %vm2434, %vm2435
    %v2437 = vsel %vm2436, %v2429, %v2433
    %v2438 = vand.u32 2147483647, %v2254
    %vm2439 = vcmp.eq.f32.partialorder %v2438, 8.507059e+37
    %v2440 = vand.u32 %v2254, 2147483648
    %v2441 = vor.u32 1.1754944e-38, %v2440
    %v2442 = vsel %vm2439, %v2441, %v2437
    %v2443 = vrcp.pop %v2256
    %v2444 = vmul.f32 %v2256, %v2443
    %v2445 = vsub.f32 1.0, %v2444
    %v2446 = vmul.f32 %v2443, %v2445
    %v2447 = vadd.f32 %v2443, %v2446
    %vm2448 = vweird.f32 %v2256
    %vm2449 = vweird.f32 %v2443
    %vm2450 = vmor %vm2448, %vm2449
    %v2451 = vsel %vm2450, %v2443, %v2447
    %v2452 = vand.u32 2147483647, %v2256
    %vm2453 = vcmp.eq.f32.partialorder %v2452, 8.507059e+37
    %v2454 = vand.u32 %v2256, 2147483648
    %v2455 = vor.u32 1.1754944e-38, %v2454
    %v2456 = vsel %vm2453, %v2455, %v2451
    %v2457 = vrcp.pop %v2258
    %v2458 = vmul.f32 %v2258, %v2457
    %v2459 = vsub.f32 1.0, %v2458
    %v2460 = vmul.f32 %v2457, %v2459
    %v2461 = vadd.f32 %v2457, %v2460
    %vm2462 = vweird.f32 %v2258
    %vm2463 = vweird.f32 %v2457
    %vm2464 = vmor %vm2462, %vm2463
    %v2465 = vsel %vm2464, %v2457, %v2461
    %v2466 = vand.u32 2147483647, %v2258
    %vm2467 = vcmp.eq.f32.partialorder %v2466, 8.507059e+37
    %v2468 = vand.u32 %v2258, 2147483648
    %v2469 = vor.u32 1.1754944e-38, %v2468
    %v2470 = vsel %vm2467, %v2469, %v2465
    %v2471 = vrcp.pop %v2260
    %v2472 = vmul.f32 %v2260, %v2471
    %v2473 = vsub.f32 1.0, %v2472
    %v2474 = vmul.f32 %v2471, %v2473
    %v2475 = vadd.f32 %v2471, %v2474
    %vm2476 = vweird.f32 %v2260
    %vm2477 = vweird.f32 %v2471
    %vm2478 = vmor %vm2476, %vm2477
    %v2479 = vsel %vm2478, %v2471, %v2475
    %v2480 = vand.u32 2147483647, %v2260
    %vm2481 = vcmp.eq.f32.partialorder %v2480, 8.507059e+37
    %v2482 = vand.u32 %v2260, 2147483648
    %v2483 = vor.u32 1.1754944e-38, %v2482
    %v2484 = vsel %vm2481, %v2483, %v2479
    %v2485 = vmul.f32 %v2198, %v2274
    %v2486 = vmul.f32 %v2200, %v2288
    %v2487 = vmul.f32 %v2202, %v2302
    %v2488 = vmul.f32 %v2204, %v2316
    %v2489 = vmul.f32 %v2206, %v2330
    %v2490 = vmul.f32 %v2208, %v2344
    %v2491 = vmul.f32 %v2210, %v2358
    %v2492 = vmul.f32 %v2212, %v2372
    %v2493 = vmul.f32 %v2214, %v2386
    %v2494 = vmul.f32 %v2216, %v2400
    %v2495 = vmul.f32 %v2218, %v2414
    %v2496 = vmul.f32 %v2220, %v2428
    %v2497 = vmul.f32 %v2222, %v2442
    %v2498 = vmul.f32 %v2224, %v2456
    %v2499 = vmul.f32 %v2226, %v2470
    %v2500 = vmul.f32 %v2228, %v2484
    %2501 = vmatpush.msra.mxu0 %v2500
    %2502 = vmatpush.msra.mxu0 %v2499
    %2503 = vmatpush.msra.mxu0 %v2498
    %2504 = vmatpush.msra.mxu0 %v2497
    %2505 = vmatpush.msra.mxu0 %v2496
    %2506 = vmatpush.msra.mxu0 %v2495
    %2507 = vmatpush.msra.mxu0 %v2494
    %2508 = vmatpush.msra.mxu0 %v2493
    %2509 = vmatpush.msra.mxu0 %v2492
    %2510 = vmatpush.msra.mxu0 %v2491
    %2511 = vmatpush.msra.mxu0 %v2490
    %2512 = vmatpush.msra.mxu0 %v2489
    %2513 = vmatpush.msra.mxu0 %v2488
    %2514 = vmatpush.msra.mxu0 %v2487
    %2515 = vmatpush.msra.mxu0 %v2486
    %2516 = vmatpush.msra.mxu0 %v2485
    %2517 = vmatmul.f32.gmra.mxu0 %v436
    %v2518 = vpop.f32.mrf.mxu0
    %v2519 = vadd.f32 0.0, %v2518
    %2520 = vdwg.mxu0
    %v2521 = vadd.f32 %v1599, %v2519
    %2522 = vrot.lane.b32.xlu0 %v373, 112
    %v2523 = vpop.permute.xlu0 %2522
    %2524 = vrot.lane.b32.xlu0 %v376, 112
    %v2525 = vpop.permute.xlu0 %2524
    %2526 = vrot.lane.b32.xlu0 %v379, 112
    %v2527 = vpop.permute.xlu0 %2526
    %2528 = vrot.lane.b32.xlu0 %v382, 112
    %v2529 = vpop.permute.xlu0 %2528
    %2530 = vrot.lane.b32.xlu0 %v385, 112
    %v2531 = vpop.permute.xlu0 %2530
    %2532 = vrot.lane.b32.xlu0 %v388, 112
    %v2533 = vpop.permute.xlu0 %2532
    %2534 = vrot.lane.b32.xlu0 %v391, 112
    %v2535 = vpop.permute.xlu0 %2534
    %2536 = vrot.lane.b32.xlu0 %v394, 112
    %v2537 = vpop.permute.xlu0 %2536
    %2538 = vrot.lane.b32.xlu0 %v397, 112
    %v2539 = vpop.permute.xlu0 %2538
    %2540 = vrot.lane.b32.xlu0 %v400, 112
    %v2541 = vpop.permute.xlu0 %2540
    %2542 = vrot.lane.b32.xlu0 %v403, 112
    %v2543 = vpop.permute.xlu0 %2542
    %2544 = vrot.lane.b32.xlu0 %v406, 112
    %v2545 = vpop.permute.xlu0 %2544
    %2546 = vrot.lane.b32.xlu0 %v409, 112
    %v2547 = vpop.permute.xlu0 %2546
    %2548 = vrot.lane.b32.xlu0 %v412, 112
    %v2549 = vpop.permute.xlu0 %2548
    %2550 = vrot.lane.b32.xlu0 %v415, 112
    %v2551 = vpop.permute.xlu0 %2550
    %2552 = vrot.lane.b32.xlu0 %v418, 112
    %v2553 = vpop.permute.xlu0 %2552
    %2570 = vmatpush.msra.mxu0 %v2553
    %2571 = vmatpush.msra.mxu0 %v2551
    %2572 = vmatpush.msra.mxu0 %v2549
    %2573 = vmatpush.msra.mxu0 %v2547
    %2574 = vmatpush.msra.mxu0 %v2545
    %2575 = vmatpush.msra.mxu0 %v2543
    %2576 = vmatpush.msra.mxu0 %v2541
    %2577 = vmatpush.msra.mxu0 %v2539
    %2578 = vmatpush.msra.mxu0 %v2537
    %2579 = vmatpush.msra.mxu0 %v2535
    %2580 = vmatpush.msra.mxu0 %v2533
    %2581 = vmatpush.msra.mxu0 %v2531
    %2582 = vmatpush.msra.mxu0 %v2529
    %2583 = vmatpush.msra.mxu0 %v2527
    %2584 = vmatpush.msra.mxu0 %v2525
    %2585 = vmatpush.msra.mxu0 %v2523
    %2586 = vmatmul.f32.gmra.mxu0 %v2485
    %v2587 = vpop.f32.mrf.mxu0
    %v2588 = vadd.f32 0.0, %v2587
    %2589 = vmatmul.f32.gmra.mxu0 %v2486
    %v2590 = vpop.f32.mrf.mxu0
    %v2591 = vadd.f32 0.0, %v2590
    %2592 = vmatmul.f32.gmra.mxu0 %v2487
    %v2593 = vpop.f32.mrf.mxu0
    %v2594 = vadd.f32 0.0, %v2593
    %2595 = vmatmul.f32.gmra.mxu0 %v2488
    %v2596 = vpop.f32.mrf.mxu0
    %v2597 = vadd.f32 0.0, %v2596
    %2598 = vmatmul.f32.gmra.mxu0 %v2489
    %v2599 = vpop.f32.mrf.mxu0
    %v2600 = vadd.f32 0.0, %v2599
    %2601 = vmatmul.f32.gmra.mxu0 %v2490
    %v2602 = vpop.f32.mrf.mxu0
    %v2603 = vadd.f32 0.0, %v2602
    %2604 = vmatmul.f32.gmra.mxu0 %v2491
    %v2605 = vpop.f32.mrf.mxu0
    %v2606 = vadd.f32 0.0, %v2605
    %2607 = vmatmul.f32.gmra.mxu0 %v2492
    %v2608 = vpop.f32.mrf.mxu0
    %v2609 = vadd.f32 0.0, %v2608
    %2610 = vmatmul.f32.gmra.mxu0 %v2493
    %v2611 = vpop.f32.mrf.mxu0
    %v2612 = vadd.f32 0.0, %v2611
    %2613 = vmatmul.f32.gmra.mxu0 %v2494
    %v2614 = vpop.f32.mrf.mxu0
    %v2615 = vadd.f32 0.0, %v2614
    %2616 = vmatmul.f32.gmra.mxu0 %v2495
    %v2617 = vpop.f32.mrf.mxu0
    %v2618 = vadd.f32 0.0, %v2617
    %2619 = vmatmul.f32.gmra.mxu0 %v2496
    %v2620 = vpop.f32.mrf.mxu0
    %v2621 = vadd.f32 0.0, %v2620
    %2622 = vmatmul.f32.gmra.mxu0 %v2497
    %v2623 = vpop.f32.mrf.mxu0
    %v2624 = vadd.f32 0.0, %v2623
    %2625 = vmatmul.f32.gmra.mxu0 %v2498
    %v2626 = vpop.f32.mrf.mxu0
    %v2627 = vadd.f32 0.0, %v2626
    %2628 = vmatmul.f32.gmra.mxu0 %v2499
    %v2629 = vpop.f32.mrf.mxu0
    %v2630 = vadd.f32 0.0, %v2629
    %2631 = vmatmul.f32.gmra.mxu0 %v2500
    %v2632 = vpop.f32.mrf.mxu0
    %v2633 = vadd.f32 0.0, %v2632
    %2634 = vdwg.mxu0
    %v2636 = vsel %vm437, %v2588, 0
    %v2639 = vsel %vm437, %v2591, 0
    %v2642 = vsel %vm437, %v2594, 0
    %v2645 = vsel %vm437, %v2597, 0
    %v2648 = vsel %vm437, %v2600, 0
    %v2651 = vsel %vm437, %v2603, 0
    %v2654 = vsel %vm437, %v2606, 0
    %v2657 = vsel %vm437, %v2609, 0
    %v2660 = vsel %vm437, %v2612, 0
    %v2663 = vsel %vm437, %v2615, 0
    %v2666 = vsel %vm437, %v2618, 0
    %v2669 = vsel %vm437, %v2621, 0
    %v2672 = vsel %vm437, %v2624, 0
    %v2675 = vsel %vm437, %v2627, 0
    %v2678 = vsel %vm437, %v2630, 0
    %v2681 = vsel %vm437, %v2633, 0
    %2683 = vmatpush.msra.mxu0 0.0
    %2684 = vmatpush.msra.mxu0 0.0
    %2685 = vmatpush.msra.mxu0 0.0
    %2686 = vmatpush.msra.mxu0 0.0
    %2687 = vmatpush.msra.mxu0 0.0
    %2688 = vmatpush.msra.mxu0 0.0
    %2689 = vmatpush.msra.mxu0 0.0
    %2690 = vmatpush.msra.mxu0 0.0
    %2691 = vmatpush.msra.mxu0 0.0
    %2692 = vmatpush.msra.mxu0 0.0
    %2693 = vmatpush.msra.mxu0 0.0
    %2694 = vmatpush.msra.mxu0 0.0
    %2695 = vmatpush.msra.mxu0 0.0
    %2696 = vmatpush.msra.mxu0 0.0
    %2697 = vmatpush.msra.mxu0 0.0
    %2698 = vmatpush.msra.mxu0 %v111
    %2699 = vmatmul.f32.gmra.mxu0 %v2636
    %v2700 = vpop.f32.mrf.mxu0
    %v2701 = vadd.f32 0.0, %v2700
    %2702 = vmatmul.f32.gmra.mxu0 %v2639
    %v2703 = vpop.f32.mrf.mxu0
    %v2704 = vadd.f32 0.0, %v2703
    %2705 = vmatmul.f32.gmra.mxu0 %v2642
    %v2706 = vpop.f32.mrf.mxu0
    %v2707 = vadd.f32 0.0, %v2706
    %2708 = vmatmul.f32.gmra.mxu0 %v2645
    %v2709 = vpop.f32.mrf.mxu0
    %v2710 = vadd.f32 0.0, %v2709
    %2711 = vmatmul.f32.gmra.mxu0 %v2648
    %v2712 = vpop.f32.mrf.mxu0
    %v2713 = vadd.f32 0.0, %v2712
    %2714 = vmatmul.f32.gmra.mxu0 %v2651
    %v2715 = vpop.f32.mrf.mxu0
    %v2716 = vadd.f32 0.0, %v2715
    %2717 = vmatmul.f32.gmra.mxu0 %v2654
    %v2718 = vpop.f32.mrf.mxu0
    %v2719 = vadd.f32 0.0, %v2718
    %2720 = vmatmul.f32.gmra.mxu0 %v2657
    %v2721 = vpop.f32.mrf.mxu0
    %v2722 = vadd.f32 0.0, %v2721
    %2723 = vmatmul.f32.gmra.mxu0 %v2660
    %v2724 = vpop.f32.mrf.mxu0
    %v2725 = vadd.f32 0.0, %v2724
    %2726 = vmatmul.f32.gmra.mxu0 %v2663
    %v2727 = vpop.f32.mrf.mxu0
    %v2728 = vadd.f32 0.0, %v2727
    %2729 = vmatmul.f32.gmra.mxu0 %v2666
    %v2730 = vpop.f32.mrf.mxu0
    %v2731 = vadd.f32 0.0, %v2730
    %2732 = vmatmul.f32.gmra.mxu0 %v2669
    %v2733 = vpop.f32.mrf.mxu0
    %v2734 = vadd.f32 0.0, %v2733
    %2735 = vmatmul.f32.gmra.mxu0 %v2672
    %v2736 = vpop.f32.mrf.mxu0
    %v2737 = vadd.f32 0.0, %v2736
    %2738 = vmatmul.f32.gmra.mxu0 %v2675
    %v2739 = vpop.f32.mrf.mxu0
    %v2740 = vadd.f32 0.0, %v2739
    %2741 = vmatmul.f32.gmra.mxu0 %v2678
    %v2742 = vpop.f32.mrf.mxu0
    %v2743 = vadd.f32 0.0, %v2742
    %2744 = vmatmul.f32.gmra.mxu0 %v2681
    %v2745 = vpop.f32.mrf.mxu0
    %v2746 = vadd.f32 0.0, %v2745
    %2747 = vdwg.mxu0
    %v2748 = vadd.f32 %v1909, %v2701
    %v2749 = vadd.f32 %v1912, %v2704
    %v2750 = vadd.f32 %v1915, %v2707
    %v2751 = vadd.f32 %v1918, %v2710
    %v2752 = vadd.f32 %v1921, %v2713
    %v2753 = vadd.f32 %v1924, %v2716
    %v2754 = vadd.f32 %v1927, %v2719
    %v2755 = vadd.f32 %v1930, %v2722
    %v2756 = vadd.f32 %v1933, %v2725
    %v2757 = vadd.f32 %v1936, %v2728
    %v2758 = vadd.f32 %v1939, %v2731
    %v2759 = vadd.f32 %v1942, %v2734
    %v2760 = vadd.f32 %v1945, %v2737
    %v2761 = vadd.f32 %v1948, %v2740
    %v2762 = vadd.f32 %v1951, %v2743
    %v2763 = vadd.f32 %v1954, %v2746
    %2764 = vrot.lane.b32.xlu0 %v193, 104
    %v2765 = vpop.permute.xlu0 %2764
    %2766 = vrot.lane.b32.xlu0 %v196, 104
    %v2767 = vpop.permute.xlu0 %2766
    %2768 = vrot.lane.b32.xlu0 %v199, 104
    %v2769 = vpop.permute.xlu0 %2768
    %2770 = vrot.lane.b32.xlu0 %v202, 104
    %v2771 = vpop.permute.xlu0 %2770
    %2772 = vrot.lane.b32.xlu0 %v205, 104
    %v2773 = vpop.permute.xlu0 %2772
    %2774 = vrot.lane.b32.xlu0 %v208, 104
    %v2775 = vpop.permute.xlu0 %2774
    %2776 = vrot.lane.b32.xlu0 %v211, 104
    %v2777 = vpop.permute.xlu0 %2776
    %2778 = vrot.lane.b32.xlu0 %v214, 104
    %v2779 = vpop.permute.xlu0 %2778
    %2780 = vrot.lane.b32.xlu0 %v217, 104
    %v2781 = vpop.permute.xlu0 %2780
    %2782 = vrot.lane.b32.xlu0 %v220, 104
    %v2783 = vpop.permute.xlu0 %2782
    %2784 = vrot.lane.b32.xlu0 %v223, 104
    %v2785 = vpop.permute.xlu0 %2784
    %2786 = vrot.lane.b32.xlu0 %v226, 104
    %v2787 = vpop.permute.xlu0 %2786
    %2788 = vrot.lane.b32.xlu0 %v229, 104
    %v2789 = vpop.permute.xlu0 %2788
    %2790 = vrot.lane.b32.xlu0 %v232, 104
    %v2791 = vpop.permute.xlu0 %2790
    %2792 = vrot.lane.b32.xlu0 %v235, 104
    %v2793 = vpop.permute.xlu0 %2792
    %2794 = vrot.lane.b32.xlu0 %v238, 104
    %v2795 = vpop.permute.xlu0 %2794
    %2796 = vrot.lane.b32.xlu0 %v307, 104
    %v2797 = vpop.permute.xlu0 %2796
    %2798 = vrot.lane.b32.xlu0 %v310, 104
    %v2799 = vpop.permute.xlu0 %2798
    %2800 = vrot.lane.b32.xlu0 %v313, 104
    %v2801 = vpop.permute.xlu0 %2800
    %2802 = vrot.lane.b32.xlu0 %v316, 104
    %v2803 = vpop.permute.xlu0 %2802
    %2804 = vrot.lane.b32.xlu0 %v319, 104
    %v2805 = vpop.permute.xlu0 %2804
    %2806 = vrot.lane.b32.xlu0 %v322, 104
    %v2807 = vpop.permute.xlu0 %2806
    %2808 = vrot.lane.b32.xlu0 %v325, 104
    %v2809 = vpop.permute.xlu0 %2808
    %2810 = vrot.lane.b32.xlu0 %v328, 104
    %v2811 = vpop.permute.xlu0 %2810
    %2812 = vrot.lane.b32.xlu0 %v331, 104
    %v2813 = vpop.permute.xlu0 %2812
    %2814 = vrot.lane.b32.xlu0 %v334, 104
    %v2815 = vpop.permute.xlu0 %2814
    %2816 = vrot.lane.b32.xlu0 %v337, 104
    %v2817 = vpop.permute.xlu0 %2816
    %2818 = vrot.lane.b32.xlu0 %v340, 104
    %v2819 = vpop.permute.xlu0 %2818
    %2820 = vrot.lane.b32.xlu0 %v343, 104
    %v2821 = vpop.permute.xlu0 %2820
    %2822 = vrot.lane.b32.xlu0 %v346, 104
    %v2823 = vpop.permute.xlu0 %2822
    %2824 = vrot.lane.b32.xlu0 %v349, 104
    %v2825 = vpop.permute.xlu0 %2824
    %2826 = vrot.lane.b32.xlu0 %v352, 104
    %v2827 = vpop.permute.xlu0 %2826
    %v2828 = vsel %vm437, %v2765, 0
    %v2830 = vsel %vm437, %v2767, 0
    %v2832 = vsel %vm437, %v2769, 0
    %v2834 = vsel %vm437, %v2771, 0
    %v2836 = vsel %vm437, %v2773, 0
    %v2838 = vsel %vm437, %v2775, 0
    %v2840 = vsel %vm437, %v2777, 0
    %v2842 = vsel %vm437, %v2779, 0
    %v2844 = vsel %vm437, %v2781, 0
    %v2846 = vsel %vm437, %v2783, 0
    %v2848 = vsel %vm437, %v2785, 0
    %v2850 = vsel %vm437, %v2787, 0
    %v2852 = vsel %vm437, %v2789, 0
    %v2854 = vsel %vm437, %v2791, 0
    %v2856 = vsel %vm437, %v2793, 0
    %v2858 = vsel %vm437, %v2795, 0
    %v2860 = vsel %vm437, %v2797, 0
    %v2862 = vsel %vm437, %v2799, 0
    %v2864 = vsel %vm437, %v2801, 0
    %v2866 = vsel %vm437, %v2803, 0
    %v2868 = vsel %vm437, %v2805, 0
    %v2870 = vsel %vm437, %v2807, 0
    %v2872 = vsel %vm437, %v2809, 0
    %v2874 = vsel %vm437, %v2811, 0
    %v2876 = vsel %vm437, %v2813, 0
    %v2878 = vsel %vm437, %v2815, 0
    %v2880 = vsel %vm437, %v2817, 0
    %v2882 = vsel %vm437, %v2819, 0
    %v2884 = vsel %vm437, %v2821, 0
    %v2886 = vsel %vm437, %v2823, 0
    %v2888 = vsel %vm437, %v2825, 0
    %v2890 = vsel %vm437, %v2827, 0
    %2892 = vmatpush.xpose.msra.mxu0 %v2890
    %2893 = vmatpush.xpose.msra.mxu0 %v2888
    %2894 = vmatpush.xpose.msra.mxu0 %v2886
    %2895 = vmatpush.xpose.msra.mxu0 %v2884
    %2896 = vmatpush.xpose.msra.mxu0 %v2882
    %2897 = vmatpush.xpose.msra.mxu0 %v2880
    %2898 = vmatpush.xpose.msra.mxu0 %v2878
    %2899 = vmatpush.xpose.msra.mxu0 %v2876
    %2900 = vmatpush.xpose.msra.mxu0 %v2874
    %2901 = vmatpush.xpose.msra.mxu0 %v2872
    %2902 = vmatpush.xpose.msra.mxu0 %v2870
    %2903 = vmatpush.xpose.msra.mxu0 %v2868
    %2904 = vmatpush.xpose.msra.mxu0 %v2866
    %2905 = vmatpush.xpose.msra.mxu0 %v2864
    %2906 = vmatpush.xpose.msra.mxu0 %v2862
    %2907 = vmatpush.xpose.msra.mxu0 %v2860
    %2908 = vmatmul.f32.gmra.mxu0 %v2828
    %v2909 = vpop.f32.mrf.mxu0
    %v2910 = vadd.f32 %v420, %v2909
    %2911 = vmatmul.f32.gmra.mxu0 %v2830
    %v2912 = vpop.f32.mrf.mxu0
    %v2913 = vadd.f32 %v421, %v2912
    %2914 = vmatmul.f32.gmra.mxu0 %v2832
    %v2915 = vpop.f32.mrf.mxu0
    %v2916 = vadd.f32 %v422, %v2915
    %2917 = vmatmul.f32.gmra.mxu0 %v2834
    %v2918 = vpop.f32.mrf.mxu0
    %v2919 = vadd.f32 %v423, %v2918
    %2920 = vmatmul.f32.gmra.mxu0 %v2836
    %v2921 = vpop.f32.mrf.mxu0
    %v2922 = vadd.f32 %v424, %v2921
    %2923 = vmatmul.f32.gmra.mxu0 %v2838
    %v2924 = vpop.f32.mrf.mxu0
    %v2925 = vadd.f32 %v425, %v2924
    %2926 = vmatmul.f32.gmra.mxu0 %v2840
    %v2927 = vpop.f32.mrf.mxu0
    %v2928 = vadd.f32 %v426, %v2927
    %2929 = vmatmul.f32.gmra.mxu0 %v2842
    %v2930 = vpop.f32.mrf.mxu0
    %v2931 = vadd.f32 %v427, %v2930
    %2932 = vmatmul.f32.gmra.mxu0 %v2844
    %v2933 = vpop.f32.mrf.mxu0
    %v2934 = vadd.f32 %v428, %v2933
    %2935 = vmatmul.f32.gmra.mxu0 %v2846
    %v2936 = vpop.f32.mrf.mxu0
    %v2937 = vadd.f32 %v429, %v2936
    %2938 = vmatmul.f32.gmra.mxu0 %v2848
    %v2939 = vpop.f32.mrf.mxu0
    %v2940 = vadd.f32 %v430, %v2939
    %2941 = vmatmul.f32.gmra.mxu0 %v2850
    %v2942 = vpop.f32.mrf.mxu0
    %v2943 = vadd.f32 %v431, %v2942
    %2944 = vmatmul.f32.gmra.mxu0 %v2852
    %v2945 = vpop.f32.mrf.mxu0
    %v2946 = vadd.f32 %v432, %v2945
    %2947 = vmatmul.f32.gmra.mxu0 %v2854
    %v2948 = vpop.f32.mrf.mxu0
    %v2949 = vadd.f32 %v433, %v2948
    %2950 = vmatmul.f32.gmra.mxu0 %v2856
    %v2951 = vpop.f32.mrf.mxu0
    %v2952 = vadd.f32 %v434, %v2951
    %2953 = vmatmul.f32.gmra.mxu0 %v2858
    %v2954 = vpop.f32.mrf.mxu0
    %v2955 = vadd.f32 %v435, %v2954
    %2956 = vdwg.mxu0
    %2957 = vmax.xlane.f32.xlu0 %v2910
    %v2958 = vpop.xlane.xlu0 %2957
    %2959 = vmax.xlane.f32.xlu0 %v2913
    %v2960 = vpop.xlane.xlu0 %2959
    %2961 = vmax.xlane.f32.xlu0 %v2916
    %v2962 = vpop.xlane.xlu0 %2961
    %2963 = vmax.xlane.f32.xlu0 %v2919
    %v2964 = vpop.xlane.xlu0 %2963
    %2965 = vmax.xlane.f32.xlu0 %v2922
    %v2966 = vpop.xlane.xlu0 %2965
    %2967 = vmax.xlane.f32.xlu0 %v2925
    %v2968 = vpop.xlane.xlu0 %2967
    %2969 = vmax.xlane.f32.xlu0 %v2928
    %v2970 = vpop.xlane.xlu0 %2969
    %2971 = vmax.xlane.f32.xlu0 %v2931
    %v2972 = vpop.xlane.xlu0 %2971
    %2973 = vmax.xlane.f32.xlu0 %v2934
    %v2974 = vpop.xlane.xlu0 %2973
    %2975 = vmax.xlane.f32.xlu0 %v2937
    %v2976 = vpop.xlane.xlu0 %2975
    %2977 = vmax.xlane.f32.xlu0 %v2940
    %v2978 = vpop.xlane.xlu0 %2977
    %2979 = vmax.xlane.f32.xlu0 %v2943
    %v2980 = vpop.xlane.xlu0 %2979
    %2981 = vmax.xlane.f32.xlu0 %v2946
    %v2982 = vpop.xlane.xlu0 %2981
    %2983 = vmax.xlane.f32.xlu0 %v2949
    %v2984 = vpop.xlane.xlu0 %2983
    %2985 = vmax.xlane.f32.xlu0 %v2952
    %v2986 = vpop.xlane.xlu0 %2985
    %2987 = vmax.xlane.f32.xlu0 %v2955
    %v2988 = vpop.xlane.xlu0 %2987
    %v2989 = vsub.f32 %v2910, %v2958
    %v2990 = vsub.f32 %v2913, %v2960
    %v2991 = vsub.f32 %v2916, %v2962
    %v2992 = vsub.f32 %v2919, %v2964
    %v2993 = vsub.f32 %v2922, %v2966
    %v2994 = vsub.f32 %v2925, %v2968
    %v2995 = vsub.f32 %v2928, %v2970
    %v2996 = vsub.f32 %v2931, %v2972
    %v2997 = vsub.f32 %v2934, %v2974
    %v2998 = vsub.f32 %v2937, %v2976
    %v2999 = vsub.f32 %v2940, %v2978
    %v3000 = vsub.f32 %v2943, %v2980
    %v3001 = vsub.f32 %v2946, %v2982
    %v3002 = vsub.f32 %v2949, %v2984
    %v3003 = vsub.f32 %v2952, %v2986
    %v3004 = vsub.f32 %v2955, %v2988
    %v3005 = vmul.f32 %v2989, 1.442695
    %v3006 = vpow.pop %v3005
    %v3007 = vmul.f32 %v2990, 1.442695
    %v3008 = vpow.pop %v3007
    %v3009 = vmul.f32 %v2991, 1.442695
    %v3010 = vpow.pop %v3009
    %v3011 = vmul.f32 %v2992, 1.442695
    %v3012 = vpow.pop %v3011
    %v3013 = vmul.f32 %v2993, 1.442695
    %v3014 = vpow.pop %v3013
    %v3015 = vmul.f32 %v2994, 1.442695
    %v3016 = vpow.pop %v3015
    %v3017 = vmul.f32 %v2995, 1.442695
    %v3018 = vpow.pop %v3017
    %v3019 = vmul.f32 %v2996, 1.442695
    %v3020 = vpow.pop %v3019
    %v3021 = vmul.f32 %v2997, 1.442695
    %v3022 = vpow.pop %v3021
    %v3023 = vmul.f32 %v2998, 1.442695
    %v3024 = vpow.pop %v3023
    %v3025 = vmul.f32 %v2999, 1.442695
    %v3026 = vpow.pop %v3025
    %v3027 = vmul.f32 %v3000, 1.442695
    %v3028 = vpow.pop %v3027
    %v3029 = vmul.f32 %v3001, 1.442695
    %v3030 = vpow.pop %v3029
    %v3031 = vmul.f32 %v3002, 1.442695
    %v3032 = vpow.pop %v3031
    %v3033 = vmul.f32 %v3003, 1.442695
    %v3034 = vpow.pop %v3033
    %v3035 = vmul.f32 %v3004, 1.442695
    %v3036 = vpow.pop %v3035
    %3037 = vadd.xlane.f32.xlu0 %v3006
    %v3038 = vpop.xlane.xlu0 %3037
    %3039 = vadd.xlane.f32.xlu0 %v3008
    %v3040 = vpop.xlane.xlu0 %3039
    %3041 = vadd.xlane.f32.xlu0 %v3010
    %v3042 = vpop.xlane.xlu0 %3041
    %3043 = vadd.xlane.f32.xlu0 %v3012
    %v3044 = vpop.xlane.xlu0 %3043
    %3045 = vadd.xlane.f32.xlu0 %v3014
    %v3046 = vpop.xlane.xlu0 %3045
    %3047 = vadd.xlane.f32.xlu0 %v3016
    %v3048 = vpop.xlane.xlu0 %3047
    %3049 = vadd.xlane.f32.xlu0 %v3018
    %v3050 = vpop.xlane.xlu0 %3049
    %3051 = vadd.xlane.f32.xlu0 %v3020
    %v3052 = vpop.xlane.xlu0 %3051
    %3053 = vadd.xlane.f32.xlu0 %v3022
    %v3054 = vpop.xlane.xlu0 %3053
    %3055 = vadd.xlane.f32.xlu0 %v3024
    %v3056 = vpop.xlane.xlu0 %3055
    %3057 = vadd.xlane.f32.xlu0 %v3026
    %v3058 = vpop.xlane.xlu0 %3057
    %3059 = vadd.xlane.f32.xlu0 %v3028
    %v3060 = vpop.xlane.xlu0 %3059
    %3061 = vadd.xlane.f32.xlu0 %v3030
    %v3062 = vpop.xlane.xlu0 %3061
    %3063 = vadd.xlane.f32.xlu0 %v3032
    %v3064 = vpop.xlane.xlu0 %3063
    %3065 = vadd.xlane.f32.xlu0 %v3034
    %v3066 = vpop.xlane.xlu0 %3065
    %3067 = vadd.xlane.f32.xlu0 %v3036
    %v3068 = vpop.xlane.xlu0 %3067
    %v3069 = vrcp.pop %v3038
    %v3070 = vmul.f32 %v3038, %v3069
    %v3071 = vsub.f32 1.0, %v3070
    %v3072 = vmul.f32 %v3069, %v3071
    %v3073 = vadd.f32 %v3069, %v3072
    %vm3074 = vweird.f32 %v3038
    %vm3075 = vweird.f32 %v3069
    %vm3076 = vmor %vm3074, %vm3075
    %v3077 = vsel %vm3076, %v3069, %v3073
    %v3078 = vand.u32 2147483647, %v3038
    %vm3079 = vcmp.eq.f32.partialorder %v3078, 8.507059e+37
    %v3080 = vand.u32 %v3038, 2147483648
    %v3081 = vor.u32 1.1754944e-38, %v3080
    %v3082 = vsel %vm3079, %v3081, %v3077
    %v3083 = vrcp.pop %v3040
    %v3084 = vmul.f32 %v3040, %v3083
    %v3085 = vsub.f32 1.0, %v3084
    %v3086 = vmul.f32 %v3083, %v3085
    %v3087 = vadd.f32 %v3083, %v3086
    %vm3088 = vweird.f32 %v3040
    %vm3089 = vweird.f32 %v3083
    %vm3090 = vmor %vm3088, %vm3089
    %v3091 = vsel %vm3090, %v3083, %v3087
    %v3092 = vand.u32 2147483647, %v3040
    %vm3093 = vcmp.eq.f32.partialorder %v3092, 8.507059e+37
    %v3094 = vand.u32 %v3040, 2147483648
    %v3095 = vor.u32 1.1754944e-38, %v3094
    %v3096 = vsel %vm3093, %v3095, %v3091
    %v3097 = vrcp.pop %v3042
    %v3098 = vmul.f32 %v3042, %v3097
    %v3099 = vsub.f32 1.0, %v3098
    %v3100 = vmul.f32 %v3097, %v3099
    %v3101 = vadd.f32 %v3097, %v3100
    %vm3102 = vweird.f32 %v3042
    %vm3103 = vweird.f32 %v3097
    %vm3104 = vmor %vm3102, %vm3103
    %v3105 = vsel %vm3104, %v3097, %v3101
    %v3106 = vand.u32 2147483647, %v3042
    %vm3107 = vcmp.eq.f32.partialorder %v3106, 8.507059e+37
    %v3108 = vand.u32 %v3042, 2147483648
    %v3109 = vor.u32 1.1754944e-38, %v3108
    %v3110 = vsel %vm3107, %v3109, %v3105
    %v3111 = vrcp.pop %v3044
    %v3112 = vmul.f32 %v3044, %v3111
    %v3113 = vsub.f32 1.0, %v3112
    %v3114 = vmul.f32 %v3111, %v3113
    %v3115 = vadd.f32 %v3111, %v3114
    %vm3116 = vweird.f32 %v3044
    %vm3117 = vweird.f32 %v3111
    %vm3118 = vmor %vm3116, %vm3117
    %v3119 = vsel %vm3118, %v3111, %v3115
    %v3120 = vand.u32 2147483647, %v3044
    %vm3121 = vcmp.eq.f32.partialorder %v3120, 8.507059e+37
    %v3122 = vand.u32 %v3044, 2147483648
    %v3123 = vor.u32 1.1754944e-38, %v3122
    %v3124 = vsel %vm3121, %v3123, %v3119
    %v3125 = vrcp.pop %v3046
    %v3126 = vmul.f32 %v3046, %v3125
    %v3127 = vsub.f32 1.0, %v3126
    %v3128 = vmul.f32 %v3125, %v3127
    %v3129 = vadd.f32 %v3125, %v3128
    %vm3130 = vweird.f32 %v3046
    %vm3131 = vweird.f32 %v3125
    %vm3132 = vmor %vm3130, %vm3131
    %v3133 = vsel %vm3132, %v3125, %v3129
    %v3134 = vand.u32 2147483647, %v3046
    %vm3135 = vcmp.eq.f32.partialorder %v3134, 8.507059e+37
    %v3136 = vand.u32 %v3046, 2147483648
    %v3137 = vor.u32 1.1754944e-38, %v3136
    %v3138 = vsel %vm3135, %v3137, %v3133
    %v3139 = vrcp.pop %v3048
    %v3140 = vmul.f32 %v3048, %v3139
    %v3141 = vsub.f32 1.0, %v3140
    %v3142 = vmul.f32 %v3139, %v3141
    %v3143 = vadd.f32 %v3139, %v3142
    %vm3144 = vweird.f32 %v3048
    %vm3145 = vweird.f32 %v3139
    %vm3146 = vmor %vm3144, %vm3145
    %v3147 = vsel %vm3146, %v3139, %v3143
    %v3148 = vand.u32 2147483647, %v3048
    %vm3149 = vcmp.eq.f32.partialorder %v3148, 8.507059e+37
    %v3150 = vand.u32 %v3048, 2147483648
    %v3151 = vor.u32 1.1754944e-38, %v3150
    %v3152 = vsel %vm3149, %v3151, %v3147
    %v3153 = vrcp.pop %v3050
    %v3154 = vmul.f32 %v3050, %v3153
    %v3155 = vsub.f32 1.0, %v3154
    %v3156 = vmul.f32 %v3153, %v3155
    %v3157 = vadd.f32 %v3153, %v3156
    %vm3158 = vweird.f32 %v3050
    %vm3159 = vweird.f32 %v3153
    %vm3160 = vmor %vm3158, %vm3159
    %v3161 = vsel %vm3160, %v3153, %v3157
    %v3162 = vand.u32 2147483647, %v3050
    %vm3163 = vcmp.eq.f32.partialorder %v3162, 8.507059e+37
    %v3164 = vand.u32 %v3050, 2147483648
    %v3165 = vor.u32 1.1754944e-38, %v3164
    %v3166 = vsel %vm3163, %v3165, %v3161
    %v3167 = vrcp.pop %v3052
    %v3168 = vmul.f32 %v3052, %v3167
    %v3169 = vsub.f32 1.0, %v3168
    %v3170 = vmul.f32 %v3167, %v3169
    %v3171 = vadd.f32 %v3167, %v3170
    %vm3172 = vweird.f32 %v3052
    %vm3173 = vweird.f32 %v3167
    %vm3174 = vmor %vm3172, %vm3173
    %v3175 = vsel %vm3174, %v3167, %v3171
    %v3176 = vand.u32 2147483647, %v3052
    %vm3177 = vcmp.eq.f32.partialorder %v3176, 8.507059e+37
    %v3178 = vand.u32 %v3052, 2147483648
    %v3179 = vor.u32 1.1754944e-38, %v3178
    %v3180 = vsel %vm3177, %v3179, %v3175
    %v3181 = vrcp.pop %v3054
    %v3182 = vmul.f32 %v3054, %v3181
    %v3183 = vsub.f32 1.0, %v3182
    %v3184 = vmul.f32 %v3181, %v3183
    %v3185 = vadd.f32 %v3181, %v3184
    %vm3186 = vweird.f32 %v3054
    %vm3187 = vweird.f32 %v3181
    %vm3188 = vmor %vm3186, %vm3187
    %v3189 = vsel %vm3188, %v3181, %v3185
    %v3190 = vand.u32 2147483647, %v3054
    %vm3191 = vcmp.eq.f32.partialorder %v3190, 8.507059e+37
    %v3192 = vand.u32 %v3054, 2147483648
    %v3193 = vor.u32 1.1754944e-38, %v3192
    %v3194 = vsel %vm3191, %v3193, %v3189
    %v3195 = vrcp.pop %v3056
    %v3196 = vmul.f32 %v3056, %v3195
    %v3197 = vsub.f32 1.0, %v3196
    %v3198 = vmul.f32 %v3195, %v3197
    %v3199 = vadd.f32 %v3195, %v3198
    %vm3200 = vweird.f32 %v3056
    %vm3201 = vweird.f32 %v3195
    %vm3202 = vmor %vm3200, %vm3201
    %v3203 = vsel %vm3202, %v3195, %v3199
    %v3204 = vand.u32 2147483647, %v3056
    %vm3205 = vcmp.eq.f32.partialorder %v3204, 8.507059e+37
    %v3206 = vand.u32 %v3056, 2147483648
    %v3207 = vor.u32 1.1754944e-38, %v3206
    %v3208 = vsel %vm3205, %v3207, %v3203
    %v3209 = vrcp.pop %v3058
    %v3210 = vmul.f32 %v3058, %v3209
    %v3211 = vsub.f32 1.0, %v3210
    %v3212 = vmul.f32 %v3209, %v3211
    %v3213 = vadd.f32 %v3209, %v3212
    %vm3214 = vweird.f32 %v3058
    %vm3215 = vweird.f32 %v3209
    %vm3216 = vmor %vm3214, %vm3215
    %v3217 = vsel %vm3216, %v3209, %v3213
    %v3218 = vand.u32 2147483647, %v3058
    %vm3219 = vcmp.eq.f32.partialorder %v3218, 8.507059e+37
    %v3220 = vand.u32 %v3058, 2147483648
    %v3221 = vor.u32 1.1754944e-38, %v3220
    %v3222 = vsel %vm3219, %v3221, %v3217
    %v3223 = vrcp.pop %v3060
    %v3224 = vmul.f32 %v3060, %v3223
    %v3225 = vsub.f32 1.0, %v3224
    %v3226 = vmul.f32 %v3223, %v3225
    %v3227 = vadd.f32 %v3223, %v3226
    %vm3228 = vweird.f32 %v3060
    %vm3229 = vweird.f32 %v3223
    %vm3230 = vmor %vm3228, %vm3229
    %v3231 = vsel %vm3230, %v3223, %v3227
    %v3232 = vand.u32 2147483647, %v3060
    %vm3233 = vcmp.eq.f32.partialorder %v3232, 8.507059e+37
    %v3234 = vand.u32 %v3060, 2147483648
    %v3235 = vor.u32 1.1754944e-38, %v3234
    %v3236 = vsel %vm3233, %v3235, %v3231
    %v3237 = vrcp.pop %v3062
    %v3238 = vmul.f32 %v3062, %v3237
    %v3239 = vsub.f32 1.0, %v3238
    %v3240 = vmul.f32 %v3237, %v3239
    %v3241 = vadd.f32 %v3237, %v3240
    %vm3242 = vweird.f32 %v3062
    %vm3243 = vweird.f32 %v3237
    %vm3244 = vmor %vm3242, %vm3243
    %v3245 = vsel %vm3244, %v3237, %v3241
    %v3246 = vand.u32 2147483647, %v3062
    %vm3247 = vcmp.eq.f32.partialorder %v3246, 8.507059e+37
    %v3248 = vand.u32 %v3062, 2147483648
    %v3249 = vor.u32 1.1754944e-38, %v3248
    %v3250 = vsel %vm3247, %v3249, %v3245
    %v3251 = vrcp.pop %v3064
    %v3252 = vmul.f32 %v3064, %v3251
    %v3253 = vsub.f32 1.0, %v3252
    %v3254 = vmul.f32 %v3251, %v3253
    %v3255 = vadd.f32 %v3251, %v3254
    %vm3256 = vweird.f32 %v3064
    %vm3257 = vweird.f32 %v3251
    %vm3258 = vmor %vm3256, %vm3257
    %v3259 = vsel %vm3258, %v3251, %v3255
    %v3260 = vand.u32 2147483647, %v3064
    %vm3261 = vcmp.eq.f32.partialorder %v3260, 8.507059e+37
    %v3262 = vand.u32 %v3064, 2147483648
    %v3263 = vor.u32 1.1754944e-38, %v3262
    %v3264 = vsel %vm3261, %v3263, %v3259
    %v3265 = vrcp.pop %v3066
    %v3266 = vmul.f32 %v3066, %v3265
    %v3267 = vsub.f32 1.0, %v3266
    %v3268 = vmul.f32 %v3265, %v3267
    %v3269 = vadd.f32 %v3265, %v3268
    %vm3270 = vweird.f32 %v3066
    %vm3271 = vweird.f32 %v3265
    %vm3272 = vmor %vm3270, %vm3271
    %v3273 = vsel %vm3272, %v3265, %v3269
    %v3274 = vand.u32 2147483647, %v3066
    %vm3275 = vcmp.eq.f32.partialorder %v3274, 8.507059e+37
    %v3276 = vand.u32 %v3066, 2147483648
    %v3277 = vor.u32 1.1754944e-38, %v3276
    %v3278 = vsel %vm3275, %v3277, %v3273
    %v3279 = vrcp.pop %v3068
    %v3280 = vmul.f32 %v3068, %v3279
    %v3281 = vsub.f32 1.0, %v3280
    %v3282 = vmul.f32 %v3279, %v3281
    %v3283 = vadd.f32 %v3279, %v3282
    %vm3284 = vweird.f32 %v3068
    %vm3285 = vweird.f32 %v3279
    %vm3286 = vmor %vm3284, %vm3285
    %v3287 = vsel %vm3286, %v3279, %v3283
    %v3288 = vand.u32 2147483647, %v3068
    %vm3289 = vcmp.eq.f32.partialorder %v3288, 8.507059e+37
    %v3290 = vand.u32 %v3068, 2147483648
    %v3291 = vor.u32 1.1754944e-38, %v3290
    %v3292 = vsel %vm3289, %v3291, %v3287
    %v3293 = vmul.f32 %v3006, %v3082
    %v3294 = vmul.f32 %v3008, %v3096
    %v3295 = vmul.f32 %v3010, %v3110
    %v3296 = vmul.f32 %v3012, %v3124
    %v3297 = vmul.f32 %v3014, %v3138
    %v3298 = vmul.f32 %v3016, %v3152
    %v3299 = vmul.f32 %v3018, %v3166
    %v3300 = vmul.f32 %v3020, %v3180
    %v3301 = vmul.f32 %v3022, %v3194
    %v3302 = vmul.f32 %v3024, %v3208
    %v3303 = vmul.f32 %v3026, %v3222
    %v3304 = vmul.f32 %v3028, %v3236
    %v3305 = vmul.f32 %v3030, %v3250
    %v3306 = vmul.f32 %v3032, %v3264
    %v3307 = vmul.f32 %v3034, %v3278
    %v3308 = vmul.f32 %v3036, %v3292
    %3309 = vmatpush.msra.mxu0 %v3308
    %3310 = vmatpush.msra.mxu0 %v3307
    %3311 = vmatpush.msra.mxu0 %v3306
    %3312 = vmatpush.msra.mxu0 %v3305
    %3313 = vmatpush.msra.mxu0 %v3304
    %3314 = vmatpush.msra.mxu0 %v3303
    %3315 = vmatpush.msra.mxu0 %v3302
    %3316 = vmatpush.msra.mxu0 %v3301
    %3317 = vmatpush.msra.mxu0 %v3300
    %3318 = vmatpush.msra.mxu0 %v3299
    %3319 = vmatpush.msra.mxu0 %v3298
    %3320 = vmatpush.msra.mxu0 %v3297
    %3321 = vmatpush.msra.mxu0 %v3296
    %3322 = vmatpush.msra.mxu0 %v3295
    %3323 = vmatpush.msra.mxu0 %v3294
    %3324 = vmatpush.msra.mxu0 %v3293
    %3325 = vmatmul.f32.gmra.mxu0 %v436
    %v3326 = vpop.f32.mrf.mxu0
    %v3327 = vadd.f32 0.0, %v3326
    %3328 = vdwg.mxu0
    %v3329 = vadd.f32 %v2521, %v3327
    %3330 = vrot.lane.b32.xlu0 %v373, 104
    %v3331 = vpop.permute.xlu0 %3330
    %3332 = vrot.lane.b32.xlu0 %v376, 104
    %v3333 = vpop.permute.xlu0 %3332
    %3334 = vrot.lane.b32.xlu0 %v379, 104
    %v3335 = vpop.permute.xlu0 %3334
    %3336 = vrot.lane.b32.xlu0 %v382, 104
    %v3337 = vpop.permute.xlu0 %3336
    %3338 = vrot.lane.b32.xlu0 %v385, 104
    %v3339 = vpop.permute.xlu0 %3338
    %3340 = vrot.lane.b32.xlu0 %v388, 104
    %v3341 = vpop.permute.xlu0 %3340
    %3342 = vrot.lane.b32.xlu0 %v391, 104
    %v3343 = vpop.permute.xlu0 %3342
    %3344 = vrot.lane.b32.xlu0 %v394, 104
    %v3345 = vpop.permute.xlu0 %3344
    %3346 = vrot.lane.b32.xlu0 %v397, 104
    %v3347 = vpop.permute.xlu0 %3346
    %3348 = vrot.lane.b32.xlu0 %v400, 104
    %v3349 = vpop.permute.xlu0 %3348
    %3350 = vrot.lane.b32.xlu0 %v403, 104
    %v3351 = vpop.permute.xlu0 %3350
    %3352 = vrot.lane.b32.xlu0 %v406, 104
    %v3353 = vpop.permute.xlu0 %3352
    %3354 = vrot.lane.b32.xlu0 %v409, 104
    %v3355 = vpop.permute.xlu0 %3354
    %3356 = vrot.lane.b32.xlu0 %v412, 104
    %v3357 = vpop.permute.xlu0 %3356
    %3358 = vrot.lane.b32.xlu0 %v415, 104
    %v3359 = vpop.permute.xlu0 %3358
    %3360 = vrot.lane.b32.xlu0 %v418, 104
    %v3361 = vpop.permute.xlu0 %3360
    %3378 = vmatpush.msra.mxu0 %v3361
    %3379 = vmatpush.msra.mxu0 %v3359
    %3380 = vmatpush.msra.mxu0 %v3357
    %3381 = vmatpush.msra.mxu0 %v3355
    %3382 = vmatpush.msra.mxu0 %v3353
    %3383 = vmatpush.msra.mxu0 %v3351
    %3384 = vmatpush.msra.mxu0 %v3349
    %3385 = vmatpush.msra.mxu0 %v3347
    %3386 = vmatpush.msra.mxu0 %v3345
    %3387 = vmatpush.msra.mxu0 %v3343
    %3388 = vmatpush.msra.mxu0 %v3341
    %3389 = vmatpush.msra.mxu0 %v3339
    %3390 = vmatpush.msra.mxu0 %v3337
    %3391 = vmatpush.msra.mxu0 %v3335
    %3392 = vmatpush.msra.mxu0 %v3333
    %3393 = vmatpush.msra.mxu0 %v3331
    %3394 = vmatmul.f32.gmra.mxu0 %v3293
    %v3395 = vpop.f32.mrf.mxu0
    %v3396 = vadd.f32 0.0, %v3395
    %3397 = vmatmul.f32.gmra.mxu0 %v3294
    %v3398 = vpop.f32.mrf.mxu0
    %v3399 = vadd.f32 0.0, %v3398
    %3400 = vmatmul.f32.gmra.mxu0 %v3295
    %v3401 = vpop.f32.mrf.mxu0
    %v3402 = vadd.f32 0.0, %v3401
    %3403 = vmatmul.f32.gmra.mxu0 %v3296
    %v3404 = vpop.f32.mrf.mxu0
    %v3405 = vadd.f32 0.0, %v3404
    %3406 = vmatmul.f32.gmra.mxu0 %v3297
    %v3407 = vpop.f32.mrf.mxu0
    %v3408 = vadd.f32 0.0, %v3407
    %3409 = vmatmul.f32.gmra.mxu0 %v3298
    %v3410 = vpop.f32.mrf.mxu0
    %v3411 = vadd.f32 0.0, %v3410
    %3412 = vmatmul.f32.gmra.mxu0 %v3299
    %v3413 = vpop.f32.mrf.mxu0
    %v3414 = vadd.f32 0.0, %v3413
    %3415 = vmatmul.f32.gmra.mxu0 %v3300
    %v3416 = vpop.f32.mrf.mxu0
    %v3417 = vadd.f32 0.0, %v3416
    %3418 = vmatmul.f32.gmra.mxu0 %v3301
    %v3419 = vpop.f32.mrf.mxu0
    %v3420 = vadd.f32 0.0, %v3419
    %3421 = vmatmul.f32.gmra.mxu0 %v3302
    %v3422 = vpop.f32.mrf.mxu0
    %v3423 = vadd.f32 0.0, %v3422
    %3424 = vmatmul.f32.gmra.mxu0 %v3303
    %v3425 = vpop.f32.mrf.mxu0
    %v3426 = vadd.f32 0.0, %v3425
    %3427 = vmatmul.f32.gmra.mxu0 %v3304
    %v3428 = vpop.f32.mrf.mxu0
    %v3429 = vadd.f32 0.0, %v3428
    %3430 = vmatmul.f32.gmra.mxu0 %v3305
    %v3431 = vpop.f32.mrf.mxu0
    %v3432 = vadd.f32 0.0, %v3431
    %3433 = vmatmul.f32.gmra.mxu0 %v3306
    %v3434 = vpop.f32.mrf.mxu0
    %v3435 = vadd.f32 0.0, %v3434
    %3436 = vmatmul.f32.gmra.mxu0 %v3307
    %v3437 = vpop.f32.mrf.mxu0
    %v3438 = vadd.f32 0.0, %v3437
    %3439 = vmatmul.f32.gmra.mxu0 %v3308
    %v3440 = vpop.f32.mrf.mxu0
    %v3441 = vadd.f32 0.0, %v3440
    %3442 = vdwg.mxu0
    %v3444 = vsel %vm437, %v3396, 0
    %v3447 = vsel %vm437, %v3399, 0
    %v3450 = vsel %vm437, %v3402, 0
    %v3453 = vsel %vm437, %v3405, 0
    %v3456 = vsel %vm437, %v3408, 0
    %v3459 = vsel %vm437, %v3411, 0
    %v3462 = vsel %vm437, %v3414, 0
    %v3465 = vsel %vm437, %v3417, 0
    %v3468 = vsel %vm437, %v3420, 0
    %v3471 = vsel %vm437, %v3423, 0
    %v3474 = vsel %vm437, %v3426, 0
    %v3477 = vsel %vm437, %v3429, 0
    %v3480 = vsel %vm437, %v3432, 0
    %v3483 = vsel %vm437, %v3435, 0
    %v3486 = vsel %vm437, %v3438, 0
    %v3489 = vsel %vm437, %v3441, 0
    %3491 = vmatpush.msra.mxu0 0.0
    %3492 = vmatpush.msra.mxu0 0.0
    %3493 = vmatpush.msra.mxu0 0.0
    %3494 = vmatpush.msra.mxu0 0.0
    %3495 = vmatpush.msra.mxu0 0.0
    %3496 = vmatpush.msra.mxu0 0.0
    %3497 = vmatpush.msra.mxu0 0.0
    %3498 = vmatpush.msra.mxu0 0.0
    %3499 = vmatpush.msra.mxu0 0.0
    %3500 = vmatpush.msra.mxu0 0.0
    %3501 = vmatpush.msra.mxu0 0.0
    %3502 = vmatpush.msra.mxu0 0.0
    %3503 = vmatpush.msra.mxu0 0.0
    %3504 = vmatpush.msra.mxu0 0.0
    %3505 = vmatpush.msra.mxu0 0.0
    %3506 = vmatpush.msra.mxu0 %v112
    %3507 = vmatmul.f32.gmra.mxu0 %v3444
    %v3508 = vpop.f32.mrf.mxu0
    %v3509 = vadd.f32 0.0, %v3508
    %3510 = vmatmul.f32.gmra.mxu0 %v3447
    %v3511 = vpop.f32.mrf.mxu0
    %v3512 = vadd.f32 0.0, %v3511
    %3513 = vmatmul.f32.gmra.mxu0 %v3450
    %v3514 = vpop.f32.mrf.mxu0
    %v3515 = vadd.f32 0.0, %v3514
    %3516 = vmatmul.f32.gmra.mxu0 %v3453
    %v3517 = vpop.f32.mrf.mxu0
    %v3518 = vadd.f32 0.0, %v3517
    %3519 = vmatmul.f32.gmra.mxu0 %v3456
    %v3520 = vpop.f32.mrf.mxu0
    %v3521 = vadd.f32 0.0, %v3520
    %3522 = vmatmul.f32.gmra.mxu0 %v3459
    %v3523 = vpop.f32.mrf.mxu0
    %v3524 = vadd.f32 0.0, %v3523
    %3525 = vmatmul.f32.gmra.mxu0 %v3462
    %v3526 = vpop.f32.mrf.mxu0
    %v3527 = vadd.f32 0.0, %v3526
    %3528 = vmatmul.f32.gmra.mxu0 %v3465
    %v3529 = vpop.f32.mrf.mxu0
    %v3530 = vadd.f32 0.0, %v3529
    %3531 = vmatmul.f32.gmra.mxu0 %v3468
    %v3532 = vpop.f32.mrf.mxu0
    %v3533 = vadd.f32 0.0, %v3532
    %3534 = vmatmul.f32.gmra.mxu0 %v3471
    %v3535 = vpop.f32.mrf.mxu0
    %v3536 = vadd.f32 0.0, %v3535
    %3537 = vmatmul.f32.gmra.mxu0 %v3474
    %v3538 = vpop.f32.mrf.mxu0
    %v3539 = vadd.f32 0.0, %v3538
    %3540 = vmatmul.f32.gmra.mxu0 %v3477
    %v3541 = vpop.f32.mrf.mxu0
    %v3542 = vadd.f32 0.0, %v3541
    %3543 = vmatmul.f32.gmra.mxu0 %v3480
    %v3544 = vpop.f32.mrf.mxu0
    %v3545 = vadd.f32 0.0, %v3544
    %3546 = vmatmul.f32.gmra.mxu0 %v3483
    %v3547 = vpop.f32.mrf.mxu0
    %v3548 = vadd.f32 0.0, %v3547
    %3549 = vmatmul.f32.gmra.mxu0 %v3486
    %v3550 = vpop.f32.mrf.mxu0
    %v3551 = vadd.f32 0.0, %v3550
    %3552 = vmatmul.f32.gmra.mxu0 %v3489
    %v3553 = vpop.f32.mrf.mxu0
    %v3554 = vadd.f32 0.0, %v3553
    %3555 = vdwg.mxu0
    %v3556 = vadd.f32 %v2748, %v3509
    %v3557 = vadd.f32 %v2749, %v3512
    %v3558 = vadd.f32 %v2750, %v3515
    %v3559 = vadd.f32 %v2751, %v3518
    %v3560 = vadd.f32 %v2752, %v3521
    %v3561 = vadd.f32 %v2753, %v3524
    %v3562 = vadd.f32 %v2754, %v3527
    %v3563 = vadd.f32 %v2755, %v3530
    %v3564 = vadd.f32 %v2756, %v3533
    %v3565 = vadd.f32 %v2757, %v3536
    %v3566 = vadd.f32 %v2758, %v3539
    %v3567 = vadd.f32 %v2759, %v3542
    %v3568 = vadd.f32 %v2760, %v3545
    %v3569 = vadd.f32 %v2761, %v3548
    %v3570 = vadd.f32 %v2762, %v3551
    %v3571 = vadd.f32 %v2763, %v3554
    %3572 = vst [vmem:[#allocation4] sm:$0xff] %v3329
    %v3573 = vperm.slane %v123, 3
    %v3574 = vadd.f32 %v3556, %v3573
    %v3575 = vadd.f32 %v3557, %v3573
    %v3576 = vadd.f32 %v3558, %v3573
    %v3577 = vadd.f32 %v3559, %v3573
    %v3578 = vadd.f32 %v3560, %v3573
    %v3579 = vadd.f32 %v3561, %v3573
    %v3580 = vadd.f32 %v3562, %v3573
    %v3581 = vadd.f32 %v3563, %v3573
    %v3582 = vadd.f32 %v3564, %v3573
    %v3583 = vadd.f32 %v3565, %v3573
    %v3584 = vadd.f32 %v3566, %v3573
    %v3585 = vadd.f32 %v3567, %v3573
    %v3586 = vadd.f32 %v3568, %v3573
    %v3587 = vadd.f32 %v3569, %v3573
    %v3588 = vadd.f32 %v3570, %v3573
    %v3589 = vadd.f32 %v3571, %v3573
    %v3590 = vadd.f32 %v3574, %v46
    %v3591 = vadd.f32 %v3575, %v47
    %v3592 = vadd.f32 %v3576, %v48
    %v3593 = vadd.f32 %v3577, %v49
    %v3594 = vadd.f32 %v3578, %v50
    %v3595 = vadd.f32 %v3579, %v51
    %v3596 = vadd.f32 %v3580, %v52
    %v3597 = vadd.f32 %v3581, %v53
    %v3598 = vadd.f32 %v3582, %v54
    %v3599 = vadd.f32 %v3583, %v55
    %v3600 = vadd.f32 %v3584, %v56
    %v3601 = vadd.f32 %v3585, %v57
    %v3602 = vadd.f32 %v3586, %v58
    %v3603 = vadd.f32 %v3587, %v59
    %v3604 = vadd.f32 %v3588, %v60
    %v3605 = vadd.f32 %v3589, %v61
    %v3606 = vadd.f32 %v3590, %v30
    %v3607 = vadd.f32 %v3591, %v31
    %v3608 = vadd.f32 %v3592, %v32
    %v3609 = vadd.f32 %v3593, %v33
    %v3610 = vadd.f32 %v3594, %v34
    %v3611 = vadd.f32 %v3595, %v35
    %v3612 = vadd.f32 %v3596, %v36
    %v3613 = vadd.f32 %v3597, %v37
    %v3614 = vadd.f32 %v3598, %v38
    %v3615 = vadd.f32 %v3599, %v39
    %v3616 = vadd.f32 %v3600, %v40
    %v3617 = vadd.f32 %v3601, %v41
    %v3618 = vadd.f32 %v3602, %v42
    %v3619 = vadd.f32 %v3603, %v43
    %v3620 = vadd.f32 %v3604, %v44
    %v3621 = vadd.f32 %v3605, %v45
    %v3622 = vsel %vm126, %v3606, 0.0
    %3623 = vadd.xlane.f32.xlu0 %v3622
    %v3624 = vpop.xlane.xlu0 %3623
    %v3625 = vsel %vm126, %v3607, 0.0
    %3626 = vadd.xlane.f32.xlu0 %v3625
    %v3627 = vpop.xlane.xlu0 %3626
    %v3628 = vsel %vm126, %v3608, 0.0
    %3629 = vadd.xlane.f32.xlu0 %v3628
    %v3630 = vpop.xlane.xlu0 %3629
    %v3631 = vsel %vm126, %v3609, 0.0
    %3632 = vadd.xlane.f32.xlu0 %v3631
    %v3633 = vpop.xlane.xlu0 %3632
    %v3634 = vsel %vm126, %v3610, 0.0
    %3635 = vadd.xlane.f32.xlu0 %v3634
    %v3636 = vpop.xlane.xlu0 %3635
    %v3637 = vsel %vm126, %v3611, 0.0
    %3638 = vadd.xlane.f32.xlu0 %v3637
    %v3639 = vpop.xlane.xlu0 %3638
    %v3640 = vsel %vm126, %v3612, 0.0
    %3641 = vadd.xlane.f32.xlu0 %v3640
    %v3642 = vpop.xlane.xlu0 %3641
    %v3643 = vsel %vm126, %v3613, 0.0
    %3644 = vadd.xlane.f32.xlu0 %v3643
    %v3645 = vpop.xlane.xlu0 %3644
    %v3646 = vsel %vm126, %v3614, 0.0
    %3647 = vadd.xlane.f32.xlu0 %v3646
    %v3648 = vpop.xlane.xlu0 %3647
    %v3649 = vsel %vm126, %v3615, 0.0
    %3650 = vadd.xlane.f32.xlu0 %v3649
    %v3651 = vpop.xlane.xlu0 %3650
    %v3652 = vsel %vm126, %v3616, 0.0
    %3653 = vadd.xlane.f32.xlu0 %v3652
    %v3654 = vpop.xlane.xlu0 %3653
    %v3655 = vsel %vm126, %v3617, 0.0
    %3656 = vadd.xlane.f32.xlu0 %v3655
    %v3657 = vpop.xlane.xlu0 %3656
    %v3658 = vsel %vm126, %v3618, 0.0
    %3659 = vadd.xlane.f32.xlu0 %v3658
    %v3660 = vpop.xlane.xlu0 %3659
    %v3661 = vsel %vm126, %v3619, 0.0
    %3662 = vadd.xlane.f32.xlu0 %v3661
    %v3663 = vpop.xlane.xlu0 %3662
    %v3664 = vsel %vm126, %v3620, 0.0
    %3665 = vadd.xlane.f32.xlu0 %v3664
    %v3666 = vpop.xlane.xlu0 %3665
    %v3667 = vsel %vm126, %v3621, 0.0
    %3668 = vadd.xlane.f32.xlu0 %v3667
    %v3669 = vpop.xlane.xlu0 %3668
    %v3670 = vrcp.pop 32.0
    %v3671 = vmul.f32 32.0, %v3670
    %v3672 = vsub.f32 1.0, %v3671
    %v3673 = vmul.f32 %v3670, %v3672
    %v3674 = vadd.f32 %v3670, %v3673
    %vm3675 = vweird.f32 %v3670
    %v3676 = vsel %vm3675, %v3670, %v3674
    %v3677 = vmul.f32 %v3624, %v3676
    %v3678 = vmul.f32 %v3627, %v3676
    %v3679 = vmul.f32 %v3630, %v3676
    %v3680 = vmul.f32 %v3633, %v3676
    %v3681 = vmul.f32 %v3636, %v3676
    %v3682 = vmul.f32 %v3639, %v3676
    %v3683 = vmul.f32 %v3642, %v3676
    %v3684 = vmul.f32 %v3645, %v3676
    %v3685 = vmul.f32 %v3648, %v3676
    %v3686 = vmul.f32 %v3651, %v3676
    %v3687 = vmul.f32 %v3654, %v3676
    %v3688 = vmul.f32 %v3657, %v3676
    %v3689 = vmul.f32 %v3660, %v3676
    %v3690 = vmul.f32 %v3663, %v3676
    %v3691 = vmul.f32 %v3666, %v3676
    %v3692 = vmul.f32 %v3669, %v3676
    %v3693 = vsub.f32 %v3606, %v3677
    %v3694 = vsub.f32 %v3607, %v3678
    %v3695 = vsub.f32 %v3608, %v3679
    %v3696 = vsub.f32 %v3609, %v3680
    %v3697 = vsub.f32 %v3610, %v3681
    %v3698 = vsub.f32 %v3611, %v3682
    %v3699 = vsub.f32 %v3612, %v3683
    %v3700 = vsub.f32 %v3613, %v3684
    %v3701 = vsub.f32 %v3614, %v3685
    %v3702 = vsub.f32 %v3615, %v3686
    %v3703 = vsub.f32 %v3616, %v3687
    %v3704 = vsub.f32 %v3617, %v3688
    %v3705 = vsub.f32 %v3618, %v3689
    %v3706 = vsub.f32 %v3619, %v3690
    %v3707 = vsub.f32 %v3620, %v3691
    %v3708 = vsub.f32 %v3621, %v3692
    %v3709 = vmul.f32 %v3693, %v3693
    %v3710 = vmul.f32 %v3694, %v3694
    %v3711 = vmul.f32 %v3695, %v3695
    %v3712 = vmul.f32 %v3696, %v3696
    %v3713 = vmul.f32 %v3697, %v3697
    %v3714 = vmul.f32 %v3698, %v3698
    %v3715 = vmul.f32 %v3699, %v3699
    %v3716 = vmul.f32 %v3700, %v3700
    %v3717 = vmul.f32 %v3701, %v3701
    %v3718 = vmul.f32 %v3702, %v3702
    %v3719 = vmul.f32 %v3703, %v3703
    %v3720 = vmul.f32 %v3704, %v3704
    %v3721 = vmul.f32 %v3705, %v3705
    %v3722 = vmul.f32 %v3706, %v3706
    %v3723 = vmul.f32 %v3707, %v3707
    %v3724 = vmul.f32 %v3708, %v3708
    %v3725 = vsel %vm126, %v3709, 0.0
    %3726 = vadd.xlane.f32.xlu0 %v3725
    %v3727 = vpop.xlane.xlu0 %3726
    %v3728 = vsel %vm126, %v3710, 0.0
    %3729 = vadd.xlane.f32.xlu0 %v3728
    %v3730 = vpop.xlane.xlu0 %3729
    %v3731 = vsel %vm126, %v3711, 0.0
    %3732 = vadd.xlane.f32.xlu0 %v3731
    %v3733 = vpop.xlane.xlu0 %3732
    %v3734 = vsel %vm126, %v3712, 0.0
    %3735 = vadd.xlane.f32.xlu0 %v3734
    %v3736 = vpop.xlane.xlu0 %3735
    %v3737 = vsel %vm126, %v3713, 0.0
    %3738 = vadd.xlane.f32.xlu0 %v3737
    %v3739 = vpop.xlane.xlu0 %3738
    %v3740 = vsel %vm126, %v3714, 0.0
    %3741 = vadd.xlane.f32.xlu0 %v3740
    %v3742 = vpop.xlane.xlu0 %3741
    %v3743 = vsel %vm126, %v3715, 0.0
    %3744 = vadd.xlane.f32.xlu0 %v3743
    %v3745 = vpop.xlane.xlu0 %3744
    %v3746 = vsel %vm126, %v3716, 0.0
    %3747 = vadd.xlane.f32.xlu0 %v3746
    %v3748 = vpop.xlane.xlu0 %3747
    %v3749 = vsel %vm126, %v3717, 0.0
    %3750 = vadd.xlane.f32.xlu0 %v3749
    %v3751 = vpop.xlane.xlu0 %3750
    %v3752 = vsel %vm126, %v3718, 0.0
    %3753 = vadd.xlane.f32.xlu0 %v3752
    %v3754 = vpop.xlane.xlu0 %3753
    %v3755 = vsel %vm126, %v3719, 0.0
    %3756 = vadd.xlane.f32.xlu0 %v3755
    %v3757 = vpop.xlane.xlu0 %3756
    %v3758 = vsel %vm126, %v3720, 0.0
    %3759 = vadd.xlane.f32.xlu0 %v3758
    %v3760 = vpop.xlane.xlu0 %3759
    %v3761 = vsel %vm126, %v3721, 0.0
    %3762 = vadd.xlane.f32.xlu0 %v3761
    %v3763 = vpop.xlane.xlu0 %3762
    %v3764 = vsel %vm126, %v3722, 0.0
    %3765 = vadd.xlane.f32.xlu0 %v3764
    %v3766 = vpop.xlane.xlu0 %3765
    %v3767 = vsel %vm126, %v3723, 0.0
    %3768 = vadd.xlane.f32.xlu0 %v3767
    %v3769 = vpop.xlane.xlu0 %3768
    %v3770 = vsel %vm126, %v3724, 0.0
    %3771 = vadd.xlane.f32.xlu0 %v3770
    %v3772 = vpop.xlane.xlu0 %3771
    %v3773 = vmul.f32 %v3727, %v3676
    %v3774 = vmul.f32 %v3730, %v3676
    %v3775 = vmul.f32 %v3733, %v3676
    %v3776 = vmul.f32 %v3736, %v3676
    %v3777 = vmul.f32 %v3739, %v3676
    %v3778 = vmul.f32 %v3742, %v3676
    %v3779 = vmul.f32 %v3745, %v3676
    %v3780 = vmul.f32 %v3748, %v3676
    %v3781 = vmul.f32 %v3751, %v3676
    %v3782 = vmul.f32 %v3754, %v3676
    %v3783 = vmul.f32 %v3757, %v3676
    %v3784 = vmul.f32 %v3760, %v3676
    %v3785 = vmul.f32 %v3763, %v3676
    %v3786 = vmul.f32 %v3766, %v3676
    %v3787 = vmul.f32 %v3769, %v3676
    %v3788 = vmul.f32 %v3772, %v3676
    %v3789 = vadd.f32 %v3773, 1e-05
    %v3790 = vadd.f32 %v3774, 1e-05
    %v3791 = vadd.f32 %v3775, 1e-05
    %v3792 = vadd.f32 %v3776, 1e-05
    %v3793 = vadd.f32 %v3777, 1e-05
    %v3794 = vadd.f32 %v3778, 1e-05
    %v3795 = vadd.f32 %v3779, 1e-05
    %v3796 = vadd.f32 %v3780, 1e-05
    %v3797 = vadd.f32 %v3781, 1e-05
    %v3798 = vadd.f32 %v3782, 1e-05
    %v3799 = vadd.f32 %v3783, 1e-05
    %v3800 = vadd.f32 %v3784, 1e-05
    %v3801 = vadd.f32 %v3785, 1e-05
    %v3802 = vadd.f32 %v3786, 1e-05
    %v3803 = vadd.f32 %v3787, 1e-05
    %v3804 = vadd.f32 %v3788, 1e-05
    %v3805 = vrsqrt.pop %v3789
    %v3806 = vmul.f32 %v3805, %v3789
    %v3807 = vmul.f32 %v3806, %v3805
    %v3808 = vmul.f32 0.5, %v3807
    %v3809 = vsub.f32 1.5, %v3808
    %v3810 = vmul.f32 %v3805, %v3809
    %vm3811 = vweird.f32 %v3789
    %vm3812 = vweird.f32 %v3805
    %vm3813 = vmor %vm3811, %vm3812
    %v3814 = vsel %vm3813, %v3805, %v3810
    %v3815 = vrsqrt.pop %v3790
    %v3816 = vmul.f32 %v3815, %v3790
    %v3817 = vmul.f32 %v3816, %v3815
    %v3818 = vmul.f32 0.5, %v3817
    %v3819 = vsub.f32 1.5, %v3818
    %v3820 = vmul.f32 %v3815, %v3819
    %vm3821 = vweird.f32 %v3790
    %vm3822 = vweird.f32 %v3815
    %vm3823 = vmor %vm3821, %vm3822
    %v3824 = vsel %vm3823, %v3815, %v3820
    %v3825 = vrsqrt.pop %v3791
    %v3826 = vmul.f32 %v3825, %v3791
    %v3827 = vmul.f32 %v3826, %v3825
    %v3828 = vmul.f32 0.5, %v3827
    %v3829 = vsub.f32 1.5, %v3828
    %v3830 = vmul.f32 %v3825, %v3829
    %vm3831 = vweird.f32 %v3791
    %vm3832 = vweird.f32 %v3825
    %vm3833 = vmor %vm3831, %vm3832
    %v3834 = vsel %vm3833, %v3825, %v3830
    %v3835 = vrsqrt.pop %v3792
    %v3836 = vmul.f32 %v3835, %v3792
    %v3837 = vmul.f32 %v3836, %v3835
    %v3838 = vmul.f32 0.5, %v3837
    %v3839 = vsub.f32 1.5, %v3838
    %v3840 = vmul.f32 %v3835, %v3839
    %vm3841 = vweird.f32 %v3792
    %vm3842 = vweird.f32 %v3835
    %vm3843 = vmor %vm3841, %vm3842
    %v3844 = vsel %vm3843, %v3835, %v3840
    %v3845 = vrsqrt.pop %v3793
    %v3846 = vmul.f32 %v3845, %v3793
    %v3847 = vmul.f32 %v3846, %v3845
    %v3848 = vmul.f32 0.5, %v3847
    %v3849 = vsub.f32 1.5, %v3848
    %v3850 = vmul.f32 %v3845, %v3849
    %vm3851 = vweird.f32 %v3793
    %vm3852 = vweird.f32 %v3845
    %vm3853 = vmor %vm3851, %vm3852
    %v3854 = vsel %vm3853, %v3845, %v3850
    %v3855 = vrsqrt.pop %v3794
    %v3856 = vmul.f32 %v3855, %v3794
    %v3857 = vmul.f32 %v3856, %v3855
    %v3858 = vmul.f32 0.5, %v3857
    %v3859 = vsub.f32 1.5, %v3858
    %v3860 = vmul.f32 %v3855, %v3859
    %vm3861 = vweird.f32 %v3794
    %vm3862 = vweird.f32 %v3855
    %vm3863 = vmor %vm3861, %vm3862
    %v3864 = vsel %vm3863, %v3855, %v3860
    %v3865 = vrsqrt.pop %v3795
    %v3866 = vmul.f32 %v3865, %v3795
    %v3867 = vmul.f32 %v3866, %v3865
    %v3868 = vmul.f32 0.5, %v3867
    %v3869 = vsub.f32 1.5, %v3868
    %v3870 = vmul.f32 %v3865, %v3869
    %vm3871 = vweird.f32 %v3795
    %vm3872 = vweird.f32 %v3865
    %vm3873 = vmor %vm3871, %vm3872
    %v3874 = vsel %vm3873, %v3865, %v3870
    %v3875 = vrsqrt.pop %v3796
    %v3876 = vmul.f32 %v3875, %v3796
    %v3877 = vmul.f32 %v3876, %v3875
    %v3878 = vmul.f32 0.5, %v3877
    %v3879 = vsub.f32 1.5, %v3878
    %v3880 = vmul.f32 %v3875, %v3879
    %vm3881 = vweird.f32 %v3796
    %vm3882 = vweird.f32 %v3875
    %vm3883 = vmor %vm3881, %vm3882
    %v3884 = vsel %vm3883, %v3875, %v3880
    %v3885 = vrsqrt.pop %v3797
    %v3886 = vmul.f32 %v3885, %v3797
    %v3887 = vmul.f32 %v3886, %v3885
    %v3888 = vmul.f32 0.5, %v3887
    %v3889 = vsub.f32 1.5, %v3888
    %v3890 = vmul.f32 %v3885, %v3889
    %vm3891 = vweird.f32 %v3797
    %vm3892 = vweird.f32 %v3885
    %vm3893 = vmor %vm3891, %vm3892
    %v3894 = vsel %vm3893, %v3885, %v3890
    %v3895 = vrsqrt.pop %v3798
    %v3896 = vmul.f32 %v3895, %v3798
    %v3897 = vmul.f32 %v3896, %v3895
    %v3898 = vmul.f32 0.5, %v3897
    %v3899 = vsub.f32 1.5, %v3898
    %v3900 = vmul.f32 %v3895, %v3899
    %vm3901 = vweird.f32 %v3798
    %vm3902 = vweird.f32 %v3895
    %vm3903 = vmor %vm3901, %vm3902
    %v3904 = vsel %vm3903, %v3895, %v3900
    %v3905 = vrsqrt.pop %v3799
    %v3906 = vmul.f32 %v3905, %v3799
    %v3907 = vmul.f32 %v3906, %v3905
    %v3908 = vmul.f32 0.5, %v3907
    %v3909 = vsub.f32 1.5, %v3908
    %v3910 = vmul.f32 %v3905, %v3909
    %vm3911 = vweird.f32 %v3799
    %vm3912 = vweird.f32 %v3905
    %vm3913 = vmor %vm3911, %vm3912
    %v3914 = vsel %vm3913, %v3905, %v3910
    %v3915 = vrsqrt.pop %v3800
    %v3916 = vmul.f32 %v3915, %v3800
    %v3917 = vmul.f32 %v3916, %v3915
    %v3918 = vmul.f32 0.5, %v3917
    %v3919 = vsub.f32 1.5, %v3918
    %v3920 = vmul.f32 %v3915, %v3919
    %vm3921 = vweird.f32 %v3800
    %vm3922 = vweird.f32 %v3915
    %vm3923 = vmor %vm3921, %vm3922
    %v3924 = vsel %vm3923, %v3915, %v3920
    %v3925 = vrsqrt.pop %v3801
    %v3926 = vmul.f32 %v3925, %v3801
    %v3927 = vmul.f32 %v3926, %v3925
    %v3928 = vmul.f32 0.5, %v3927
    %v3929 = vsub.f32 1.5, %v3928
    %v3930 = vmul.f32 %v3925, %v3929
    %vm3931 = vweird.f32 %v3801
    %vm3932 = vweird.f32 %v3925
    %vm3933 = vmor %vm3931, %vm3932
    %v3934 = vsel %vm3933, %v3925, %v3930
    %v3935 = vrsqrt.pop %v3802
    %v3936 = vmul.f32 %v3935, %v3802
    %v3937 = vmul.f32 %v3936, %v3935
    %v3938 = vmul.f32 0.5, %v3937
    %v3939 = vsub.f32 1.5, %v3938
    %v3940 = vmul.f32 %v3935, %v3939
    %vm3941 = vweird.f32 %v3802
    %vm3942 = vweird.f32 %v3935
    %vm3943 = vmor %vm3941, %vm3942
    %v3944 = vsel %vm3943, %v3935, %v3940
    %v3945 = vrsqrt.pop %v3803
    %v3946 = vmul.f32 %v3945, %v3803
    %v3947 = vmul.f32 %v3946, %v3945
    %v3948 = vmul.f32 0.5, %v3947
    %v3949 = vsub.f32 1.5, %v3948
    %v3950 = vmul.f32 %v3945, %v3949
    %vm3951 = vweird.f32 %v3803
    %vm3952 = vweird.f32 %v3945
    %vm3953 = vmor %vm3951, %vm3952
    %v3954 = vsel %vm3953, %v3945, %v3950
    %v3955 = vrsqrt.pop %v3804
    %v3956 = vmul.f32 %v3955, %v3804
    %v3957 = vmul.f32 %v3956, %v3955
    %v3958 = vmul.f32 0.5, %v3957
    %v3959 = vsub.f32 1.5, %v3958
    %v3960 = vmul.f32 %v3955, %v3959
    %vm3961 = vweird.f32 %v3804
    %vm3962 = vweird.f32 %v3955
    %vm3963 = vmor %vm3961, %vm3962
    %v3964 = vsel %vm3963, %v3955, %v3960
    %v3965 = vmul.f32 %v3693, %v3814
    %v3966 = vmul.f32 %v3694, %v3824
    %v3967 = vmul.f32 %v3695, %v3834
    %v3968 = vmul.f32 %v3696, %v3844
    %v3969 = vmul.f32 %v3697, %v3854
    %v3970 = vmul.f32 %v3698, %v3864
    %v3971 = vmul.f32 %v3699, %v3874
    %v3972 = vmul.f32 %v3700, %v3884
    %v3973 = vmul.f32 %v3701, %v3894
    %v3974 = vmul.f32 %v3702, %v3904
    %v3975 = vmul.f32 %v3703, %v3914
    %v3976 = vmul.f32 %v3704, %v3924
    %v3977 = vmul.f32 %v3705, %v3934
    %v3978 = vmul.f32 %v3706, %v3944
    %v3979 = vmul.f32 %v3707, %v3954
    %v3980 = vmul.f32 %v3708, %v3964
    %v3981 = vperm.slane %v123, 4
    %v3982 = vmul.f32 %v3965, %v3981
    %v3983 = vmul.f32 %v3966, %v3981
    %v3984 = vmul.f32 %v3967, %v3981
    %v3985 = vmul.f32 %v3968, %v3981
    %v3986 = vmul.f32 %v3969, %v3981
    %v3987 = vmul.f32 %v3970, %v3981
    %v3988 = vmul.f32 %v3971, %v3981
    %v3989 = vmul.f32 %v3972, %v3981
    %v3990 = vmul.f32 %v3973, %v3981
    %v3991 = vmul.f32 %v3974, %v3981
    %v3992 = vmul.f32 %v3975, %v3981
    %v3993 = vmul.f32 %v3976, %v3981
    %v3994 = vmul.f32 %v3977, %v3981
    %v3995 = vmul.f32 %v3978, %v3981
    %v3996 = vmul.f32 %v3979, %v3981
    %v3997 = vmul.f32 %v3980, %v3981
    %v3998 = vperm.slane %v123, 5
    %v3999 = vadd.f32 %v3982, %v3998
    %v4000 = vadd.f32 %v3983, %v3998
    %v4001 = vadd.f32 %v3984, %v3998
    %v4002 = vadd.f32 %v3985, %v3998
    %v4003 = vadd.f32 %v3986, %v3998
    %v4004 = vadd.f32 %v3987, %v3998
    %v4005 = vadd.f32 %v3988, %v3998
    %v4006 = vadd.f32 %v3989, %v3998
    %v4007 = vadd.f32 %v3990, %v3998
    %v4008 = vadd.f32 %v3991, %v3998
    %v4009 = vadd.f32 %v3992, %v3998
    %v4010 = vadd.f32 %v3993, %v3998
    %v4011 = vadd.f32 %v3994, %v3998
    %v4012 = vadd.f32 %v3995, %v3998
    %v4013 = vadd.f32 %v3996, %v3998
    %v4014 = vadd.f32 %v3997, %v3998
    %v4015 = vperm.slane %v123, 6
    %v4017 = vsel %vm126, %v3999, 0
    %v4020 = vsel %vm126, %v4000, 0
    %v4023 = vsel %vm126, %v4001, 0
    %v4026 = vsel %vm126, %v4002, 0
    %v4029 = vsel %vm126, %v4003, 0
    %v4032 = vsel %vm126, %v4004, 0
    %v4035 = vsel %vm126, %v4005, 0
    %v4038 = vsel %vm126, %v4006, 0
    %v4041 = vsel %vm126, %v4007, 0
    %v4044 = vsel %vm126, %v4008, 0
    %v4047 = vsel %vm126, %v4009, 0
    %v4050 = vsel %vm126, %v4010, 0
    %v4053 = vsel %vm126, %v4011, 0
    %v4056 = vsel %vm126, %v4012, 0
    %v4059 = vsel %vm126, %v4013, 0
    %v4062 = vsel %vm126, %v4014, 0
    %4064 = vmatpush.msra.mxu0 0.0
    %4065 = vmatpush.msra.mxu0 0.0
    %4066 = vmatpush.msra.mxu0 0.0
    %4067 = vmatpush.msra.mxu0 0.0
    %4068 = vmatpush.msra.mxu0 0.0
    %4069 = vmatpush.msra.mxu0 0.0
    %4070 = vmatpush.msra.mxu0 0.0
    %4071 = vmatpush.msra.mxu0 0.0
    %4072 = vmatpush.msra.mxu0 0.0
    %4073 = vmatpush.msra.mxu0 0.0
    %4074 = vmatpush.msra.mxu0 0.0
    %4075 = vmatpush.msra.mxu0 0.0
    %4076 = vmatpush.msra.mxu0 %v117
    %4077 = vmatpush.msra.mxu0 %v116
    %4078 = vmatpush.msra.mxu0 %v115
    %4079 = vmatpush.msra.mxu0 %v114
    %4080 = vmatmul.f32.gmra.mxu0 %v4017
    %v4081 = vpop.f32.mrf.mxu0
    %v4082 = vadd.f32 %v4015, %v4081
    %4083 = vmatmul.f32.gmra.mxu0 %v4020
    %v4084 = vpop.f32.mrf.mxu0
    %v4085 = vadd.f32 %v4015, %v4084
    %4086 = vmatmul.f32.gmra.mxu0 %v4023
    %v4087 = vpop.f32.mrf.mxu0
    %v4088 = vadd.f32 %v4015, %v4087
    %4089 = vmatmul.f32.gmra.mxu0 %v4026
    %v4090 = vpop.f32.mrf.mxu0
    %v4091 = vadd.f32 %v4015, %v4090
    %4092 = vmatmul.f32.gmra.mxu0 %v4029
    %v4093 = vpop.f32.mrf.mxu0
    %v4094 = vadd.f32 %v4015, %v4093
    %4095 = vmatmul.f32.gmra.mxu0 %v4032
    %v4096 = vpop.f32.mrf.mxu0
    %v4097 = vadd.f32 %v4015, %v4096
    %4098 = vmatmul.f32.gmra.mxu0 %v4035
    %v4099 = vpop.f32.mrf.mxu0
    %v4100 = vadd.f32 %v4015, %v4099
    %4101 = vmatmul.f32.gmra.mxu0 %v4038
    %v4102 = vpop.f32.mrf.mxu0
    %v4103 = vadd.f32 %v4015, %v4102
    %4104 = vmatmul.f32.gmra.mxu0 %v4041
    %v4105 = vpop.f32.mrf.mxu0
    %v4106 = vadd.f32 %v4015, %v4105
    %4107 = vmatmul.f32.gmra.mxu0 %v4044
    %v4108 = vpop.f32.mrf.mxu0
    %v4109 = vadd.f32 %v4015, %v4108
    %4110 = vmatmul.f32.gmra.mxu0 %v4047
    %v4111 = vpop.f32.mrf.mxu0
    %v4112 = vadd.f32 %v4015, %v4111
    %4113 = vmatmul.f32.gmra.mxu0 %v4050
    %v4114 = vpop.f32.mrf.mxu0
    %v4115 = vadd.f32 %v4015, %v4114
    %4116 = vmatmul.f32.gmra.mxu0 %v4053
    %v4117 = vpop.f32.mrf.mxu0
    %v4118 = vadd.f32 %v4015, %v4117
    %4119 = vmatmul.f32.gmra.mxu0 %v4056
    %v4120 = vpop.f32.mrf.mxu0
    %v4121 = vadd.f32 %v4015, %v4120
    %4122 = vmatmul.f32.gmra.mxu0 %v4059
    %v4123 = vpop.f32.mrf.mxu0
    %v4124 = vadd.f32 %v4015, %v4123
    %4125 = vmatmul.f32.gmra.mxu0 %v4062
    %v4126 = vpop.f32.mrf.mxu0
    %v4127 = vadd.f32 %v4015, %v4126
    %4128 = vdwg.mxu0
    %v4129 = vmax.f32 %v4082, 0.0
    %v4130 = vmax.f32 %v4085, 0.0
    %v4131 = vmax.f32 %v4088, 0.0
    %v4132 = vmax.f32 %v4091, 0.0
    %v4133 = vmax.f32 %v4094, 0.0
    %v4134 = vmax.f32 %v4097, 0.0
    %v4135 = vmax.f32 %v4100, 0.0
    %v4136 = vmax.f32 %v4103, 0.0
    %v4137 = vmax.f32 %v4106, 0.0
    %v4138 = vmax.f32 %v4109, 0.0
    %v4139 = vmax.f32 %v4112, 0.0
    %v4140 = vmax.f32 %v4115, 0.0
    %v4141 = vmax.f32 %v4118, 0.0
    %v4142 = vmax.f32 %v4121, 0.0
    %v4143 = vmax.f32 %v4124, 0.0
    %v4144 = vmax.f32 %v4127, 0.0
    %v4145 = vperm.slane %v123, 7
    %v4147 = vsel %vm126, %v4129, 0
    %v4150 = vsel %vm126, %v4130, 0
    %v4153 = vsel %vm126, %v4131, 0
    %v4156 = vsel %vm126, %v4132, 0
    %v4159 = vsel %vm126, %v4133, 0
    %v4162 = vsel %vm126, %v4134, 0
    %v4165 = vsel %vm126, %v4135, 0
    %v4168 = vsel %vm126, %v4136, 0
    %v4171 = vsel %vm126, %v4137, 0
    %v4174 = vsel %vm126, %v4138, 0
    %v4177 = vsel %vm126, %v4139, 0
    %v4180 = vsel %vm126, %v4140, 0
    %v4183 = vsel %vm126, %v4141, 0
    %v4186 = vsel %vm126, %v4142, 0
    %v4189 = vsel %vm126, %v4143, 0
    %v4192 = vsel %vm126, %v4144, 0
    %4194 = vmatpush.msra.mxu0 0.0
    %4195 = vmatpush.msra.mxu0 0.0
    %4196 = vmatpush.msra.mxu0 0.0
    %4197 = vmatpush.msra.mxu0 0.0
    %4198 = vmatpush.msra.mxu0 0.0
    %4199 = vmatpush.msra.mxu0 0.0
    %4200 = vmatpush.msra.mxu0 0.0
    %4201 = vmatpush.msra.mxu0 0.0
    %4202 = vmatpush.msra.mxu0 0.0
    %4203 = vmatpush.msra.mxu0 0.0
    %4204 = vmatpush.msra.mxu0 0.0
    %4205 = vmatpush.msra.mxu0 0.0
    %4206 = vmatpush.msra.mxu0 %v122
    %4207 = vmatpush.msra.mxu0 %v121
    %4208 = vmatpush.msra.mxu0 %v120
    %4209 = vmatpush.msra.mxu0 %v119
    %4210 = vmatmul.f32.gmra.mxu0 %v4147
    %v4211 = vpop.f32.mrf.mxu0
    %v4212 = vadd.f32 %v4145, %v4211
    %4213 = vmatmul.f32.gmra.mxu0 %v4150
    %v4214 = vpop.f32.mrf.mxu0
    %v4215 = vadd.f32 %v4145, %v4214
    %4216 = vmatmul.f32.gmra.mxu0 %v4153
    %v4217 = vpop.f32.mrf.mxu0
    %v4218 = vadd.f32 %v4145, %v4217
    %4219 = vmatmul.f32.gmra.mxu0 %v4156
    %v4220 = vpop.f32.mrf.mxu0
    %v4221 = vadd.f32 %v4145, %v4220
    %4222 = vmatmul.f32.gmra.mxu0 %v4159
    %v4223 = vpop.f32.mrf.mxu0
    %v4224 = vadd.f32 %v4145, %v4223
    %4225 = vmatmul.f32.gmra.mxu0 %v4162
    %v4226 = vpop.f32.mrf.mxu0
    %v4227 = vadd.f32 %v4145, %v4226
    %4228 = vmatmul.f32.gmra.mxu0 %v4165
    %v4229 = vpop.f32.mrf.mxu0
    %v4230 = vadd.f32 %v4145, %v4229
    %4231 = vmatmul.f32.gmra.mxu0 %v4168
    %v4232 = vpop.f32.mrf.mxu0
    %v4233 = vadd.f32 %v4145, %v4232
    %4234 = vmatmul.f32.gmra.mxu0 %v4171
    %v4235 = vpop.f32.mrf.mxu0
    %v4236 = vadd.f32 %v4145, %v4235
    %4237 = vmatmul.f32.gmra.mxu0 %v4174
    %v4238 = vpop.f32.mrf.mxu0
    %v4239 = vadd.f32 %v4145, %v4238
    %4240 = vmatmul.f32.gmra.mxu0 %v4177
    %v4241 = vpop.f32.mrf.mxu0
    %v4242 = vadd.f32 %v4145, %v4241
    %4243 = vmatmul.f32.gmra.mxu0 %v4180
    %v4244 = vpop.f32.mrf.mxu0
    %v4245 = vadd.f32 %v4145, %v4244
    %4246 = vmatmul.f32.gmra.mxu0 %v4183
    %v4247 = vpop.f32.mrf.mxu0
    %v4248 = vadd.f32 %v4145, %v4247
    %4249 = vmatmul.f32.gmra.mxu0 %v4186
    %v4250 = vpop.f32.mrf.mxu0
    %v4251 = vadd.f32 %v4145, %v4250
    %4252 = vmatmul.f32.gmra.mxu0 %v4189
    %v4253 = vpop.f32.mrf.mxu0
    %v4254 = vadd.f32 %v4145, %v4253
    %4255 = vmatmul.f32.gmra.mxu0 %v4192
    %v4256 = vpop.f32.mrf.mxu0
    %v4257 = vadd.f32 %v4145, %v4256
    %4258 = vdwg.mxu0
    %v4259 = vadd.f32 %v4212, %v3999
    %v4260 = vadd.f32 %v4215, %v4000
    %v4261 = vadd.f32 %v4218, %v4001
    %v4262 = vadd.f32 %v4221, %v4002
    %v4263 = vadd.f32 %v4224, %v4003
    %v4264 = vadd.f32 %v4227, %v4004
    %v4265 = vadd.f32 %v4230, %v4005
    %v4266 = vadd.f32 %v4233, %v4006
    %v4267 = vadd.f32 %v4236, %v4007
    %v4268 = vadd.f32 %v4239, %v4008
    %v4269 = vadd.f32 %v4242, %v4009
    %v4270 = vadd.f32 %v4245, %v4010
    %v4271 = vadd.f32 %v4248, %v4011
    %v4272 = vadd.f32 %v4251, %v4012
    %v4273 = vadd.f32 %v4254, %v4013
    %v4274 = vadd.f32 %v4257, %v4014
    %v4275 = vsel %vm126, %v4259, 0.0
    %4276 = vadd.xlane.f32.xlu0 %v4275
    %v4277 = vpop.xlane.xlu0 %4276
    %v4278 = vsel %vm126, %v4260, 0.0
    %4279 = vadd.xlane.f32.xlu0 %v4278
    %v4280 = vpop.xlane.xlu0 %4279
    %v4281 = vsel %vm126, %v4261, 0.0
    %4282 = vadd.xlane.f32.xlu0 %v4281
    %v4283 = vpop.xlane.xlu0 %4282
    %v4284 = vsel %vm126, %v4262, 0.0
    %4285 = vadd.xlane.f32.xlu0 %v4284
    %v4286 = vpop.xlane.xlu0 %4285
    %v4287 = vsel %vm126, %v4263, 0.0
    %4288 = vadd.xlane.f32.xlu0 %v4287
    %v4289 = vpop.xlane.xlu0 %4288
    %v4290 = vsel %vm126, %v4264, 0.0
    %4291 = vadd.xlane.f32.xlu0 %v4290
    %v4292 = vpop.xlane.xlu0 %4291
    %v4293 = vsel %vm126, %v4265, 0.0
    %4294 = vadd.xlane.f32.xlu0 %v4293
    %v4295 = vpop.xlane.xlu0 %4294
    %v4296 = vsel %vm126, %v4266, 0.0
    %4297 = vadd.xlane.f32.xlu0 %v4296
    %v4298 = vpop.xlane.xlu0 %4297
    %v4299 = vsel %vm126, %v4267, 0.0
    %4300 = vadd.xlane.f32.xlu0 %v4299
    %v4301 = vpop.xlane.xlu0 %4300
    %v4302 = vsel %vm126, %v4268, 0.0
    %4303 = vadd.xlane.f32.xlu0 %v4302
    %v4304 = vpop.xlane.xlu0 %4303
    %v4305 = vsel %vm126, %v4269, 0.0
    %4306 = vadd.xlane.f32.xlu0 %v4305
    %v4307 = vpop.xlane.xlu0 %4306
    %v4308 = vsel %vm126, %v4270, 0.0
    %4309 = vadd.xlane.f32.xlu0 %v4308
    %v4310 = vpop.xlane.xlu0 %4309
    %v4311 = vsel %vm126, %v4271, 0.0
    %4312 = vadd.xlane.f32.xlu0 %v4311
    %v4313 = vpop.xlane.xlu0 %4312
    %v4314 = vsel %vm126, %v4272, 0.0
    %4315 = vadd.xlane.f32.xlu0 %v4314
    %v4316 = vpop.xlane.xlu0 %4315
    %v4317 = vsel %vm126, %v4273, 0.0
    %4318 = vadd.xlane.f32.xlu0 %v4317
    %v4319 = vpop.xlane.xlu0 %4318
    %v4320 = vsel %vm126, %v4274, 0.0
    %4321 = vadd.xlane.f32.xlu0 %v4320
    %v4322 = vpop.xlane.xlu0 %4321
    %v4323 = vmul.f32 %v4277, %v3676
    %v4324 = vmul.f32 %v4280, %v3676
    %v4325 = vmul.f32 %v4283, %v3676
    %v4326 = vmul.f32 %v4286, %v3676
    %v4327 = vmul.f32 %v4289, %v3676
    %v4328 = vmul.f32 %v4292, %v3676
    %v4329 = vmul.f32 %v4295, %v3676
    %v4330 = vmul.f32 %v4298, %v3676
    %v4331 = vmul.f32 %v4301, %v3676
    %v4332 = vmul.f32 %v4304, %v3676
    %v4333 = vmul.f32 %v4307, %v3676
    %v4334 = vmul.f32 %v4310, %v3676
    %v4335 = vmul.f32 %v4313, %v3676
    %v4336 = vmul.f32 %v4316, %v3676
    %v4337 = vmul.f32 %v4319, %v3676
    %v4338 = vmul.f32 %v4322, %v3676
    %v4339 = vsub.f32 %v4259, %v4323
    %v4340 = vsub.f32 %v4260, %v4324
    %v4341 = vsub.f32 %v4261, %v4325
    %v4342 = vsub.f32 %v4262, %v4326
    %v4343 = vsub.f32 %v4263, %v4327
    %v4344 = vsub.f32 %v4264, %v4328
    %v4345 = vsub.f32 %v4265, %v4329
    %v4346 = vsub.f32 %v4266, %v4330
    %v4347 = vsub.f32 %v4267, %v4331
    %v4348 = vsub.f32 %v4268, %v4332
    %v4349 = vsub.f32 %v4269, %v4333
    %v4350 = vsub.f32 %v4270, %v4334
    %v4351 = vsub.f32 %v4271, %v4335
    %v4352 = vsub.f32 %v4272, %v4336
    %v4353 = vsub.f32 %v4273, %v4337
    %v4354 = vsub.f32 %v4274, %v4338
    %v4355 = vmul.f32 %v4339, %v4339
    %v4356 = vmul.f32 %v4340, %v4340
    %v4357 = vmul.f32 %v4341, %v4341
    %v4358 = vmul.f32 %v4342, %v4342
    %v4359 = vmul.f32 %v4343, %v4343
    %v4360 = vmul.f32 %v4344, %v4344
    %v4361 = vmul.f32 %v4345, %v4345
    %v4362 = vmul.f32 %v4346, %v4346
    %v4363 = vmul.f32 %v4347, %v4347
    %v4364 = vmul.f32 %v4348, %v4348
    %v4365 = vmul.f32 %v4349, %v4349
    %v4366 = vmul.f32 %v4350, %v4350
    %v4367 = vmul.f32 %v4351, %v4351
    %v4368 = vmul.f32 %v4352, %v4352
    %v4369 = vmul.f32 %v4353, %v4353
    %v4370 = vmul.f32 %v4354, %v4354
    %v4371 = vsel %vm126, %v4355, 0.0
    %4372 = vadd.xlane.f32.xlu0 %v4371
    %v4373 = vpop.xlane.xlu0 %4372
    %v4374 = vsel %vm126, %v4356, 0.0
    %4375 = vadd.xlane.f32.xlu0 %v4374
    %v4376 = vpop.xlane.xlu0 %4375
    %v4377 = vsel %vm126, %v4357, 0.0
    %4378 = vadd.xlane.f32.xlu0 %v4377
    %v4379 = vpop.xlane.xlu0 %4378
    %v4380 = vsel %vm126, %v4358, 0.0
    %4381 = vadd.xlane.f32.xlu0 %v4380
    %v4382 = vpop.xlane.xlu0 %4381
    %v4383 = vsel %vm126, %v4359, 0.0
    %4384 = vadd.xlane.f32.xlu0 %v4383
    %v4385 = vpop.xlane.xlu0 %4384
    %v4386 = vsel %vm126, %v4360, 0.0
    %4387 = vadd.xlane.f32.xlu0 %v4386
    %v4388 = vpop.xlane.xlu0 %4387
    %v4389 = vsel %vm126, %v4361, 0.0
    %4390 = vadd.xlane.f32.xlu0 %v4389
    %v4391 = vpop.xlane.xlu0 %4390
    %v4392 = vsel %vm126, %v4362, 0.0
    %4393 = vadd.xlane.f32.xlu0 %v4392
    %v4394 = vpop.xlane.xlu0 %4393
    %v4395 = vsel %vm126, %v4363, 0.0
    %4396 = vadd.xlane.f32.xlu0 %v4395
    %v4397 = vpop.xlane.xlu0 %4396
    %v4398 = vsel %vm126, %v4364, 0.0
    %4399 = vadd.xlane.f32.xlu0 %v4398
    %v4400 = vpop.xlane.xlu0 %4399
    %v4401 = vsel %vm126, %v4365, 0.0
    %4402 = vadd.xlane.f32.xlu0 %v4401
    %v4403 = vpop.xlane.xlu0 %4402
    %v4404 = vsel %vm126, %v4366, 0.0
    %4405 = vadd.xlane.f32.xlu0 %v4404
    %v4406 = vpop.xlane.xlu0 %4405
    %v4407 = vsel %vm126, %v4367, 0.0
    %4408 = vadd.xlane.f32.xlu0 %v4407
    %v4409 = vpop.xlane.xlu0 %4408
    %v4410 = vsel %vm126, %v4368, 0.0
    %4411 = vadd.xlane.f32.xlu0 %v4410
    %v4412 = vpop.xlane.xlu0 %4411
    %v4413 = vsel %vm126, %v4369, 0.0
    %4414 = vadd.xlane.f32.xlu0 %v4413
    %v4415 = vpop.xlane.xlu0 %4414
    %v4416 = vsel %vm126, %v4370, 0.0
    %4417 = vadd.xlane.f32.xlu0 %v4416
    %v4418 = vpop.xlane.xlu0 %4417
    %v4419 = vmul.f32 %v4373, %v3676
    %v4420 = vmul.f32 %v4376, %v3676
    %v4421 = vmul.f32 %v4379, %v3676
    %v4422 = vmul.f32 %v4382, %v3676
    %v4423 = vmul.f32 %v4385, %v3676
    %v4424 = vmul.f32 %v4388, %v3676
    %v4425 = vmul.f32 %v4391, %v3676
    %v4426 = vmul.f32 %v4394, %v3676
    %v4427 = vmul.f32 %v4397, %v3676
    %v4428 = vmul.f32 %v4400, %v3676
    %v4429 = vmul.f32 %v4403, %v3676
    %v4430 = vmul.f32 %v4406, %v3676
    %v4431 = vmul.f32 %v4409, %v3676
    %v4432 = vmul.f32 %v4412, %v3676
    %v4433 = vmul.f32 %v4415, %v3676
    %v4434 = vmul.f32 %v4418, %v3676
    %v4435 = vadd.f32 %v4419, 1e-05
    %v4436 = vadd.f32 %v4420, 1e-05
    %v4437 = vadd.f32 %v4421, 1e-05
    %v4438 = vadd.f32 %v4422, 1e-05
    %v4439 = vadd.f32 %v4423, 1e-05
    %v4440 = vadd.f32 %v4424, 1e-05
    %v4441 = vadd.f32 %v4425, 1e-05
    %v4442 = vadd.f32 %v4426, 1e-05
    %v4443 = vadd.f32 %v4427, 1e-05
    %v4444 = vadd.f32 %v4428, 1e-05
    %v4445 = vadd.f32 %v4429, 1e-05
    %v4446 = vadd.f32 %v4430, 1e-05
    %v4447 = vadd.f32 %v4431, 1e-05
    %v4448 = vadd.f32 %v4432, 1e-05
    %v4449 = vadd.f32 %v4433, 1e-05
    %v4450 = vadd.f32 %v4434, 1e-05
    %v4451 = vrsqrt.pop %v4435
    %v4452 = vmul.f32 %v4451, %v4435
    %v4453 = vmul.f32 %v4452, %v4451
    %v4454 = vmul.f32 0.5, %v4453
    %v4455 = vsub.f32 1.5, %v4454
    %v4456 = vmul.f32 %v4451, %v4455
    %vm4457 = vweird.f32 %v4435
    %vm4458 = vweird.f32 %v4451
    %vm4459 = vmor %vm4457, %vm4458
    %v4460 = vsel %vm4459, %v4451, %v4456
    %v4461 = vrsqrt.pop %v4436
    %v4462 = vmul.f32 %v4461, %v4436
    %v4463 = vmul.f32 %v4462, %v4461
    %v4464 = vmul.f32 0.5, %v4463
    %v4465 = vsub.f32 1.5, %v4464
    %v4466 = vmul.f32 %v4461, %v4465
    %vm4467 = vweird.f32 %v4436
    %vm4468 = vweird.f32 %v4461
    %vm4469 = vmor %vm4467, %vm4468
    %v4470 = vsel %vm4469, %v4461, %v4466
    %v4471 = vrsqrt.pop %v4437
    %v4472 = vmul.f32 %v4471, %v4437
    %v4473 = vmul.f32 %v4472, %v4471
    %v4474 = vmul.f32 0.5, %v4473
    %v4475 = vsub.f32 1.5, %v4474
    %v4476 = vmul.f32 %v4471, %v4475
    %vm4477 = vweird.f32 %v4437
    %vm4478 = vweird.f32 %v4471
    %vm4479 = vmor %vm4477, %vm4478
    %v4480 = vsel %vm4479, %v4471, %v4476
    %v4481 = vrsqrt.pop %v4438
    %v4482 = vmul.f32 %v4481, %v4438
    %v4483 = vmul.f32 %v4482, %v4481
    %v4484 = vmul.f32 0.5, %v4483
    %v4485 = vsub.f32 1.5, %v4484
    %v4486 = vmul.f32 %v4481, %v4485
    %vm4487 = vweird.f32 %v4438
    %vm4488 = vweird.f32 %v4481
    %vm4489 = vmor %vm4487, %vm4488
    %v4490 = vsel %vm4489, %v4481, %v4486
    %v4491 = vrsqrt.pop %v4439
    %v4492 = vmul.f32 %v4491, %v4439
    %v4493 = vmul.f32 %v4492, %v4491
    %v4494 = vmul.f32 0.5, %v4493
    %v4495 = vsub.f32 1.5, %v4494
    %v4496 = vmul.f32 %v4491, %v4495
    %vm4497 = vweird.f32 %v4439
    %vm4498 = vweird.f32 %v4491
    %vm4499 = vmor %vm4497, %vm4498
    %v4500 = vsel %vm4499, %v4491, %v4496
    %v4501 = vrsqrt.pop %v4440
    %v4502 = vmul.f32 %v4501, %v4440
    %v4503 = vmul.f32 %v4502, %v4501
    %v4504 = vmul.f32 0.5, %v4503
    %v4505 = vsub.f32 1.5, %v4504
    %v4506 = vmul.f32 %v4501, %v4505
    %vm4507 = vweird.f32 %v4440
    %vm4508 = vweird.f32 %v4501
    %vm4509 = vmor %vm4507, %vm4508
    %v4510 = vsel %vm4509, %v4501, %v4506
    %v4511 = vrsqrt.pop %v4441
    %v4512 = vmul.f32 %v4511, %v4441
    %v4513 = vmul.f32 %v4512, %v4511
    %v4514 = vmul.f32 0.5, %v4513
    %v4515 = vsub.f32 1.5, %v4514
    %v4516 = vmul.f32 %v4511, %v4515
    %vm4517 = vweird.f32 %v4441
    %vm4518 = vweird.f32 %v4511
    %vm4519 = vmor %vm4517, %vm4518
    %v4520 = vsel %vm4519, %v4511, %v4516
    %v4521 = vrsqrt.pop %v4442
    %v4522 = vmul.f32 %v4521, %v4442
    %v4523 = vmul.f32 %v4522, %v4521
    %v4524 = vmul.f32 0.5, %v4523
    %v4525 = vsub.f32 1.5, %v4524
    %v4526 = vmul.f32 %v4521, %v4525
    %vm4527 = vweird.f32 %v4442
    %vm4528 = vweird.f32 %v4521
    %vm4529 = vmor %vm4527, %vm4528
    %v4530 = vsel %vm4529, %v4521, %v4526
    %v4531 = vrsqrt.pop %v4443
    %v4532 = vmul.f32 %v4531, %v4443
    %v4533 = vmul.f32 %v4532, %v4531
    %v4534 = vmul.f32 0.5, %v4533
    %v4535 = vsub.f32 1.5, %v4534
    %v4536 = vmul.f32 %v4531, %v4535
    %vm4537 = vweird.f32 %v4443
    %vm4538 = vweird.f32 %v4531
    %vm4539 = vmor %vm4537, %vm4538
    %v4540 = vsel %vm4539, %v4531, %v4536
    %v4541 = vrsqrt.pop %v4444
    %v4542 = vmul.f32 %v4541, %v4444
    %v4543 = vmul.f32 %v4542, %v4541
    %v4544 = vmul.f32 0.5, %v4543
    %v4545 = vsub.f32 1.5, %v4544
    %v4546 = vmul.f32 %v4541, %v4545
    %vm4547 = vweird.f32 %v4444
    %vm4548 = vweird.f32 %v4541
    %vm4549 = vmor %vm4547, %vm4548
    %v4550 = vsel %vm4549, %v4541, %v4546
    %v4551 = vrsqrt.pop %v4445
    %v4552 = vmul.f32 %v4551, %v4445
    %v4553 = vmul.f32 %v4552, %v4551
    %v4554 = vmul.f32 0.5, %v4553
    %v4555 = vsub.f32 1.5, %v4554
    %v4556 = vmul.f32 %v4551, %v4555
    %vm4557 = vweird.f32 %v4445
    %vm4558 = vweird.f32 %v4551
    %vm4559 = vmor %vm4557, %vm4558
    %v4560 = vsel %vm4559, %v4551, %v4556
    %v4561 = vrsqrt.pop %v4446
    %v4562 = vmul.f32 %v4561, %v4446
    %v4563 = vmul.f32 %v4562, %v4561
    %v4564 = vmul.f32 0.5, %v4563
    %v4565 = vsub.f32 1.5, %v4564
    %v4566 = vmul.f32 %v4561, %v4565
    %vm4567 = vweird.f32 %v4446
    %vm4568 = vweird.f32 %v4561
    %vm4569 = vmor %vm4567, %vm4568
    %v4570 = vsel %vm4569, %v4561, %v4566
    %v4571 = vrsqrt.pop %v4447
    %v4572 = vmul.f32 %v4571, %v4447
    %v4573 = vmul.f32 %v4572, %v4571
    %v4574 = vmul.f32 0.5, %v4573
    %v4575 = vsub.f32 1.5, %v4574
    %v4576 = vmul.f32 %v4571, %v4575
    %vm4577 = vweird.f32 %v4447
    %vm4578 = vweird.f32 %v4571
    %vm4579 = vmor %vm4577, %vm4578
    %v4580 = vsel %vm4579, %v4571, %v4576
    %v4581 = vrsqrt.pop %v4448
    %v4582 = vmul.f32 %v4581, %v4448
    %v4583 = vmul.f32 %v4582, %v4581
    %v4584 = vmul.f32 0.5, %v4583
    %v4585 = vsub.f32 1.5, %v4584
    %v4586 = vmul.f32 %v4581, %v4585
    %vm4587 = vweird.f32 %v4448
    %vm4588 = vweird.f32 %v4581
    %vm4589 = vmor %vm4587, %vm4588
    %v4590 = vsel %vm4589, %v4581, %v4586
    %v4591 = vrsqrt.pop %v4449
    %v4592 = vmul.f32 %v4591, %v4449
    %v4593 = vmul.f32 %v4592, %v4591
    %v4594 = vmul.f32 0.5, %v4593
    %v4595 = vsub.f32 1.5, %v4594
    %v4596 = vmul.f32 %v4591, %v4595
    %vm4597 = vweird.f32 %v4449
    %vm4598 = vweird.f32 %v4591
    %vm4599 = vmor %vm4597, %vm4598
    %v4600 = vsel %vm4599, %v4591, %v4596
    %v4601 = vrsqrt.pop %v4450
    %v4602 = vmul.f32 %v4601, %v4450
    %v4603 = vmul.f32 %v4602, %v4601
    %v4604 = vmul.f32 0.5, %v4603
    %v4605 = vsub.f32 1.5, %v4604
    %v4606 = vmul.f32 %v4601, %v4605
    %vm4607 = vweird.f32 %v4450
    %vm4608 = vweird.f32 %v4601
    %vm4609 = vmor %vm4607, %vm4608
    %v4610 = vsel %vm4609, %v4601, %v4606
    %v4611 = vmul.f32 %v4339, %v4460
    %v4612 = vmul.f32 %v4340, %v4470
    %v4613 = vmul.f32 %v4341, %v4480
    %v4614 = vmul.f32 %v4342, %v4490
    %v4615 = vmul.f32 %v4343, %v4500
    %v4616 = vmul.f32 %v4344, %v4510
    %v4617 = vmul.f32 %v4345, %v4520
    %v4618 = vmul.f32 %v4346, %v4530
    %v4619 = vmul.f32 %v4347, %v4540
    %v4620 = vmul.f32 %v4348, %v4550
    %v4621 = vmul.f32 %v4349, %v4560
    %v4622 = vmul.f32 %v4350, %v4570
    %v4623 = vmul.f32 %v4351, %v4580
    %v4624 = vmul.f32 %v4352, %v4590
    %v4625 = vmul.f32 %v4353, %v4600
    %v4626 = vmul.f32 %v4354, %v4610
    %v4627 = vperm.slane %v124, 0
    %v4628 = vmul.f32 %v4611, %v4627
    %v4629 = vmul.f32 %v4612, %v4627
    %v4630 = vmul.f32 %v4613, %v4627
    %v4631 = vmul.f32 %v4614, %v4627
    %v4632 = vmul.f32 %v4615, %v4627
    %v4633 = vmul.f32 %v4616, %v4627
    %v4634 = vmul.f32 %v4617, %v4627
    %v4635 = vmul.f32 %v4618, %v4627
    %v4636 = vmul.f32 %v4619, %v4627
    %v4637 = vmul.f32 %v4620, %v4627
    %v4638 = vmul.f32 %v4621, %v4627
    %v4639 = vmul.f32 %v4622, %v4627
    %v4640 = vmul.f32 %v4623, %v4627
    %v4641 = vmul.f32 %v4624, %v4627
    %v4642 = vmul.f32 %v4625, %v4627
    %v4643 = vmul.f32 %v4626, %v4627
    %v4644 = vperm.slane %v124, 1
    %v4645 = vadd.f32 %v4628, %v4644
    %v4646 = vadd.f32 %v4629, %v4644
    %v4647 = vadd.f32 %v4630, %v4644
    %v4648 = vadd.f32 %v4631, %v4644
    %v4649 = vadd.f32 %v4632, %v4644
    %v4650 = vadd.f32 %v4633, %v4644
    %v4651 = vadd.f32 %v4634, %v4644
    %v4652 = vadd.f32 %v4635, %v4644
    %v4653 = vadd.f32 %v4636, %v4644
    %v4654 = vadd.f32 %v4637, %v4644
    %v4655 = vadd.f32 %v4638, %v4644
    %v4656 = vadd.f32 %v4639, %v4644
    %v4657 = vadd.f32 %v4640, %v4644
    %v4658 = vadd.f32 %v4641, %v4644
    %v4659 = vadd.f32 %v4642, %v4644
    %v4660 = vadd.f32 %v4643, %v4644
    %4662 = vset.pattern.permute.xlu0 0
    %4663 = vperm.xlu0 %4662, %v124
    %v4664 = vpop.permute.xlu0 %4663
    %v4665 = vrot.slane %v124, 2
    %v4666 = vrot.slane %v4664, 3
    %v4668 = vsel %vm126, %v4665, 0
    %v4671 = vsel %vm126, %v4645, 0
    %v4674 = vsel %vm126, %v4646, 0
    %v4677 = vsel %vm126, %v4647, 0
    %v4680 = vsel %vm126, %v4648, 0
    %v4683 = vsel %vm126, %v4649, 0
    %v4686 = vsel %vm126, %v4650, 0
    %v4689 = vsel %vm126, %v4651, 0
    %v4692 = vsel %vm126, %v4652, 0
    %v4695 = vsel %vm126, %v4653, 0
    %v4698 = vsel %vm126, %v4654, 0
    %v4701 = vsel %vm126, %v4655, 0
    %v4704 = vsel %vm126, %v4656, 0
    %v4707 = vsel %vm126, %v4657, 0
    %v4710 = vsel %vm126, %v4658, 0
    %v4713 = vsel %vm126, %v4659, 0
    %v4716 = vsel %vm126, %v4660, 0
    %4718 = vmatpush.xpose.msra.mxu0 %v4716
    %4719 = vmatpush.xpose.msra.mxu0 %v4713
    %4720 = vmatpush.xpose.msra.mxu0 %v4710
    %4721 = vmatpush.xpose.msra.mxu0 %v4707
    %4722 = vmatpush.xpose.msra.mxu0 %v4704
    %4723 = vmatpush.xpose.msra.mxu0 %v4701
    %4724 = vmatpush.xpose.msra.mxu0 %v4698
    %4725 = vmatpush.xpose.msra.mxu0 %v4695
    %4726 = vmatpush.xpose.msra.mxu0 %v4692
    %4727 = vmatpush.xpose.msra.mxu0 %v4689
    %4728 = vmatpush.xpose.msra.mxu0 %v4686
    %4729 = vmatpush.xpose.msra.mxu0 %v4683
    %4730 = vmatpush.xpose.msra.mxu0 %v4680
    %4731 = vmatpush.xpose.msra.mxu0 %v4677
    %4732 = vmatpush.xpose.msra.mxu0 %v4674
    %4733 = vmatpush.xpose.msra.mxu0 %v4671
    %4734 = vmatmul.f32.gmra.mxu0 %v4668
    %v4735 = vpop.f32.mrf.mxu0
    %v4736 = vadd.f32 %v4666, %v4735
    %4737 = vdwg.mxu0
    %v4738 = vxor.u32 %v4736, 2147483648
    %v4739 = vmul.f32 %v4738, 1.442695
    %v4740 = vpow.pop %v4739
    %v4741 = vadd.f32 %v4740, 1.0
    %v4742 = vrcp.pop %v4741
    %v4743 = vmul.f32 %v4741, %v4742
    %v4744 = vsub.f32 1.0, %v4743
    %v4745 = vmul.f32 %v4742, %v4744
    %v4746 = vadd.f32 %v4742, %v4745
    %vm4747 = vweird.f32 %v4741
    %vm4748 = vweird.f32 %v4742
    %vm4749 = vmor %vm4747, %vm4748
    %v4750 = vsel %vm4749, %v4742, %v4746
    %v4751 = vand.u32 2147483647, %v4741
    %vm4752 = vcmp.eq.f32.partialorder %v4751, 8.507059e+37
    %v4753 = vand.u32 %v4741, 2147483648
    %v4754 = vor.u32 1.1754944e-38, %v4753
    %v4755 = vsel %vm4752, %v4754, %v4750
    %v4756 = vmul.f32 1.0, %v4755
    %4757 = vst [vmem:[#allocation2] sm:$0x1] %v4756
    // Predicated region
    $region30: #{tpu_custom_call.1} parent=1 // pred_check
      _
    $region31: #{tpu_custom_call.1} parent=1 // pred_check_branch
      %4759 = sbr.rel (0) target = $region33
    $region32: #{tpu_custom_call.1} parent=1 // pred_region
      %4761 = vsyncadd [#allocation3], 0
      %s4763 = sshll.u32 [#allocation2], 4
      %s4764 = int_to_ptr.vmem [resolvable:$true] %s4763
      %s4765 = sshll.u32 %s7, 4
      %s4766 = int_to_ptr.hbm [resolvable:$true] %s4765
      %4768 = dma.vmem_to_hbm [thread:$0]  %s4764, 16, %s4766, [#allocation3]
    $region33: #{tpu_custom_call.1} parent=1 // pred_fallthru
      _
    // Predicated region
    $region34: #{tpu_custom_call.1} parent=1 // pred_check
      _
    $region35: #{tpu_custom_call.1} parent=1 // pred_check_branch
      %4770 = sbr.rel (0) target = $region37
    $region36: #{tpu_custom_call.1} parent=1 // pred_region
      %4772 = vsyncadd [#allocation5], 0
      %s4774 = sshll.u32 [#allocation4], 4
      %s4775 = int_to_ptr.vmem [resolvable:$true] %s4774
      %s4776 = sshll.u32 %s8, 4
      %s4777 = int_to_ptr.hbm [resolvable:$true] %s4776
      %4779 = dma.vmem_to_hbm [thread:$0]  %s4775, 128, %s4777, [#allocation5]
    $region37: #{tpu_custom_call.1} parent=1 // pred_fallthru
      _
    // Predicated region
    $region38: #{tpu_custom_call.1} parent=1 // pred_check
      _
    $region39: #{tpu_custom_call.1} parent=1 // pred_check_branch
      %4781 = sbr.rel (0) target = $region41
    $region40: #{tpu_custom_call.1} parent=1 // pred_region
      %4783 = dma.done [#allocation3], 16
    $region41: #{tpu_custom_call.1} parent=1 // pred_fallthru
      _
    // Predicated region
    $region42: #{tpu_custom_call.1} parent=1 // pred_check
      _
    $region43: #{tpu_custom_call.1} parent=1 // pred_check_branch
      %4785 = sbr.rel (0) target = $region45
    $region44: #{tpu_custom_call.1} parent=1 // pred_region
      %4787 = dma.done [#allocation5], 128
    $region45: #{tpu_custom_call.1} parent=1 // pred_fallthru
      _
    %4788 = vsyncpa [#allocation3], 1
    %4789 = vsyncpa [#allocation5], 1

</llo_original>
